<compile_context>
chip_gen: v7x
topology: tpu7x:2x2x1
jax: 0.10.0
libtpu: 0.0.40
codegen_flags: <defaults>
</compile_context>

<pallas_src>
import jax
import jax.numpy as jnp
from jax import lax
from jax.experimental import pallas as pl
from jax.experimental.pallas import tpu as pltpu

PAD_INDEX = 0


# ----------------------------------------------------------------------------
# Fused per-pair-block kernel.
# ----------------------------------------------------------------------------
def pair_kernel(len_ref,                      # SMEM scalars: [sent1_len, sent2_len]
                s1e_ref, s2e_ref,             # (P, L, Hp) sentence embeddings
                wa1_ref, ba1_ref, wa2_ref, ba2_ref,          # attention_forward
                wc1a_ref, wc1b_ref, bc1_ref, wc2_ref, bc2_ref,  # compare_forward
                wg1a_ref, wg1b_ref, bg1_ref, wg2_ref, bg2_ref,  # cls_forward
                wo_ref, bo_ref,               # output head (padded to Hp lanes)
                out_ref):                     # (1, P, Hp) padded logits
    P, L, H = s1e_ref.shape
    len1 = len_ref[0]
    len2 = len_ref[1]

    s1e_flat = s1e_ref[...].reshape(P * L, H)
    s2e_flat = s2e_ref[...].reshape(P * L, H)

    def mlp2(x, w1, b1, w2, b2):
        h = jnp.dot(x, w1[...], preferred_element_type=jnp.float32) + b1[...]
        h = jnp.maximum(h, 0.0)
        g = jnp.dot(h, w2[...], preferred_element_type=jnp.float32) + b2[...]
        return jnp.maximum(g, 0.0)

    # attention_forward fused (no HBM round trip of the 'encoded' tensor).
    s1c = mlp2(s1e_flat, wa1_ref, ba1_ref, wa2_ref, ba2_ref).reshape(P, L, H)
    s2c = mlp2(s2e_flat, wa1_ref, ba1_ref, wa2_ref, ba2_ref).reshape(P, L, H)

    s1e = s1e_flat.reshape(P, L, H)
    s2e = s2e_flat.reshape(P, L, H)

    # scores: (P, L1, L2)
    score = jnp.einsum("pld,pmd->plm", s1c, s2c,
                       preferred_element_type=jnp.float32)

    neg = jnp.float32(-1e30)
    valid2 = lax.broadcasted_iota(jnp.int32, (P, L, L), 2) < len2   # sent2 window
    valid1 = lax.broadcasted_iota(jnp.int32, (P, L, L), 1) < len1   # sent1 window

    # prob1: softmax over sent2 positions (window-masked, matches torch truncation).
    prob1 = jax.nn.softmax(jnp.where(valid2, score, neg), axis=2)   # (P, L1, L2)
    # prob2^T: softmax over the sent1 axis of score — no score transpose needed.
    prob2t = jax.nn.softmax(jnp.where(valid1, score, neg), axis=1)  # (P, L1, L2)

    att1 = jnp.einsum("plm,pmd->pld", prob1, s2e,
                      preferred_element_type=jnp.float32)           # (P, L1, H)
    att2 = jnp.einsum("plm,pld->pmd", prob2t, s1e,
                      preferred_element_type=jnp.float32)           # (P, L2, H)

    # compare_forward on the flattened (P*L, H) slab; 2H-wide first layer split
    # into two HxH matmuls (== cat(emb, att) @ W1).
    def compare(emb, att):
        h = (jnp.dot(emb, wc1a_ref[...], preferred_element_type=jnp.float32)
             + jnp.dot(att, wc1b_ref[...], preferred_element_type=jnp.float32)
             + bc1_ref[...])
        h = jnp.maximum(h, 0.0)
        g = jnp.dot(h, wc2_ref[...], preferred_element_type=jnp.float32) + bc2_ref[...]
        return jnp.maximum(g, 0.0)

    g1 = compare(s1e_flat, att1.reshape(P * L, H)).reshape(P, L, H)
    g2 = compare(s2e_flat, att2.reshape(P * L, H)).reshape(P, L, H)

    # masked token-sum aggregation (rows beyond the truncation window contribute 0,
    # exactly like the torch slicing).
    row1 = lax.broadcasted_iota(jnp.int32, (P, L, H), 1) < len1
    row2 = lax.broadcasted_iota(jnp.int32, (P, L, H), 1) < len2
    v1 = jnp.sum(jnp.where(row1, g1, 0.0), axis=1)                  # (P, H)
    v2 = jnp.sum(jnp.where(row2, g2, 0.0), axis=1)                  # (P, H)

    # cls_forward + output head.
    hh = (jnp.dot(v1, wg1a_ref[...], preferred_element_type=jnp.float32)
          + jnp.dot(v2, wg1b_ref[...], preferred_element_type=jnp.float32)
          + bg1_ref[...])
    hh = jnp.maximum(hh, 0.0)
    hc = jnp.dot(hh, wg2_ref[...], preferred_element_type=jnp.float32) + bg2_ref[...]
    hc = jnp.maximum(hc, 0.0)

    # lane-dense (P, Hp) padded-logit store; real logits live in the first 3 lanes.
    out_ref[0] = jnp.dot(hc, wo_ref[...], preferred_element_type=jnp.float32) + bo_ref[...]


def deatten_forward_pallas(s1e, s2e, lens, padded_params, *, pairs_per_block=2):
    """s1e/s2e: (B, L, Hp) f32 (hidden zero-padded to Hp); lens: (2,) int32 on device.

    padded_params: 16-tuple (wa1, ba1, wa2, ba2, wc1a, wc1b, bc1, wc2, bc2,
                             wg1a, wg1b, bg1, wg2, bg2, wo, bo), all padded to Hp.
    Returns (B, 3) logits.
    """
    B, L, Hp = s1e.shape
    P = pairs_per_block
    nblk = pl.cdiv(B, P)
    Bp = nblk * P
    if Bp != B:
        pad = Bp - B
        s1e = jnp.pad(s1e, ((0, pad), (0, 0), (0, 0)))
        s2e = jnp.pad(s2e, ((0, pad), (0, 0), (0, 0)))

    def wspec(shape):
        return pl.BlockSpec(shape, lambda b, lens_ref, _n=len(shape): (0,) * _n)

    act_spec = pl.BlockSpec((P, L, Hp), lambda b, lens_ref: (b, 0, 0))

    out = pl.pallas_call(
        pair_kernel,
        out_shape=jax.ShapeDtypeStruct((nblk, P, Hp), jnp.float32),
        grid_spec=pltpu.PrefetchScalarGridSpec(
            num_scalar_prefetch=1,
            grid=(nblk,),
            in_specs=[
                act_spec, act_spec,
                wspec((Hp, Hp)), wspec((1, Hp)), wspec((Hp, Hp)), wspec((1, Hp)),
                wspec((Hp, Hp)), wspec((Hp, Hp)), wspec((1, Hp)),
                wspec((Hp, Hp)), wspec((1, Hp)),
                wspec((Hp, Hp)), wspec((Hp, Hp)), wspec((1, Hp)),
                wspec((Hp, Hp)), wspec((1, Hp)),
                wspec((Hp, Hp)), wspec((1, Hp)),
            ],
            out_specs=pl.BlockSpec((1, P, Hp), lambda b, lens_ref: (b, 0, 0)),
        ),
        compiler_params=pltpu.CompilerParams(
            dimension_semantics=("parallel",),      # pairs axis shards across TCs on v7x
            vmem_limit_bytes=32 * 1024 * 1024,      # small footprint; safe on v7x's 64 MiB
        ),
    )(lens, s1e, s2e, *padded_params)

    return out.reshape(Bp, Hp)[:B, :3]


# ----------------------------------------------------------------------------
# Pure-JAX reference (mirrors the torch forward, incl. host-side truncation).
# ----------------------------------------------------------------------------
def mlp2_ref(x, w1, b1, w2, b2):
    h = jnp.maximum(x @ w1 + b1, 0.0)
    return jnp.maximum(h @ w2 + b2, 0.0)


def _pad2(w, r, c):
    return jnp.pad(w, ((0, r - w.shape[0]), (0, c - w.shape[1])))


def _pad1(b, n):
    return jnp.pad(b, (0, n - b.shape[0])).reshape(1, n)


if __name__ == "__main__":
    key = jax.random.PRNGKey(0)
    V, L, H, B = 50, 8, 32, 4          # vocab, seq len, hidden (=embed_dim=ffn_hidden), pairs
    Hp = 128                            # lane-dense padded hidden
    N = 2 * B                           # number of sentences
    P = 2                               # pairs per grid step -> grid of 2 steps

    ks = jax.random.split(key, 16)
    scale = 0.1

    # token ids with deterministic per-sentence lengths (pad_index = 0)
    lengths = jnp.array([8, 6, 7, 5, 8, 4, 6, 7], dtype=jnp.int32)
    data = jax.random.randint(ks[0], (N, L), 1, V, dtype=jnp.int32)
    pos = jnp.arange(L)[None, :]
    data = jnp.where(pos < lengths[:, None], data, PAD_INDEX)

    # deterministic synthetic parameters (weights stored as (in, out): y = x @ W + b)
    emb_table = scale * jax.random.normal(ks[1], (V, H), jnp.float32)
    wa1 = scale * jax.random.normal(ks[2], (H, H), jnp.float32)
    ba1 = scale * jax.random.normal(ks[3], (H,), jnp.float32)
    wa2 = scale * jax.random.normal(ks[4], (H, H), jnp.float32)
    ba2 = scale * jax.random.normal(ks[5], (H,), jnp.float32)
    wc1 = scale * jax.random.normal(ks[6], (2 * H, H), jnp.float32)
    bc1 = scale * jax.random.normal(ks[7], (H,), jnp.float32)
    wc2 = scale * jax.random.normal(ks[8], (H, H), jnp.float32)
    bc2 = scale * jax.random.normal(ks[9], (H,), jnp.float32)
    wg1 = scale * jax.random.normal(ks[10], (2 * H, H), jnp.float32)
    bg1 = scale * jax.random.normal(ks[11], (H,), jnp.float32)
    wg2 = scale * jax.random.normal(ks[12], (H, H), jnp.float32)
    bg2 = scale * jax.random.normal(ks[13], (H,), jnp.float32)
    wo = scale * jax.random.normal(ks[14], (H, 3), jnp.float32)
    bo = scale * jax.random.normal(ks[15], (3,), jnp.float32)

    # ---- glue: embedding lookup + scope pair selection (separate Embedder module) ----
    # TODO(synk): the Embedder gather stays in plain JAX; it is a table lookup, not kernel math.
    embeds = emb_table[data]                                        # (N, L, H)
    sent1_idx = jnp.arange(0, N, 2)
    sent2_idx = jnp.arange(1, N, 2)
    s1e = embeds[sent1_idx]                                         # (B, L, H)
    s2e = embeds[sent2_idx]

    # device-side max-length scalars (no .item() host sync, no shape-dependent recompiles)
    mask = (data != PAD_INDEX)
    len1 = jnp.sum(mask[sent1_idx], axis=-1).max().astype(jnp.int32)
    len2 = jnp.sum(mask[sent2_idx], axis=-1).max().astype(jnp.int32)
    lens = jnp.stack([len1, len2])

    # zero-pad hidden to 128 lanes (exact: zero pads never change the math)
    s1e_p = jnp.pad(s1e, ((0, 0), (0, 0), (0, Hp - H)))
    s2e_p = jnp.pad(s2e, ((0, 0), (0, 0), (0, Hp - H)))
    padded_params = (
        _pad2(wa1, Hp, Hp), _pad1(ba1, Hp), _pad2(wa2, Hp, Hp), _pad1(ba2, Hp),
        _pad2(wc1[:H], Hp, Hp), _pad2(wc1[H:], Hp, Hp), _pad1(bc1, Hp),
        _pad2(wc2, Hp, Hp), _pad1(bc2, Hp),
        _pad2(wg1[:H], Hp, Hp), _pad2(wg1[H:], Hp, Hp), _pad1(bg1, Hp),
        _pad2(wg2, Hp, Hp), _pad1(bg2, Hp),
        _pad2(wo, Hp, Hp), _pad1(bo, Hp),
    )

    logits = deatten_forward_pallas(s1e_p, s2e_p, lens, padded_params,
                                    pairs_per_block=P)
    jax.block_until_ready(logits)

    # ---- reference check (mirrors the torch forward, host-side truncation) ----
    enc_ref = mlp2_ref(embeds.reshape(N * L, H), wa1, ba1, wa2, ba2).reshape(N, L, H)
    l1 = int(jnp.sum(mask[sent1_idx], axis=-1).max())
    l2 = int(jnp.sum(mask[sent2_idx], axis=-1).max())
    s1e_r = embeds[sent1_idx][:, :l1, :]
    s2e_r = embeds[sent2_idx][:, :l2, :]
    s1c_r = enc_ref[sent1_idx][:, :l1, :]
    s2c_r = enc_ref[sent2_idx][:, :l2, :]
    score1 = jnp.einsum("bld,bmd->blm", s1c_r, s2c_r)
    p1 = jax.nn.softmax(score1, axis=-1)
    p2 = jax.nn.softmax(jnp.swapaxes(score1, 1, 2), axis=-1)
    c1 = jnp.concatenate([s1e_r, jnp.einsum("blm,bmd->bld", p1, s2e_r)], axis=-1)
    c2 = jnp.concatenate([s2e_r, jnp.einsum("bml,bld->bmd", p2, s1e_r)], axis=-1)
    g1 = mlp2_ref(c1.reshape(-1, 2 * H), wc1, bc1, wc2, bc2).reshape(B, l1, H)
    g2 = mlp2_ref(c2.reshape(-1, 2 * H), wc1, bc1, wc2, bc2).reshape(B, l2, H)
    combo = jnp.concatenate([g1.sum(1), g2.sum(1)], axis=-1)
    h_ref = mlp2_ref(combo, wg1, bg1, wg2, bg2)
    ref_logits = h_ref @ wo + bo

    assert logits.shape == (B, 3)
    assert jnp.allclose(logits, ref_logits, atol=1e-4, rtol=1e-4), (logits, ref_logits)
    print("KERNEL_OK")
</pallas_src>

<mosaic_0001>
module attributes {stable_mosaic.version = 11 : i64} {
  func.func @pair_kernel(%arg0: i32, %arg1: memref<2xi32, #tpu.memory_space<smem>>, %arg2: memref<2x8x128xf32, #tpu.memory_space<vmem>>, %arg3: memref<2x8x128xf32, #tpu.memory_space<vmem>>, %arg4: memref<128x128xf32, #tpu.memory_space<vmem>>, %arg5: memref<1x128xf32, #tpu.memory_space<vmem>>, %arg6: memref<128x128xf32, #tpu.memory_space<vmem>>, %arg7: memref<1x128xf32, #tpu.memory_space<vmem>>, %arg8: memref<128x128xf32, #tpu.memory_space<vmem>>, %arg9: memref<128x128xf32, #tpu.memory_space<vmem>>, %arg10: memref<1x128xf32, #tpu.memory_space<vmem>>, %arg11: memref<128x128xf32, #tpu.memory_space<vmem>>, %arg12: memref<1x128xf32, #tpu.memory_space<vmem>>, %arg13: memref<128x128xf32, #tpu.memory_space<vmem>>, %arg14: memref<128x128xf32, #tpu.memory_space<vmem>>, %arg15: memref<1x128xf32, #tpu.memory_space<vmem>>, %arg16: memref<128x128xf32, #tpu.memory_space<vmem>>, %arg17: memref<1x128xf32, #tpu.memory_space<vmem>>, %arg18: memref<128x128xf32, #tpu.memory_space<vmem>>, %arg19: memref<1x128xf32, #tpu.memory_space<vmem>>, %arg20: memref<1x2x128xf32, #tpu.memory_space<vmem>>) attributes {dimension_semantics = [#tpu.dimension_semantics<parallel>], iteration_bounds = array<i64: 2>, scalar_prefetch = 1 : i64, scratch_operands = 0 : i64, tpu.core_type = #tpu.core_type<tc>, window_params = [{transform_indices = @transform_0, window_bounds = array<i64: 2, 8, 128>}, {transform_indices = @transform_1, window_bounds = array<i64: 2, 8, 128>}, {pipeline_mode = #tpu.pipeline_mode<synchronous>, transform_indices = @transform_2, window_bounds = array<i64: 128, 128>}, {pipeline_mode = #tpu.pipeline_mode<synchronous>, transform_indices = @transform_3, window_bounds = array<i64: 1, 128>}, {pipeline_mode = #tpu.pipeline_mode<synchronous>, transform_indices = @transform_4, window_bounds = array<i64: 128, 128>}, {pipeline_mode = #tpu.pipeline_mode<synchronous>, transform_indices = @transform_5, window_bounds = array<i64: 1, 128>}, {pipeline_mode = #tpu.pipeline_mode<synchronous>, transform_indices = @transform_6, window_bounds = array<i64: 128, 128>}, {pipeline_mode = #tpu.pipeline_mode<synchronous>, transform_indices = @transform_7, window_bounds = array<i64: 128, 128>}, {pipeline_mode = #tpu.pipeline_mode<synchronous>, transform_indices = @transform_8, window_bounds = array<i64: 1, 128>}, {pipeline_mode = #tpu.pipeline_mode<synchronous>, transform_indices = @transform_9, window_bounds = array<i64: 128, 128>}, {pipeline_mode = #tpu.pipeline_mode<synchronous>, transform_indices = @transform_10, window_bounds = array<i64: 1, 128>}, {pipeline_mode = #tpu.pipeline_mode<synchronous>, transform_indices = @transform_11, window_bounds = array<i64: 128, 128>}, {pipeline_mode = #tpu.pipeline_mode<synchronous>, transform_indices = @transform_12, window_bounds = array<i64: 128, 128>}, {pipeline_mode = #tpu.pipeline_mode<synchronous>, transform_indices = @transform_13, window_bounds = array<i64: 1, 128>}, {pipeline_mode = #tpu.pipeline_mode<synchronous>, transform_indices = @transform_14, window_bounds = array<i64: 128, 128>}, {pipeline_mode = #tpu.pipeline_mode<synchronous>, transform_indices = @transform_15, window_bounds = array<i64: 1, 128>}, {pipeline_mode = #tpu.pipeline_mode<synchronous>, transform_indices = @transform_16, window_bounds = array<i64: 128, 128>}, {pipeline_mode = #tpu.pipeline_mode<synchronous>, transform_indices = @transform_17, window_bounds = array<i64: 1, 128>}, {transform_indices = @transform_18, window_bounds = array<i64: 1, 2, 128>}]} {
    %c0 = arith.constant 0 : index
    %0 = memref.load %arg1[%c0] : memref<2xi32, #tpu.memory_space<smem>>
    %c1 = arith.constant 1 : index
    %1 = memref.load %arg1[%c1] : memref<2xi32, #tpu.memory_space<smem>>
    %c0_0 = arith.constant 0 : index
    %c0_1 = arith.constant 0 : index
    %c0_2 = arith.constant 0 : index
    %2 = vector.load %arg2[%c0_0, %c0_1, %c0_2] : memref<2x8x128xf32, #tpu.memory_space<vmem>>, vector<2x8x128xf32>
    %3 = vector.shape_cast %2 : vector<2x8x128xf32> to vector<16x128xf32>
    %c0_3 = arith.constant 0 : index
    %c0_4 = arith.constant 0 : index
    %c0_5 = arith.constant 0 : index
    %4 = vector.load %arg3[%c0_3, %c0_4, %c0_5] : memref<2x8x128xf32, #tpu.memory_space<vmem>>, vector<2x8x128xf32>
    %5 = vector.shape_cast %4 : vector<2x8x128xf32> to vector<16x128xf32>
    %c0_6 = arith.constant 0 : index
    %c0_7 = arith.constant 0 : index
    %6 = vector.load %arg4[%c0_6, %c0_7] : memref<128x128xf32, #tpu.memory_space<vmem>>, vector<128x128xf32>
    %cst = arith.constant dense<0.000000e+00> : vector<16x128xf32>
    %7 = tpu.matmul %3, %6, %cst {dimension_numbers = #tpu.dot_dimension_numbers<[1], [0], [0], [1], [0, 0, 1, 1], [], []>} : vector<16x128xf32>, vector<128x128xf32>, vector<16x128xf32> -> vector<16x128xf32>
    %c0_8 = arith.constant 0 : index
    %c0_9 = arith.constant 0 : index
    %8 = vector.load %arg5[%c0_8, %c0_9] : memref<1x128xf32, #tpu.memory_space<vmem>>, vector<1x128xf32>
    %9 = vector.broadcast %8 : vector<1x128xf32> to vector<16x128xf32>
    %10 = arith.addf %7, %9 : vector<16x128xf32>
    %cst_10 = arith.constant 0.000000e+00 : f32
    %11 = vector.broadcast %cst_10 : f32 to vector<16x128xf32>
    %12 = arith.maximumf %10, %11 : vector<16x128xf32>
    %c0_11 = arith.constant 0 : index
    %c0_12 = arith.constant 0 : index
    %13 = vector.load %arg6[%c0_11, %c0_12] : memref<128x128xf32, #tpu.memory_space<vmem>>, vector<128x128xf32>
    %cst_13 = arith.constant dense<0.000000e+00> : vector<16x128xf32>
    %14 = tpu.matmul %12, %13, %cst_13 {dimension_numbers = #tpu.dot_dimension_numbers<[1], [0], [0], [1], [0, 0, 1, 1], [], []>} : vector<16x128xf32>, vector<128x128xf32>, vector<16x128xf32> -> vector<16x128xf32>
    %c0_14 = arith.constant 0 : index
    %c0_15 = arith.constant 0 : index
    %15 = vector.load %arg7[%c0_14, %c0_15] : memref<1x128xf32, #tpu.memory_space<vmem>>, vector<1x128xf32>
    %16 = vector.broadcast %15 : vector<1x128xf32> to vector<16x128xf32>
    %17 = arith.addf %14, %16 : vector<16x128xf32>
    %cst_16 = arith.constant 0.000000e+00 : f32
    %18 = vector.broadcast %cst_16 : f32 to vector<16x128xf32>
    %19 = arith.maximumf %17, %18 : vector<16x128xf32>
    %20 = vector.shape_cast %19 : vector<16x128xf32> to vector<2x8x128xf32>
    %c0_17 = arith.constant 0 : index
    %c0_18 = arith.constant 0 : index
    %21 = vector.load %arg4[%c0_17, %c0_18] : memref<128x128xf32, #tpu.memory_space<vmem>>, vector<128x128xf32>
    %cst_19 = arith.constant dense<0.000000e+00> : vector<16x128xf32>
    %22 = tpu.matmul %5, %21, %cst_19 {dimension_numbers = #tpu.dot_dimension_numbers<[1], [0], [0], [1], [0, 0, 1, 1], [], []>} : vector<16x128xf32>, vector<128x128xf32>, vector<16x128xf32> -> vector<16x128xf32>
    %c0_20 = arith.constant 0 : index
    %c0_21 = arith.constant 0 : index
    %23 = vector.load %arg5[%c0_20, %c0_21] : memref<1x128xf32, #tpu.memory_space<vmem>>, vector<1x128xf32>
    %24 = vector.broadcast %23 : vector<1x128xf32> to vector<16x128xf32>
    %25 = arith.addf %22, %24 : vector<16x128xf32>
    %cst_22 = arith.constant 0.000000e+00 : f32
    %26 = vector.broadcast %cst_22 : f32 to vector<16x128xf32>
    %27 = arith.maximumf %25, %26 : vector<16x128xf32>
    %c0_23 = arith.constant 0 : index
    %c0_24 = arith.constant 0 : index
    %28 = vector.load %arg6[%c0_23, %c0_24] : memref<128x128xf32, #tpu.memory_space<vmem>>, vector<128x128xf32>
    %cst_25 = arith.constant dense<0.000000e+00> : vector<16x128xf32>
    %29 = tpu.matmul %27, %28, %cst_25 {dimension_numbers = #tpu.dot_dimension_numbers<[1], [0], [0], [1], [0, 0, 1, 1], [], []>} : vector<16x128xf32>, vector<128x128xf32>, vector<16x128xf32> -> vector<16x128xf32>
    %c0_26 = arith.constant 0 : index
    %c0_27 = arith.constant 0 : index
    %30 = vector.load %arg7[%c0_26, %c0_27] : memref<1x128xf32, #tpu.memory_space<vmem>>, vector<1x128xf32>
    %31 = vector.broadcast %30 : vector<1x128xf32> to vector<16x128xf32>
    %32 = arith.addf %29, %31 : vector<16x128xf32>
    %cst_28 = arith.constant 0.000000e+00 : f32
    %33 = vector.broadcast %cst_28 : f32 to vector<16x128xf32>
    %34 = arith.maximumf %32, %33 : vector<16x128xf32>
    %35 = vector.shape_cast %34 : vector<16x128xf32> to vector<2x8x128xf32>
    %36 = vector.shape_cast %3 : vector<16x128xf32> to vector<2x8x128xf32>
    %37 = vector.shape_cast %5 : vector<16x128xf32> to vector<2x8x128xf32>
    "tpu.trace_start"() <{level = 10 : i32, message = "pld,pmd->plm"}> : () -> ()
    %cst_29 = arith.constant dense<0.000000e+00> : vector<2x8x8xf32>
    %38 = tpu.matmul %20, %35, %cst_29 {dimension_numbers = #tpu.dot_dimension_numbers<[2], [2], [1], [1], [0, 0, 0, 1, 1, 1], [0], [0]>} : vector<2x8x128xf32>, vector<2x8x128xf32>, vector<2x8x8xf32> -> vector<2x8x8xf32>
    "tpu.trace_stop"() : () -> ()
    %39 = tpu.iota {dimensions = array<i32: 2>} : vector<2x8x8xi32>
    %40 = vector.broadcast %1 : i32 to vector<2x8x8xi32>
    %41 = arith.cmpi slt, %39, %40 : vector<2x8x8xi32>
    %42 = tpu.iota {dimensions = array<i32: 1>} : vector<2x8x8xi32>
    %43 = vector.broadcast %0 : i32 to vector<2x8x8xi32>
    %44 = arith.cmpi slt, %42, %43 : vector<2x8x8xi32>
    %cst_30 = arith.constant -1.000000e+30 : f32
    %45 = vector.broadcast %cst_30 : f32 to vector<2x8x8xf32>
    %46 = arith.select %41, %38, %45 : vector<2x8x8xi1>, vector<2x8x8xf32>
    %cst_31 = arith.constant dense<0xFF800000> : vector<2x8xf32>
    %47 = vector.multi_reduction <maximumf>, %46, %cst_31 [2] : vector<2x8x8xf32> to vector<2x8xf32>
    %cst_32 = arith.constant 0xFF800000 : f32
    %48 = vector.broadcast %cst_32 : f32 to vector<2x8xf32>
    %49 = arith.maximumf %48, %47 : vector<2x8xf32>
    %50 = vector.shape_cast %49 : vector<2x8xf32> to vector<2x8x1xf32>
    %51 = vector.broadcast %50 : vector<2x8x1xf32> to vector<2x8x8xf32>
    %52 = arith.subf %46, %51 : vector<2x8x8xf32>
    %53 = math.exp %52 : vector<2x8x8xf32>
    %cst_33 = arith.constant dense<0.000000e+00> : vector<2x8xf32>
    %54 = vector.multi_reduction <add>, %53, %cst_33 [2] : vector<2x8x8xf32> to vector<2x8xf32>
    %55 = vector.shape_cast %54 : vector<2x8xf32> to vector<2x8x1xf32>
    %56 = vector.broadcast %55 : vector<2x8x1xf32> to vector<2x8x8xf32>
    %57 = arith.divf %53, %56 : vector<2x8x8xf32>
    %cst_34 = arith.constant -1.000000e+30 : f32
    %58 = vector.broadcast %cst_34 : f32 to vector<2x8x8xf32>
    %59 = arith.select %44, %38, %58 : vector<2x8x8xi1>, vector<2x8x8xf32>
    %cst_35 = arith.constant dense<0xFF800000> : vector<2x8xf32>
    %60 = vector.multi_reduction <maximumf>, %59, %cst_35 [1] : vector<2x8x8xf32> to vector<2x8xf32>
    %cst_36 = arith.constant 0xFF800000 : f32
    %61 = vector.broadcast %cst_36 : f32 to vector<2x8xf32>
    %62 = arith.maximumf %61, %60 : vector<2x8xf32>
    %63 = vector.shape_cast %62 : vector<2x8xf32> to vector<2x1x8xf32>
    %64 = vector.broadcast %63 : vector<2x1x8xf32> to vector<2x8x8xf32>
    %65 = arith.subf %59, %64 : vector<2x8x8xf32>
    %66 = math.exp %65 : vector<2x8x8xf32>
    %cst_37 = arith.constant dense<0.000000e+00> : vector<2x8xf32>
    %67 = vector.multi_reduction <add>, %66, %cst_37 [1] : vector<2x8x8xf32> to vector<2x8xf32>
    %68 = vector.shape_cast %67 : vector<2x8xf32> to vector<2x1x8xf32>
    %69 = vector.broadcast %68 : vector<2x1x8xf32> to vector<2x8x8xf32>
    %70 = arith.divf %66, %69 : vector<2x8x8xf32>
    "tpu.trace_start"() <{level = 10 : i32, message = "plm,pmd->pld"}> : () -> ()
    %cst_38 = arith.constant dense<0.000000e+00> : vector<2x8x128xf32>
    %71 = tpu.matmul %57, %37, %cst_38 {dimension_numbers = #tpu.dot_dimension_numbers<[2], [1], [1], [2], [0, 0, 0, 1, 1, 2], [0], [0]>} : vector<2x8x8xf32>, vector<2x8x128xf32>, vector<2x8x128xf32> -> vector<2x8x128xf32>
    "tpu.trace_stop"() : () -> ()
    "tpu.trace_start"() <{level = 10 : i32, message = "plm,pld->pmd"}> : () -> ()
    %cst_39 = arith.constant dense<0.000000e+00> : vector<2x8x128xf32>
    %72 = tpu.matmul %70, %36, %cst_39 {dimension_numbers = #tpu.dot_dimension_numbers<[1], [1], [2], [2], [0, 0, 0, 2, 1, 2], [0], [0]>} : vector<2x8x8xf32>, vector<2x8x128xf32>, vector<2x8x128xf32> -> vector<2x8x128xf32>
    "tpu.trace_stop"() : () -> ()
    %73 = vector.shape_cast %71 : vector<2x8x128xf32> to vector<16x128xf32>
    %c0_40 = arith.constant 0 : index
    %c0_41 = arith.constant 0 : index
    %74 = vector.load %arg8[%c0_40, %c0_41] : memref<128x128xf32, #tpu.memory_space<vmem>>, vector<128x128xf32>
    %cst_42 = arith.constant dense<0.000000e+00> : vector<16x128xf32>
    %75 = tpu.matmul %3, %74, %cst_42 {dimension_numbers = #tpu.dot_dimension_numbers<[1], [0], [0], [1], [0, 0, 1, 1], [], []>} : vector<16x128xf32>, vector<128x128xf32>, vector<16x128xf32> -> vector<16x128xf32>
    %c0_43 = arith.constant 0 : index
    %c0_44 = arith.constant 0 : index
    %76 = vector.load %arg9[%c0_43, %c0_44] : memref<128x128xf32, #tpu.memory_space<vmem>>, vector<128x128xf32>
    %cst_45 = arith.constant dense<0.000000e+00> : vector<16x128xf32>
    %77 = tpu.matmul %73, %76, %cst_45 {dimension_numbers = #tpu.dot_dimension_numbers<[1], [0], [0], [1], [0, 0, 1, 1], [], []>} : vector<16x128xf32>, vector<128x128xf32>, vector<16x128xf32> -> vector<16x128xf32>
    %78 = arith.addf %75, %77 : vector<16x128xf32>
    %c0_46 = arith.constant 0 : index
    %c0_47 = arith.constant 0 : index
    %79 = vector.load %arg10[%c0_46, %c0_47] : memref<1x128xf32, #tpu.memory_space<vmem>>, vector<1x128xf32>
    %80 = vector.broadcast %79 : vector<1x128xf32> to vector<16x128xf32>
    %81 = arith.addf %78, %80 : vector<16x128xf32>
    %cst_48 = arith.constant 0.000000e+00 : f32
    %82 = vector.broadcast %cst_48 : f32 to vector<16x128xf32>
    %83 = arith.maximumf %81, %82 : vector<16x128xf32>
    %c0_49 = arith.constant 0 : index
    %c0_50 = arith.constant 0 : index
    %84 = vector.load %arg11[%c0_49, %c0_50] : memref<128x128xf32, #tpu.memory_space<vmem>>, vector<128x128xf32>
    %cst_51 = arith.constant dense<0.000000e+00> : vector<16x128xf32>
    %85 = tpu.matmul %83, %84, %cst_51 {dimension_numbers = #tpu.dot_dimension_numbers<[1], [0], [0], [1], [0, 0, 1, 1], [], []>} : vector<16x128xf32>, vector<128x128xf32>, vector<16x128xf32> -> vector<16x128xf32>
    %c0_52 = arith.constant 0 : index
    %c0_53 = arith.constant 0 : index
    %86 = vector.load %arg12[%c0_52, %c0_53] : memref<1x128xf32, #tpu.memory_space<vmem>>, vector<1x128xf32>
    %87 = vector.broadcast %86 : vector<1x128xf32> to vector<16x128xf32>
    %88 = arith.addf %85, %87 : vector<16x128xf32>
    %cst_54 = arith.constant 0.000000e+00 : f32
    %89 = vector.broadcast %cst_54 : f32 to vector<16x128xf32>
    %90 = arith.maximumf %88, %89 : vector<16x128xf32>
    %91 = vector.shape_cast %90 : vector<16x128xf32> to vector<2x8x128xf32>
    %92 = vector.shape_cast %72 : vector<2x8x128xf32> to vector<16x128xf32>
    %c0_55 = arith.constant 0 : index
    %c0_56 = arith.constant 0 : index
    %93 = vector.load %arg8[%c0_55, %c0_56] : memref<128x128xf32, #tpu.memory_space<vmem>>, vector<128x128xf32>
    %cst_57 = arith.constant dense<0.000000e+00> : vector<16x128xf32>
    %94 = tpu.matmul %5, %93, %cst_57 {dimension_numbers = #tpu.dot_dimension_numbers<[1], [0], [0], [1], [0, 0, 1, 1], [], []>} : vector<16x128xf32>, vector<128x128xf32>, vector<16x128xf32> -> vector<16x128xf32>
    %c0_58 = arith.constant 0 : index
    %c0_59 = arith.constant 0 : index
    %95 = vector.load %arg9[%c0_58, %c0_59] : memref<128x128xf32, #tpu.memory_space<vmem>>, vector<128x128xf32>
    %cst_60 = arith.constant dense<0.000000e+00> : vector<16x128xf32>
    %96 = tpu.matmul %92, %95, %cst_60 {dimension_numbers = #tpu.dot_dimension_numbers<[1], [0], [0], [1], [0, 0, 1, 1], [], []>} : vector<16x128xf32>, vector<128x128xf32>, vector<16x128xf32> -> vector<16x128xf32>
    %97 = arith.addf %94, %96 : vector<16x128xf32>
    %c0_61 = arith.constant 0 : index
    %c0_62 = arith.constant 0 : index
    %98 = vector.load %arg10[%c0_61, %c0_62] : memref<1x128xf32, #tpu.memory_space<vmem>>, vector<1x128xf32>
    %99 = vector.broadcast %98 : vector<1x128xf32> to vector<16x128xf32>
    %100 = arith.addf %97, %99 : vector<16x128xf32>
    %cst_63 = arith.constant 0.000000e+00 : f32
    %101 = vector.broadcast %cst_63 : f32 to vector<16x128xf32>
    %102 = arith.maximumf %100, %101 : vector<16x128xf32>
    %c0_64 = arith.constant 0 : index
    %c0_65 = arith.constant 0 : index
    %103 = vector.load %arg11[%c0_64, %c0_65] : memref<128x128xf32, #tpu.memory_space<vmem>>, vector<128x128xf32>
    %cst_66 = arith.constant dense<0.000000e+00> : vector<16x128xf32>
    %104 = tpu.matmul %102, %103, %cst_66 {dimension_numbers = #tpu.dot_dimension_numbers<[1], [0], [0], [1], [0, 0, 1, 1], [], []>} : vector<16x128xf32>, vector<128x128xf32>, vector<16x128xf32> -> vector<16x128xf32>
    %c0_67 = arith.constant 0 : index
    %c0_68 = arith.constant 0 : index
    %105 = vector.load %arg12[%c0_67, %c0_68] : memref<1x128xf32, #tpu.memory_space<vmem>>, vector<1x128xf32>
    %106 = vector.broadcast %105 : vector<1x128xf32> to vector<16x128xf32>
    %107 = arith.addf %104, %106 : vector<16x128xf32>
    %cst_69 = arith.constant 0.000000e+00 : f32
    %108 = vector.broadcast %cst_69 : f32 to vector<16x128xf32>
    %109 = arith.maximumf %107, %108 : vector<16x128xf32>
    %110 = vector.shape_cast %109 : vector<16x128xf32> to vector<2x8x128xf32>
    %111 = tpu.iota {dimensions = array<i32: 1>} : vector<2x8x128xi32>
    %112 = vector.broadcast %0 : i32 to vector<2x8x128xi32>
    %113 = arith.cmpi slt, %111, %112 : vector<2x8x128xi32>
    %114 = tpu.iota {dimensions = array<i32: 1>} : vector<2x8x128xi32>
    %115 = vector.broadcast %1 : i32 to vector<2x8x128xi32>
    %116 = arith.cmpi slt, %114, %115 : vector<2x8x128xi32>
    %cst_70 = arith.constant 0.000000e+00 : f32
    %117 = vector.broadcast %cst_70 : f32 to vector<2x8x128xf32>
    %118 = arith.select %113, %91, %117 : vector<2x8x128xi1>, vector<2x8x128xf32>
    %cst_71 = arith.constant dense<0.000000e+00> : vector<2x128xf32>
    %119 = vector.multi_reduction <add>, %118, %cst_71 [1] : vector<2x8x128xf32> to vector<2x128xf32>
    %cst_72 = arith.constant 0.000000e+00 : f32
    %120 = vector.broadcast %cst_72 : f32 to vector<2x8x128xf32>
    %121 = arith.select %116, %110, %120 : vector<2x8x128xi1>, vector<2x8x128xf32>
    %cst_73 = arith.constant dense<0.000000e+00> : vector<2x128xf32>
    %122 = vector.multi_reduction <add>, %121, %cst_73 [1] : vector<2x8x128xf32> to vector<2x128xf32>
    %c0_74 = arith.constant 0 : index
    %c0_75 = arith.constant 0 : index
    %123 = vector.load %arg13[%c0_74, %c0_75] : memref<128x128xf32, #tpu.memory_space<vmem>>, vector<128x128xf32>
    %cst_76 = arith.constant dense<0.000000e+00> : vector<2x128xf32>
    %124 = tpu.matmul %119, %123, %cst_76 {dimension_numbers = #tpu.dot_dimension_numbers<[1], [0], [0], [1], [0, 0, 1, 1], [], []>} : vector<2x128xf32>, vector<128x128xf32>, vector<2x128xf32> -> vector<2x128xf32>
    %c0_77 = arith.constant 0 : index
    %c0_78 = arith.constant 0 : index
    %125 = vector.load %arg14[%c0_77, %c0_78] : memref<128x128xf32, #tpu.memory_space<vmem>>, vector<128x128xf32>
    %cst_79 = arith.constant dense<0.000000e+00> : vector<2x128xf32>
    %126 = tpu.matmul %122, %125, %cst_79 {dimension_numbers = #tpu.dot_dimension_numbers<[1], [0], [0], [1], [0, 0, 1, 1], [], []>} : vector<2x128xf32>, vector<128x128xf32>, vector<2x128xf32> -> vector<2x128xf32>
    %127 = arith.addf %124, %126 : vector<2x128xf32>
    %c0_80 = arith.constant 0 : index
    %c0_81 = arith.constant 0 : index
    %128 = vector.load %arg15[%c0_80, %c0_81] : memref<1x128xf32, #tpu.memory_space<vmem>>, vector<1x128xf32>
    %129 = vector.broadcast %128 : vector<1x128xf32> to vector<2x128xf32>
    %130 = arith.addf %127, %129 : vector<2x128xf32>
    %cst_82 = arith.constant 0.000000e+00 : f32
    %131 = vector.broadcast %cst_82 : f32 to vector<2x128xf32>
    %132 = arith.maximumf %130, %131 : vector<2x128xf32>
    %c0_83 = arith.constant 0 : index
    %c0_84 = arith.constant 0 : index
    %133 = vector.load %arg16[%c0_83, %c0_84] : memref<128x128xf32, #tpu.memory_space<vmem>>, vector<128x128xf32>
    %cst_85 = arith.constant dense<0.000000e+00> : vector<2x128xf32>
    %134 = tpu.matmul %132, %133, %cst_85 {dimension_numbers = #tpu.dot_dimension_numbers<[1], [0], [0], [1], [0, 0, 1, 1], [], []>} : vector<2x128xf32>, vector<128x128xf32>, vector<2x128xf32> -> vector<2x128xf32>
    %c0_86 = arith.constant 0 : index
    %c0_87 = arith.constant 0 : index
    %135 = vector.load %arg17[%c0_86, %c0_87] : memref<1x128xf32, #tpu.memory_space<vmem>>, vector<1x128xf32>
    %136 = vector.broadcast %135 : vector<1x128xf32> to vector<2x128xf32>
    %137 = arith.addf %134, %136 : vector<2x128xf32>
    %cst_88 = arith.constant 0.000000e+00 : f32
    %138 = vector.broadcast %cst_88 : f32 to vector<2x128xf32>
    %139 = arith.maximumf %137, %138 : vector<2x128xf32>
    %c0_89 = arith.constant 0 : index
    %c0_90 = arith.constant 0 : index
    %140 = vector.load %arg18[%c0_89, %c0_90] : memref<128x128xf32, #tpu.memory_space<vmem>>, vector<128x128xf32>
    %cst_91 = arith.constant dense<0.000000e+00> : vector<2x128xf32>
    %141 = tpu.matmul %139, %140, %cst_91 {dimension_numbers = #tpu.dot_dimension_numbers<[1], [0], [0], [1], [0, 0, 1, 1], [], []>} : vector<2x128xf32>, vector<128x128xf32>, vector<2x128xf32> -> vector<2x128xf32>
    %c0_92 = arith.constant 0 : index
    %c0_93 = arith.constant 0 : index
    %142 = vector.load %arg19[%c0_92, %c0_93] : memref<1x128xf32, #tpu.memory_space<vmem>>, vector<1x128xf32>
    %143 = vector.broadcast %142 : vector<1x128xf32> to vector<2x128xf32>
    %144 = arith.addf %141, %143 : vector<2x128xf32>
    %c0_94 = arith.constant 0 : index
    %c0_95 = arith.constant 0 : index
    %c0_96 = arith.constant 0 : index
    %145 = vector.load %arg20[%c0_94, %c0_95, %c0_96] : memref<1x2x128xf32, #tpu.memory_space<vmem>>, vector<1x2x128xf32>
    %146 = vector.shape_cast %145 : vector<1x2x128xf32> to vector<2x128xf32>
    %147 = vector.shape_cast %144 : vector<2x128xf32> to vector<1x2x128xf32>
    tpu.vector_store %arg20[%c0_94, %c0_95, %c0_96], %147 {strides = array<i32>} : memref<1x2x128xf32, #tpu.memory_space<vmem>>, vector<1x2x128xf32>,
    return
  }
  func.func @transform_0(%arg0: i32, %arg1: memref<2xi32, #tpu.memory_space<smem>>) -> (i32, i32, i32) {
    %c0_i32 = arith.constant 0 : i32
    %c0_i32_0 = arith.constant 0 : i32
    %c0_i32_1 = arith.constant 0 : i32
    return %arg0, %c0_i32, %c0_i32_0 : i32, i32, i32
  }
  func.func @transform_1(%arg0: i32, %arg1: memref<2xi32, #tpu.memory_space<smem>>) -> (i32, i32, i32) {
    %c0_i32 = arith.constant 0 : i32
    %c0_i32_0 = arith.constant 0 : i32
    %c0_i32_1 = arith.constant 0 : i32
    return %arg0, %c0_i32, %c0_i32_0 : i32, i32, i32
  }
  func.func @transform_2(%arg0: i32, %arg1: memref<2xi32, #tpu.memory_space<smem>>) -> (i32, i32) {
    %c0_i32 = arith.constant 0 : i32
    %c0_i32_0 = arith.constant 0 : i32
    %c0_i32_1 = arith.constant 0 : i32
    return %c0_i32, %c0_i32_0 : i32, i32
  }
  func.func @transform_3(%arg0: i32, %arg1: memref<2xi32, #tpu.memory_space<smem>>) -> (i32, i32) {
    %c0_i32 = arith.constant 0 : i32
    %c0_i32_0 = arith.constant 0 : i32
    %c0_i32_1 = arith.constant 0 : i32
    return %c0_i32, %c0_i32_0 : i32, i32
  }
  func.func @transform_4(%arg0: i32, %arg1: memref<2xi32, #tpu.memory_space<smem>>) -> (i32, i32) {
    %c0_i32 = arith.constant 0 : i32
    %c0_i32_0 = arith.constant 0 : i32
    %c0_i32_1 = arith.constant 0 : i32
    return %c0_i32, %c0_i32_0 : i32, i32
  }
  func.func @transform_5(%arg0: i32, %arg1: memref<2xi32, #tpu.memory_space<smem>>) -> (i32, i32) {
    %c0_i32 = arith.constant 0 : i32
    %c0_i32_0 = arith.constant 0 : i32
    %c0_i32_1 = arith.constant 0 : i32
    return %c0_i32, %c0_i32_0 : i32, i32
  }
  func.func @transform_6(%arg0: i32, %arg1: memref<2xi32, #tpu.memory_space<smem>>) -> (i32, i32) {
    %c0_i32 = arith.constant 0 : i32
    %c0_i32_0 = arith.constant 0 : i32
    %c0_i32_1 = arith.constant 0 : i32
    return %c0_i32, %c0_i32_0 : i32, i32
  }
  func.func @transform_7(%arg0: i32, %arg1: memref<2xi32, #tpu.memory_space<smem>>) -> (i32, i32) {
    %c0_i32 = arith.constant 0 : i32
    %c0_i32_0 = arith.constant 0 : i32
    %c0_i32_1 = arith.constant 0 : i32
    return %c0_i32, %c0_i32_0 : i32, i32
  }
  func.func @transform_8(%arg0: i32, %arg1: memref<2xi32, #tpu.memory_space<smem>>) -> (i32, i32) {
    %c0_i32 = arith.constant 0 : i32
    %c0_i32_0 = arith.constant 0 : i32
    %c0_i32_1 = arith.constant 0 : i32
    return %c0_i32, %c0_i32_0 : i32, i32
  }
  func.func @transform_9(%arg0: i32, %arg1: memref<2xi32, #tpu.memory_space<smem>>) -> (i32, i32) {
    %c0_i32 = arith.constant 0 : i32
    %c0_i32_0 = arith.constant 0 : i32
    %c0_i32_1 = arith.constant 0 : i32
    return %c0_i32, %c0_i32_0 : i32, i32
  }
  func.func @transform_10(%arg0: i32, %arg1: memref<2xi32, #tpu.memory_space<smem>>) -> (i32, i32) {
    %c0_i32 = arith.constant 0 : i32
    %c0_i32_0 = arith.constant 0 : i32
    %c0_i32_1 = arith.constant 0 : i32
    return %c0_i32, %c0_i32_0 : i32, i32
  }
  func.func @transform_11(%arg0: i32, %arg1: memref<2xi32, #tpu.memory_space<smem>>) -> (i32, i32) {
    %c0_i32 = arith.constant 0 : i32
    %c0_i32_0 = arith.constant 0 : i32
    %c0_i32_1 = arith.constant 0 : i32
    return %c0_i32, %c0_i32_0 : i32, i32
  }
  func.func @transform_12(%arg0: i32, %arg1: memref<2xi32, #tpu.memory_space<smem>>) -> (i32, i32) {
    %c0_i32 = arith.constant 0 : i32
    %c0_i32_0 = arith.constant 0 : i32
    %c0_i32_1 = arith.constant 0 : i32
    return %c0_i32, %c0_i32_0 : i32, i32
  }
  func.func @transform_13(%arg0: i32, %arg1: memref<2xi32, #tpu.memory_space<smem>>) -> (i32, i32) {
    %c0_i32 = arith.constant 0 : i32
    %c0_i32_0 = arith.constant 0 : i32
    %c0_i32_1 = arith.constant 0 : i32
    return %c0_i32, %c0_i32_0 : i32, i32
  }
  func.func @transform_14(%arg0: i32, %arg1: memref<2xi32, #tpu.memory_space<smem>>) -> (i32, i32) {
    %c0_i32 = arith.constant 0 : i32
    %c0_i32_0 = arith.constant 0 : i32
    %c0_i32_1 = arith.constant 0 : i32
    return %c0_i32, %c0_i32_0 : i32, i32
  }
  func.func @transform_15(%arg0: i32, %arg1: memref<2xi32, #tpu.memory_space<smem>>) -> (i32, i32) {
    %c0_i32 = arith.constant 0 : i32
    %c0_i32_0 = arith.constant 0 : i32
    %c0_i32_1 = arith.constant 0 : i32
    return %c0_i32, %c0_i32_0 : i32, i32
  }
  func.func @transform_16(%arg0: i32, %arg1: memref<2xi32, #tpu.memory_space<smem>>) -> (i32, i32) {
    %c0_i32 = arith.constant 0 : i32
    %c0_i32_0 = arith.constant 0 : i32
    %c0_i32_1 = arith.constant 0 : i32
    return %c0_i32, %c0_i32_0 : i32, i32
  }
  func.func @transform_17(%arg0: i32, %arg1: memref<2xi32, #tpu.memory_space<smem>>) -> (i32, i32) {
    %c0_i32 = arith.constant 0 : i32
    %c0_i32_0 = arith.constant 0 : i32
    %c0_i32_1 = arith.constant 0 : i32
    return %c0_i32, %c0_i32_0 : i32, i32
  }
  func.func @transform_18(%arg0: i32, %arg1: memref<2xi32, #tpu.memory_space<smem>>) -> (i32, i32, i32) {
    %c0_i32 = arith.constant 0 : i32
    %c0_i32_0 = arith.constant 0 : i32
    %c0_i32_1 = arith.constant 0 : i32
    return %arg0, %c0_i32, %c0_i32_0 : i32, i32, i32
  }
}

</mosaic_0001>

<llo_original>
// kernel: tpu_custom_call.1
$region0: #{tpu_custom_call.1}
  #allocation0 [shape = 'u32[]', space=smem, size = 0x4, offset = 0x4, fixed_abs, tag = 'smem constant byte address 0x4 - core index']
  #allocation1 [shape = 'u32[144,128]{1,0:T(1,128)}', space=vmem, size = 0x12000, scoped, tag = 'internal scratch']
  #allocation2 [shape = 's32[1]{0}', space=sflag, size = 0x4, scoped, tag = 'scoped memory for tpu_custom_call.1']
  #allocation3 [shape = 'u8[512]{0}', space=smem, size = 0x200, scoped, tag = 'prefetched SMEM operand 0']
  %s0 = inlined_call_operand.hbm [shape: s32[2], index: 0, kind: input, shape index: {}]
  %s1 = inlined_call_operand.hbm [shape: f32[4,8,128], index: 1, kind: input, shape index: {}]
  %s2 = inlined_call_operand.hbm [shape: f32[4,8,128], index: 2, kind: input, shape index: {}]
  %s3 = inlined_call_operand.hbm [shape: f32[128,128], index: 3, kind: input, shape index: {}]
  %s4 = inlined_call_operand.vmem [shape: f32[1,128], index: 4, kind: input, shape index: {}]
  %s5 = inlined_call_operand.hbm [shape: f32[128,128], index: 5, kind: input, shape index: {}]
  %s6 = inlined_call_operand.vmem [shape: f32[1,128], index: 6, kind: input, shape index: {}]
  %s7 = inlined_call_operand.hbm [shape: f32[128,128], index: 7, kind: input, shape index: {}]
  %s8 = inlined_call_operand.hbm [shape: f32[128,128], index: 8, kind: input, shape index: {}]
  %s9 = inlined_call_operand.vmem [shape: f32[1,128], index: 9, kind: input, shape index: {}]
  %s10 = inlined_call_operand.hbm [shape: f32[128,128], index: 10, kind: input, shape index: {}]
  %s11 = inlined_call_operand.vmem [shape: f32[1,128], index: 11, kind: input, shape index: {}]
  %s12 = inlined_call_operand.hbm [shape: f32[128,128], index: 12, kind: input, shape index: {}]
  %s13 = inlined_call_operand.hbm [shape: f32[128,128], index: 13, kind: input, shape index: {}]
  %s14 = inlined_call_operand.vmem [shape: f32[1,128], index: 14, kind: input, shape index: {}]
  %s15 = inlined_call_operand.hbm [shape: f32[128,128], index: 15, kind: input, shape index: {}]
  %s16 = inlined_call_operand.vmem [shape: f32[1,128], index: 16, kind: input, shape index: {}]
  %s17 = inlined_call_operand.hbm [shape: f32[128,128], index: 17, kind: input, shape index: {}]
  %s18 = inlined_call_operand.vmem [shape: f32[1,128], index: 18, kind: input, shape index: {}]
  %s19 = inlined_call_operand.hbm [shape: f32[2,2,128], index: 19, kind: output, shape index: {}]
  %s20 = sld [smem:[#allocation0]]
  $region149: #{tpu_custom_call.1} parent=0
    _
  %s22 = ssub.s32 1, %s20
  %s23 = scalar_select 0, %s22, %s20
  %25 = dma.hbm_to_smem %s0, 16, [#allocation3], [#allocation2]
  %26 = dma.done [#allocation2], 16
  %27 = sfence
  $region1: #{tpu_custom_call.1} parent=0
    #allocation4 [shape = 'u8[16384]{0}', space=vmem, size = 0x4000, scoped, tag = 'input window, operand 1']
    #allocation5 [shape = 's32[2]{0}', space=sflag, size = 0x8, scoped, tag = 'scoped memory for tpu_custom_call.1']
    #allocation6 [shape = 's32[2]{0}', space=sflag, size = 0x8, scoped, tag = 'scoped memory for tpu_custom_call.1']
    #allocation7 [shape = 'u8[16384]{0}', space=vmem, size = 0x4000, scoped, tag = 'input window, operand 2']
    #allocation8 [shape = 's32[2]{0}', space=sflag, size = 0x8, scoped, tag = 'scoped memory for tpu_custom_call.1']
    #allocation9 [shape = 'u8[65536]{0}', space=vmem, size = 0x10000, scoped, tag = 'input window, operand 3, single buffered']
    #allocation10 [shape = 'u8[65536]{0}', space=vmem, size = 0x10000, scoped, tag = 'input window, operand 5, single buffered']
    #allocation11 [shape = 's32[1]{0}', space=sflag, size = 0x4, scoped, tag = 'scoped memory for tpu_custom_call.1']
    #allocation12 [shape = 'u8[65536]{0}', space=vmem, size = 0x10000, scoped, tag = 'input window, operand 7, single buffered']
    #allocation13 [shape = 'u8[65536]{0}', space=vmem, size = 0x10000, scoped, tag = 'input window, operand 8, single buffered']
    #allocation14 [shape = 's32[1]{0}', space=sflag, size = 0x4, scoped, tag = 'scoped memory for tpu_custom_call.1']
    #allocation15 [shape = 'u8[65536]{0}', space=vmem, size = 0x10000, scoped, tag = 'input window, operand 10, single buffered']
    #allocation16 [shape = 'u8[65536]{0}', space=vmem, size = 0x10000, scoped, tag = 'input window, operand 12, single buffered']
    #allocation17 [shape = 's32[1]{0}', space=sflag, size = 0x4, scoped, tag = 'scoped memory for tpu_custom_call.1']
    #allocation18 [shape = 'u8[65536]{0}', space=vmem, size = 0x10000, scoped, tag = 'input window, operand 13, single buffered']
    #allocation19 [shape = 'u8[65536]{0}', space=vmem, size = 0x10000, scoped, tag = 'input window, operand 15, single buffered']
    #allocation20 [shape = 's32[1]{0}', space=sflag, size = 0x4, scoped, tag = 'scoped memory for tpu_custom_call.1']
    #allocation21 [shape = 'u8[65536]{0}', space=vmem, size = 0x10000, scoped, tag = 'input window, operand 17, single buffered']
    #allocation22 [shape = 'u8[2048]{0}', space=vmem, size = 0x800, scoped, tag = 'output window, operand 0']
    %28 = vsyncpa [#allocation5], 0
    %s29 = scalar_lea.sflag [#allocation5], 1
    %30 = vsyncpa %s29, 0
    %31 = vsyncpa [#allocation8], 0
    %s32 = scalar_lea.sflag [#allocation8], 1
    %33 = vsyncpa %s32, 0
    %34 = vsyncpa [#allocation11], 0
    %35 = vsyncpa [#allocation14], 0
    %36 = vsyncpa [#allocation17], 0
    %37 = vsyncpa [#allocation20], 0
    %38 = vsyncpa [#allocation6], 0
    %s39 = scalar_lea.sflag [#allocation6], 1
    %40 = vsyncpa %s39, 0
    loop: start=0, step=1, limit=4
    $region2: #{tpu_custom_call.1} parent=1 // loop_pre_header
      _
    $region3: #{tpu_custom_call.1} parent=1 // loop_header
      %s42 = sphi 0, %s46
      %p43 = scmp.ge.s32.totalorder %s42, 4
      %s52 = sphi 0, %s54
      %s55 = sphi 0, %s52
      %s56 = sphi 0, %s55
      %s72 = sphi 0, %s56
      %s78 = sphi 0, %s80
      %s81 = sphi 0, %s78
      %s82 = sphi 0, %s81
      %s98 = sphi 0, %s82
      %s102 = sphi 0, %s102
      %s104 = sphi 0, %s102
      %s105 = sphi 0, %s104
      %s119 = sphi 0, %s105
      %s123 = sphi 0, %s123
      %s125 = sphi 0, %s123
      %s126 = sphi 0, %s125
      %s140 = sphi 0, %s126
      %s144 = sphi 0, %s144
      %s146 = sphi 0, %s144
      %s147 = sphi 0, %s146
      %s161 = sphi 0, %s147
      %s165 = sphi 0, %s165
      %s167 = sphi 0, %s165
      %s168 = sphi 0, %s167
      %s182 = sphi 0, %s168
      %s186 = sphi 0, %s186
      %s188 = sphi 0, %s186
      %s189 = sphi 0, %s188
      %s203 = sphi 0, %s189
      %s207 = sphi 0, %s207
      %s209 = sphi 0, %s207
      %s210 = sphi 0, %s209
      %s224 = sphi 0, %s210
      %s228 = sphi 0, %s228
      %s230 = sphi 0, %s228
      %s231 = sphi 0, %s230
      %s245 = sphi 0, %s231
      %s249 = sphi 0, %s249
      %s251 = sphi 0, %s249
      %s252 = sphi 0, %s251
      %s266 = sphi 0, %s252
      %s270 = sphi 0, %s270
      %s272 = sphi 0, %s270
      %s273 = sphi 0, %s272
      %s287 = sphi 0, %s273
      %s291 = sphi 0, %s291
      %s293 = sphi 0, %s291
      %s294 = sphi 0, %s293
      %s308 = sphi 0, %s294
      %s312 = sphi 0, %s312
      %s314 = sphi 0, %s312
      %s315 = sphi 0, %s314
      %s329 = sphi 0, %s315
      %s333 = sphi 0, %s333
      %s335 = sphi 0, %s333
      %s336 = sphi 0, %s335
      %s350 = sphi 0, %s336
      %s354 = sphi 0, %s354
      %s356 = sphi 0, %s354
      %s357 = sphi 0, %s356
      %s371 = sphi 0, %s357
      %s375 = sphi 0, %s375
      %s377 = sphi 0, %s375
      %s378 = sphi 0, %s377
      %s392 = sphi 0, %s378
      %s396 = sphi 0, %s396
      %s398 = sphi 0, %s396
      %s399 = sphi 0, %s398
      %s413 = sphi 0, %s399
      %s417 = sphi 0, %s417
      %s419 = sphi 0, %s417
      %s420 = sphi 0, %s419
      %s434 = sphi 0, %s420
      %s440 = sphi 0, %s442
      %s443 = sphi 0, %s440
      %s444 = sphi 0, %s443
      %s460 = sphi 0, %s444
    $region4: #{tpu_custom_call.1} parent=1 // loop_header_branch
      %45 = sbr.rel (%p43) target = $region8
    $region5: #{tpu_custom_call.1} parent=1 // loop_body
      %s47 = ssub.s32 %s42, 1
      %s48 = ssub.s32 %s42, 2
      %s49 = sadd.s32 %s42, 1
      %s50 = ssub.s32 %s42, %s49
      %p51 = scmp.eq.s32.totalorder %s50, 0
      %s53 = sadd.s32 %s52, 1
      %s54 = scalar_select %p51, %s52, %s53
      %p57 = pneg %p51
      %p58 = scmp.eq.s32.totalorder %s42, 1
      %p59 = por %p57, %p58
      %p60 = scmp.ne.s32.totalorder %s52, %s55
      %p61 = scmp.eq.s32.totalorder %s42, 0
      %p62 = por %p60, %p61
      %p63 = scmp.ne.s32.totalorder %s52, %s55
      %p64 = scmp.eq.s32.totalorder %s47, 1
      %p65 = por %p63, %p64
      %p66 = scmp.ne.s32.totalorder %s55, %s56
      %p67 = scmp.eq.s32.totalorder %s47, 0
      %p68 = por %p66, %p67
      %p69 = scmp.ne.s32.totalorder %s55, %s56
      %p70 = scmp.eq.s32.totalorder %s48, 1
      %p71 = por %p69, %p70
      %p73 = scmp.ne.s32.totalorder %s56, %s72
      %p74 = scmp.eq.s32.totalorder %s48, 0
      %p75 = por %p73, %p74
      %s76 = ssub.s32 %s42, %s49
      %p77 = scmp.eq.s32.totalorder %s76, 0
      %s79 = sadd.s32 %s78, 1
      %s80 = scalar_select %p77, %s78, %s79
      %p83 = pneg %p77
      %p84 = scmp.eq.s32.totalorder %s42, 1
      %p85 = por %p83, %p84
      %p86 = scmp.ne.s32.totalorder %s78, %s81
      %p87 = scmp.eq.s32.totalorder %s42, 0
      %p88 = por %p86, %p87
      %p89 = scmp.ne.s32.totalorder %s78, %s81
      %p90 = scmp.eq.s32.totalorder %s47, 1
      %p91 = por %p89, %p90
      %p92 = scmp.ne.s32.totalorder %s81, %s82
      %p93 = scmp.eq.s32.totalorder %s47, 0
      %p94 = por %p92, %p93
      %p95 = scmp.ne.s32.totalorder %s81, %s82
      %p96 = scmp.eq.s32.totalorder %s48, 1
      %p97 = por %p95, %p96
      %p99 = scmp.ne.s32.totalorder %s82, %s98
      %p100 = scmp.eq.s32.totalorder %s48, 0
      %p101 = por %p99, %p100
      %s103 = sadd.s32 %s102, 1
      %p106 = scmp.eq.s32.totalorder %s42, 1
      %p107 = scmp.ne.s32.totalorder %s102, %s104
      %p108 = scmp.eq.s32.totalorder %s42, 0
      %p109 = por %p107, %p108
      %p110 = scmp.ne.s32.totalorder %s102, %s104
      %p111 = scmp.eq.s32.totalorder %s47, 1
      %p112 = por %p110, %p111
      %p113 = scmp.ne.s32.totalorder %s104, %s105
      %p114 = scmp.eq.s32.totalorder %s47, 0
      %p115 = por %p113, %p114
      %p116 = scmp.ne.s32.totalorder %s104, %s105
      %p117 = scmp.eq.s32.totalorder %s48, 1
      %p118 = por %p116, %p117
      %p120 = scmp.ne.s32.totalorder %s105, %s119
      %p121 = scmp.eq.s32.totalorder %s48, 0
      %p122 = por %p120, %p121
      %s124 = sadd.s32 %s123, 1
      %p127 = scmp.eq.s32.totalorder %s42, 1
      %p128 = scmp.ne.s32.totalorder %s123, %s125
      %p129 = scmp.eq.s32.totalorder %s42, 0
      %p130 = por %p128, %p129
      %p131 = scmp.ne.s32.totalorder %s123, %s125
      %p132 = scmp.eq.s32.totalorder %s47, 1
      %p133 = por %p131, %p132
      %p134 = scmp.ne.s32.totalorder %s125, %s126
      %p135 = scmp.eq.s32.totalorder %s47, 0
      %p136 = por %p134, %p135
      %p137 = scmp.ne.s32.totalorder %s125, %s126
      %p138 = scmp.eq.s32.totalorder %s48, 1
      %p139 = por %p137, %p138
      %p141 = scmp.ne.s32.totalorder %s126, %s140
      %p142 = scmp.eq.s32.totalorder %s48, 0
      %p143 = por %p141, %p142
      %s145 = sadd.s32 %s144, 1
      %p148 = scmp.eq.s32.totalorder %s42, 1
      %p149 = scmp.ne.s32.totalorder %s144, %s146
      %p150 = scmp.eq.s32.totalorder %s42, 0
      %p151 = por %p149, %p150
      %p152 = scmp.ne.s32.totalorder %s144, %s146
      %p153 = scmp.eq.s32.totalorder %s47, 1
      %p154 = por %p152, %p153
      %p155 = scmp.ne.s32.totalorder %s146, %s147
      %p156 = scmp.eq.s32.totalorder %s47, 0
      %p157 = por %p155, %p156
      %p158 = scmp.ne.s32.totalorder %s146, %s147
      %p159 = scmp.eq.s32.totalorder %s48, 1
      %p160 = por %p158, %p159
      %p162 = scmp.ne.s32.totalorder %s147, %s161
      %p163 = scmp.eq.s32.totalorder %s48, 0
      %p164 = por %p162, %p163
      %s166 = sadd.s32 %s165, 1
      %p169 = scmp.eq.s32.totalorder %s42, 1
      %p170 = scmp.ne.s32.totalorder %s165, %s167
      %p171 = scmp.eq.s32.totalorder %s42, 0
      %p172 = por %p170, %p171
      %p173 = scmp.ne.s32.totalorder %s165, %s167
      %p174 = scmp.eq.s32.totalorder %s47, 1
      %p175 = por %p173, %p174
      %p176 = scmp.ne.s32.totalorder %s167, %s168
      %p177 = scmp.eq.s32.totalorder %s47, 0
      %p178 = por %p176, %p177
      %p179 = scmp.ne.s32.totalorder %s167, %s168
      %p180 = scmp.eq.s32.totalorder %s48, 1
      %p181 = por %p179, %p180
      %p183 = scmp.ne.s32.totalorder %s168, %s182
      %p184 = scmp.eq.s32.totalorder %s48, 0
      %p185 = por %p183, %p184
      %s187 = sadd.s32 %s186, 1
      %p190 = scmp.eq.s32.totalorder %s42, 1
      %p191 = scmp.ne.s32.totalorder %s186, %s188
      %p192 = scmp.eq.s32.totalorder %s42, 0
      %p193 = por %p191, %p192
      %p194 = scmp.ne.s32.totalorder %s186, %s188
      %p195 = scmp.eq.s32.totalorder %s47, 1
      %p196 = por %p194, %p195
      %p197 = scmp.ne.s32.totalorder %s188, %s189
      %p198 = scmp.eq.s32.totalorder %s47, 0
      %p199 = por %p197, %p198
      %p200 = scmp.ne.s32.totalorder %s188, %s189
      %p201 = scmp.eq.s32.totalorder %s48, 1
      %p202 = por %p200, %p201
      %p204 = scmp.ne.s32.totalorder %s189, %s203
      %p205 = scmp.eq.s32.totalorder %s48, 0
      %p206 = por %p204, %p205
      %s208 = sadd.s32 %s207, 1
      %p211 = scmp.eq.s32.totalorder %s42, 1
      %p212 = scmp.ne.s32.totalorder %s207, %s209
      %p213 = scmp.eq.s32.totalorder %s42, 0
      %p214 = por %p212, %p213
      %p215 = scmp.ne.s32.totalorder %s207, %s209
      %p216 = scmp.eq.s32.totalorder %s47, 1
      %p217 = por %p215, %p216
      %p218 = scmp.ne.s32.totalorder %s209, %s210
      %p219 = scmp.eq.s32.totalorder %s47, 0
      %p220 = por %p218, %p219
      %p221 = scmp.ne.s32.totalorder %s209, %s210
      %p222 = scmp.eq.s32.totalorder %s48, 1
      %p223 = por %p221, %p222
      %p225 = scmp.ne.s32.totalorder %s210, %s224
      %p226 = scmp.eq.s32.totalorder %s48, 0
      %p227 = por %p225, %p226
      %s229 = sadd.s32 %s228, 1
      %p232 = scmp.eq.s32.totalorder %s42, 1
      %p233 = scmp.ne.s32.totalorder %s228, %s230
      %p234 = scmp.eq.s32.totalorder %s42, 0
      %p235 = por %p233, %p234
      %p236 = scmp.ne.s32.totalorder %s228, %s230
      %p237 = scmp.eq.s32.totalorder %s47, 1
      %p238 = por %p236, %p237
      %p239 = scmp.ne.s32.totalorder %s230, %s231
      %p240 = scmp.eq.s32.totalorder %s47, 0
      %p241 = por %p239, %p240
      %p242 = scmp.ne.s32.totalorder %s230, %s231
      %p243 = scmp.eq.s32.totalorder %s48, 1
      %p244 = por %p242, %p243
      %p246 = scmp.ne.s32.totalorder %s231, %s245
      %p247 = scmp.eq.s32.totalorder %s48, 0
      %p248 = por %p246, %p247
      %s250 = sadd.s32 %s249, 1
      %p253 = scmp.eq.s32.totalorder %s42, 1
      %p254 = scmp.ne.s32.totalorder %s249, %s251
      %p255 = scmp.eq.s32.totalorder %s42, 0
      %p256 = por %p254, %p255
      %p257 = scmp.ne.s32.totalorder %s249, %s251
      %p258 = scmp.eq.s32.totalorder %s47, 1
      %p259 = por %p257, %p258
      %p260 = scmp.ne.s32.totalorder %s251, %s252
      %p261 = scmp.eq.s32.totalorder %s47, 0
      %p262 = por %p260, %p261
      %p263 = scmp.ne.s32.totalorder %s251, %s252
      %p264 = scmp.eq.s32.totalorder %s48, 1
      %p265 = por %p263, %p264
      %p267 = scmp.ne.s32.totalorder %s252, %s266
      %p268 = scmp.eq.s32.totalorder %s48, 0
      %p269 = por %p267, %p268
      %s271 = sadd.s32 %s270, 1
      %p274 = scmp.eq.s32.totalorder %s42, 1
      %p275 = scmp.ne.s32.totalorder %s270, %s272
      %p276 = scmp.eq.s32.totalorder %s42, 0
      %p277 = por %p275, %p276
      %p278 = scmp.ne.s32.totalorder %s270, %s272
      %p279 = scmp.eq.s32.totalorder %s47, 1
      %p280 = por %p278, %p279
      %p281 = scmp.ne.s32.totalorder %s272, %s273
      %p282 = scmp.eq.s32.totalorder %s47, 0
      %p283 = por %p281, %p282
      %p284 = scmp.ne.s32.totalorder %s272, %s273
      %p285 = scmp.eq.s32.totalorder %s48, 1
      %p286 = por %p284, %p285
      %p288 = scmp.ne.s32.totalorder %s273, %s287
      %p289 = scmp.eq.s32.totalorder %s48, 0
      %p290 = por %p288, %p289
      %s292 = sadd.s32 %s291, 1
      %p295 = scmp.eq.s32.totalorder %s42, 1
      %p296 = scmp.ne.s32.totalorder %s291, %s293
      %p297 = scmp.eq.s32.totalorder %s42, 0
      %p298 = por %p296, %p297
      %p299 = scmp.ne.s32.totalorder %s291, %s293
      %p300 = scmp.eq.s32.totalorder %s47, 1
      %p301 = por %p299, %p300
      %p302 = scmp.ne.s32.totalorder %s293, %s294
      %p303 = scmp.eq.s32.totalorder %s47, 0
      %p304 = por %p302, %p303
      %p305 = scmp.ne.s32.totalorder %s293, %s294
      %p306 = scmp.eq.s32.totalorder %s48, 1
      %p307 = por %p305, %p306
      %p309 = scmp.ne.s32.totalorder %s294, %s308
      %p310 = scmp.eq.s32.totalorder %s48, 0
      %p311 = por %p309, %p310
      %s313 = sadd.s32 %s312, 1
      %p316 = scmp.eq.s32.totalorder %s42, 1
      %p317 = scmp.ne.s32.totalorder %s312, %s314
      %p318 = scmp.eq.s32.totalorder %s42, 0
      %p319 = por %p317, %p318
      %p320 = scmp.ne.s32.totalorder %s312, %s314
      %p321 = scmp.eq.s32.totalorder %s47, 1
      %p322 = por %p320, %p321
      %p323 = scmp.ne.s32.totalorder %s314, %s315
      %p324 = scmp.eq.s32.totalorder %s47, 0
      %p325 = por %p323, %p324
      %p326 = scmp.ne.s32.totalorder %s314, %s315
      %p327 = scmp.eq.s32.totalorder %s48, 1
      %p328 = por %p326, %p327
      %p330 = scmp.ne.s32.totalorder %s315, %s329
      %p331 = scmp.eq.s32.totalorder %s48, 0
      %p332 = por %p330, %p331
      %s334 = sadd.s32 %s333, 1
      %p337 = scmp.eq.s32.totalorder %s42, 1
      %p338 = scmp.ne.s32.totalorder %s333, %s335
      %p339 = scmp.eq.s32.totalorder %s42, 0
      %p340 = por %p338, %p339
      %p341 = scmp.ne.s32.totalorder %s333, %s335
      %p342 = scmp.eq.s32.totalorder %s47, 1
      %p343 = por %p341, %p342
      %p344 = scmp.ne.s32.totalorder %s335, %s336
      %p345 = scmp.eq.s32.totalorder %s47, 0
      %p346 = por %p344, %p345
      %p347 = scmp.ne.s32.totalorder %s335, %s336
      %p348 = scmp.eq.s32.totalorder %s48, 1
      %p349 = por %p347, %p348
      %p351 = scmp.ne.s32.totalorder %s336, %s350
      %p352 = scmp.eq.s32.totalorder %s48, 0
      %p353 = por %p351, %p352
      %s355 = sadd.s32 %s354, 1
      %p358 = scmp.eq.s32.totalorder %s42, 1
      %p359 = scmp.ne.s32.totalorder %s354, %s356
      %p360 = scmp.eq.s32.totalorder %s42, 0
      %p361 = por %p359, %p360
      %p362 = scmp.ne.s32.totalorder %s354, %s356
      %p363 = scmp.eq.s32.totalorder %s47, 1
      %p364 = por %p362, %p363
      %p365 = scmp.ne.s32.totalorder %s356, %s357
      %p366 = scmp.eq.s32.totalorder %s47, 0
      %p367 = por %p365, %p366
      %p368 = scmp.ne.s32.totalorder %s356, %s357
      %p369 = scmp.eq.s32.totalorder %s48, 1
      %p370 = por %p368, %p369
      %p372 = scmp.ne.s32.totalorder %s357, %s371
      %p373 = scmp.eq.s32.totalorder %s48, 0
      %p374 = por %p372, %p373
      %s376 = sadd.s32 %s375, 1
      %p379 = scmp.eq.s32.totalorder %s42, 1
      %p380 = scmp.ne.s32.totalorder %s375, %s377
      %p381 = scmp.eq.s32.totalorder %s42, 0
      %p382 = por %p380, %p381
      %p383 = scmp.ne.s32.totalorder %s375, %s377
      %p384 = scmp.eq.s32.totalorder %s47, 1
      %p385 = por %p383, %p384
      %p386 = scmp.ne.s32.totalorder %s377, %s378
      %p387 = scmp.eq.s32.totalorder %s47, 0
      %p388 = por %p386, %p387
      %p389 = scmp.ne.s32.totalorder %s377, %s378
      %p390 = scmp.eq.s32.totalorder %s48, 1
      %p391 = por %p389, %p390
      %p393 = scmp.ne.s32.totalorder %s378, %s392
      %p394 = scmp.eq.s32.totalorder %s48, 0
      %p395 = por %p393, %p394
      %s397 = sadd.s32 %s396, 1
      %p400 = scmp.eq.s32.totalorder %s42, 1
      %p401 = scmp.ne.s32.totalorder %s396, %s398
      %p402 = scmp.eq.s32.totalorder %s42, 0
      %p403 = por %p401, %p402
      %p404 = scmp.ne.s32.totalorder %s396, %s398
      %p405 = scmp.eq.s32.totalorder %s47, 1
      %p406 = por %p404, %p405
      %p407 = scmp.ne.s32.totalorder %s398, %s399
      %p408 = scmp.eq.s32.totalorder %s47, 0
      %p409 = por %p407, %p408
      %p410 = scmp.ne.s32.totalorder %s398, %s399
      %p411 = scmp.eq.s32.totalorder %s48, 1
      %p412 = por %p410, %p411
      %p414 = scmp.ne.s32.totalorder %s399, %s413
      %p415 = scmp.eq.s32.totalorder %s48, 0
      %p416 = por %p414, %p415
      %s418 = sadd.s32 %s417, 1
      %p421 = scmp.eq.s32.totalorder %s42, 1
      %p422 = scmp.ne.s32.totalorder %s417, %s419
      %p423 = scmp.eq.s32.totalorder %s42, 0
      %p424 = por %p422, %p423
      %p425 = scmp.ne.s32.totalorder %s417, %s419
      %p426 = scmp.eq.s32.totalorder %s47, 1
      %p427 = por %p425, %p426
      %p428 = scmp.ne.s32.totalorder %s419, %s420
      %p429 = scmp.eq.s32.totalorder %s47, 0
      %p430 = por %p428, %p429
      %p431 = scmp.ne.s32.totalorder %s419, %s420
      %p432 = scmp.eq.s32.totalorder %s48, 1
      %p433 = por %p431, %p432
      %p435 = scmp.ne.s32.totalorder %s420, %s434
      %p436 = scmp.eq.s32.totalorder %s48, 0
      %p437 = por %p435, %p436
      %s438 = ssub.s32 %s42, %s49
      %p439 = scmp.eq.s32.totalorder %s438, 0
      %s441 = sadd.s32 %s440, 1
      %s442 = scalar_select %p439, %s440, %s441
      %p445 = pneg %p439
      %p446 = scmp.eq.s32.totalorder %s42, 1
      %p447 = por %p445, %p446
      %p448 = scmp.ne.s32.totalorder %s440, %s443
      %p449 = scmp.eq.s32.totalorder %s42, 0
      %p450 = por %p448, %p449
      %p451 = scmp.ne.s32.totalorder %s440, %s443
      %p452 = scmp.eq.s32.totalorder %s47, 1
      %p453 = por %p451, %p452
      %p454 = scmp.ne.s32.totalorder %s443, %s444
      %p455 = scmp.eq.s32.totalorder %s47, 0
      %p456 = por %p454, %p455
      %p457 = scmp.ne.s32.totalorder %s443, %s444
      %p458 = scmp.eq.s32.totalorder %s48, 1
      %p459 = por %p457, %p458
      %p461 = scmp.ne.s32.totalorder %s444, %s460
      %p462 = scmp.eq.s32.totalorder %s48, 0
      %p463 = por %p461, %p462
      %p464 = scmp.le.s32.totalorder 1, %s42
      %p465 = scmp.lt.s32.totalorder %s42, 3
      %p466 = pnand %p464, %p465
      %p467 = pneg %p466
      // Predicated region
      $region9: #{tpu_custom_call.1} parent=5 // pred_check
        _
      $region10: #{tpu_custom_call.1} parent=5 // pred_check_branch
        %469 = sbr.rel (%p466) target = $region12
      $region11: #{tpu_custom_call.1} parent=5 // pred_region
        %s470 = ssub.s32 %s42, 1
        // Predicated region
        $region13: #{tpu_custom_call.1} parent=11 // pred_check
          %p471 = pneg %p115
        $region14: #{tpu_custom_call.1} parent=11 // pred_check_branch
          %473 = sbr.rel (%p471) target = $region16
        $region15: #{tpu_custom_call.1} parent=11 // pred_region
          %s475 = ssub.s32 2048, 2048
          %476 = vsyncadd [#allocation8], %s475
          %s477 = sshll.u32 [#allocation9], 4
          %s478 = int_to_ptr.vmem [resolvable:$true] %s477
          %483 = dma.hbm_to_vmem [thread:$0]  %s3, 2048, %s478, [#allocation8], 128, 128, 8
        $region16: #{tpu_custom_call.1} parent=11 // pred_fallthru
          _
        // Predicated region
        $region17: #{tpu_custom_call.1} parent=11 // pred_check
          %p484 = pneg %p136
        $region18: #{tpu_custom_call.1} parent=11 // pred_check_branch
          %486 = sbr.rel (%p484) target = $region20
        $region19: #{tpu_custom_call.1} parent=11 // pred_region
          _
        $region20: #{tpu_custom_call.1} parent=11 // pred_fallthru
          _
        // Predicated region
        $region21: #{tpu_custom_call.1} parent=11 // pred_check
          %p487 = pneg %p157
        $region22: #{tpu_custom_call.1} parent=11 // pred_check_branch
          %489 = sbr.rel (%p487) target = $region24
        $region23: #{tpu_custom_call.1} parent=11 // pred_region
          %s491 = ssub.s32 2048, 2048
          %492 = vsyncadd [#allocation11], %s491
          %s493 = sshll.u32 [#allocation10], 4
          %s494 = int_to_ptr.vmem [resolvable:$true] %s493
          %499 = dma.hbm_to_vmem [thread:$0]  %s5, 2048, %s494, [#allocation11], 128, 128, 8
        $region24: #{tpu_custom_call.1} parent=11 // pred_fallthru
          _
        // Predicated region
        $region25: #{tpu_custom_call.1} parent=11 // pred_check
          %p500 = pneg %p178
        $region26: #{tpu_custom_call.1} parent=11 // pred_check_branch
          %502 = sbr.rel (%p500) target = $region28
        $region27: #{tpu_custom_call.1} parent=11 // pred_region
          _
        $region28: #{tpu_custom_call.1} parent=11 // pred_fallthru
          _
        // Predicated region
        $region29: #{tpu_custom_call.1} parent=11 // pred_check
          %p503 = pneg %p199
        $region30: #{tpu_custom_call.1} parent=11 // pred_check_branch
          %505 = sbr.rel (%p503) target = $region32
        $region31: #{tpu_custom_call.1} parent=11 // pred_region
          %s507 = ssub.s32 2048, 2048
          %508 = vsyncadd [#allocation11], %s507
          %s509 = sshll.u32 [#allocation12], 4
          %s510 = int_to_ptr.vmem [resolvable:$true] %s509
          %515 = dma.hbm_to_vmem [thread:$0]  %s7, 2048, %s510, [#allocation11], 128, 128, 8
        $region32: #{tpu_custom_call.1} parent=11 // pred_fallthru
          _
        // Predicated region
        $region33: #{tpu_custom_call.1} parent=11 // pred_check
          %p516 = pneg %p220
        $region34: #{tpu_custom_call.1} parent=11 // pred_check_branch
          %518 = sbr.rel (%p516) target = $region36
        $region35: #{tpu_custom_call.1} parent=11 // pred_region
          %s520 = ssub.s32 2048, 2048
          %521 = vsyncadd [#allocation14], %s520
          %s522 = sshll.u32 [#allocation13], 4
          %s523 = int_to_ptr.vmem [resolvable:$true] %s522
          %528 = dma.hbm_to_vmem [thread:$0]  %s8, 2048, %s523, [#allocation14], 128, 128, 8
        $region36: #{tpu_custom_call.1} parent=11 // pred_fallthru
          _
        // Predicated region
        $region37: #{tpu_custom_call.1} parent=11 // pred_check
          %p529 = pneg %p241
        $region38: #{tpu_custom_call.1} parent=11 // pred_check_branch
          %531 = sbr.rel (%p529) target = $region40
        $region39: #{tpu_custom_call.1} parent=11 // pred_region
          _
        $region40: #{tpu_custom_call.1} parent=11 // pred_fallthru
          _
        // Predicated region
        $region41: #{tpu_custom_call.1} parent=11 // pred_check
          %p532 = pneg %p262
        $region42: #{tpu_custom_call.1} parent=11 // pred_check_branch
          %534 = sbr.rel (%p532) target = $region44
        $region43: #{tpu_custom_call.1} parent=11 // pred_region
          %s536 = ssub.s32 2048, 2048
          %537 = vsyncadd [#allocation14], %s536
          %s538 = sshll.u32 [#allocation15], 4
          %s539 = int_to_ptr.vmem [resolvable:$true] %s538
          %544 = dma.hbm_to_vmem [thread:$0]  %s10, 2048, %s539, [#allocation14], 128, 128, 8
        $region44: #{tpu_custom_call.1} parent=11 // pred_fallthru
          _
        // Predicated region
        $region45: #{tpu_custom_call.1} parent=11 // pred_check
          %p545 = pneg %p283
        $region46: #{tpu_custom_call.1} parent=11 // pred_check_branch
          %547 = sbr.rel (%p545) target = $region48
        $region47: #{tpu_custom_call.1} parent=11 // pred_region
          _
        $region48: #{tpu_custom_call.1} parent=11 // pred_fallthru
          _
        // Predicated region
        $region49: #{tpu_custom_call.1} parent=11 // pred_check
          %p548 = pneg %p304
        $region50: #{tpu_custom_call.1} parent=11 // pred_check_branch
          %550 = sbr.rel (%p548) target = $region52
        $region51: #{tpu_custom_call.1} parent=11 // pred_region
          %s552 = ssub.s32 2048, 2048
          %553 = vsyncadd [#allocation17], %s552
          %s554 = sshll.u32 [#allocation16], 4
          %s555 = int_to_ptr.vmem [resolvable:$true] %s554
          %560 = dma.hbm_to_vmem [thread:$0]  %s12, 2048, %s555, [#allocation17], 128, 128, 8
        $region52: #{tpu_custom_call.1} parent=11 // pred_fallthru
          _
        // Predicated region
        $region53: #{tpu_custom_call.1} parent=11 // pred_check
          %p561 = pneg %p325
        $region54: #{tpu_custom_call.1} parent=11 // pred_check_branch
          %563 = sbr.rel (%p561) target = $region56
        $region55: #{tpu_custom_call.1} parent=11 // pred_region
          %s565 = ssub.s32 2048, 2048
          %566 = vsyncadd [#allocation17], %s565
          %s567 = sshll.u32 [#allocation18], 4
          %s568 = int_to_ptr.vmem [resolvable:$true] %s567
          %573 = dma.hbm_to_vmem [thread:$0]  %s13, 2048, %s568, [#allocation17], 128, 128, 8
        $region56: #{tpu_custom_call.1} parent=11 // pred_fallthru
          _
        // Predicated region
        $region57: #{tpu_custom_call.1} parent=11 // pred_check
          %p574 = pneg %p346
        $region58: #{tpu_custom_call.1} parent=11 // pred_check_branch
          %576 = sbr.rel (%p574) target = $region60
        $region59: #{tpu_custom_call.1} parent=11 // pred_region
          _
        $region60: #{tpu_custom_call.1} parent=11 // pred_fallthru
          _
        // Predicated region
        $region61: #{tpu_custom_call.1} parent=11 // pred_check
          %p577 = pneg %p367
        $region62: #{tpu_custom_call.1} parent=11 // pred_check_branch
          %579 = sbr.rel (%p577) target = $region64
        $region63: #{tpu_custom_call.1} parent=11 // pred_region
          %s581 = ssub.s32 2048, 2048
          %582 = vsyncadd [#allocation20], %s581
          %s583 = sshll.u32 [#allocation19], 4
          %s584 = int_to_ptr.vmem [resolvable:$true] %s583
          %589 = dma.hbm_to_vmem [thread:$0]  %s15, 2048, %s584, [#allocation20], 128, 128, 8
        $region64: #{tpu_custom_call.1} parent=11 // pred_fallthru
          _
        // Predicated region
        $region65: #{tpu_custom_call.1} parent=11 // pred_check
          %p590 = pneg %p388
        $region66: #{tpu_custom_call.1} parent=11 // pred_check_branch
          %592 = sbr.rel (%p590) target = $region68
        $region67: #{tpu_custom_call.1} parent=11 // pred_region
          _
        $region68: #{tpu_custom_call.1} parent=11 // pred_fallthru
          _
        // Predicated region
        $region69: #{tpu_custom_call.1} parent=11 // pred_check
          %p593 = pneg %p409
        $region70: #{tpu_custom_call.1} parent=11 // pred_check_branch
          %595 = sbr.rel (%p593) target = $region72
        $region71: #{tpu_custom_call.1} parent=11 // pred_region
          %s597 = ssub.s32 2048, 2048
          %598 = vsyncadd [#allocation20], %s597
          %s599 = sshll.u32 [#allocation21], 4
          %s600 = int_to_ptr.vmem [resolvable:$true] %s599
          %605 = dma.hbm_to_vmem [thread:$0]  %s17, 2048, %s600, [#allocation20], 128, 128, 8
        $region72: #{tpu_custom_call.1} parent=11 // pred_fallthru
          _
        // Predicated region
        $region73: #{tpu_custom_call.1} parent=11 // pred_check
          %p606 = pneg %p430
        $region74: #{tpu_custom_call.1} parent=11 // pred_check_branch
          %608 = sbr.rel (%p606) target = $region76
        $region75: #{tpu_custom_call.1} parent=11 // pred_region
          _
        $region76: #{tpu_custom_call.1} parent=11 // pred_fallthru
          _
      $region12: #{tpu_custom_call.1} parent=5 // pred_fallthru
        _
      %p609 = scmp.lt.s32.totalorder %s42, 2
      // Predicated region
      $region77: #{tpu_custom_call.1} parent=5 // pred_check
        %p610 = pneg %p609
      $region78: #{tpu_custom_call.1} parent=5 // pred_check_branch
        %612 = sbr.rel (%p610) target = $region80
      $region79: #{tpu_custom_call.1} parent=5 // pred_region
        // Predicated region
        $region81: #{tpu_custom_call.1} parent=79 // pred_check
          %p613 = pneg %p62
        $region82: #{tpu_custom_call.1} parent=79 // pred_check_branch
          %615 = sbr.rel (%p613) target = $region84
        $region83: #{tpu_custom_call.1} parent=79 // pred_region
          %s616 = sand.u32 %s52, 1
          %s617 = scalar_lea.sflag [#allocation5], %s616
          %s618 = sand.u32 %s52, 1
          %s619 = smul.addr %s618, 16
          %s620 = scalar_lea.vmem [#allocation4], %s619
          %s621 = smul.u32 2, %s42
          %s623 = ssub.s32 256, 256
          %624 = vsyncadd %s617, %s623
          %s625 = smul.addr %s621, 128
          %s626 = scalar_lea.hbm %s1, %s625
          %s627 = sshll.u32 %s620, 4
          %s628 = int_to_ptr.vmem [resolvable:$true] %s627
          %633 = dma.hbm_to_vmem [thread:$0]  %s626, 256, %s628, %s617, 128, 128, 8
        $region84: #{tpu_custom_call.1} parent=79 // pred_fallthru
          _
        // Predicated region
        $region85: #{tpu_custom_call.1} parent=79 // pred_check
          %p634 = pneg %p88
        $region86: #{tpu_custom_call.1} parent=79 // pred_check_branch
          %636 = sbr.rel (%p634) target = $region88
        $region87: #{tpu_custom_call.1} parent=79 // pred_region
          %s637 = sand.u32 %s42, 1
          %s638 = scalar_lea.sflag [#allocation8], %s637
          %s639 = sand.u32 %s78, 1
          %s640 = smul.addr %s639, 16
          %s641 = scalar_lea.vmem [#allocation7], %s640
          %s642 = smul.u32 2, %s42
          %s644 = ssub.s32 256, 256
          %645 = vsyncadd %s638, %s644
          %s646 = smul.addr %s642, 128
          %s647 = scalar_lea.hbm %s2, %s646
          %s648 = sshll.u32 %s641, 4
          %s649 = int_to_ptr.vmem [resolvable:$true] %s648
          %654 = dma.hbm_to_vmem [thread:$0]  %s647, 256, %s649, %s638, 128, 128, 8
        $region88: #{tpu_custom_call.1} parent=79 // pred_fallthru
          _
      $region80: #{tpu_custom_call.1} parent=5 // pred_fallthru
        _
      %p655 = scmp.le.s32.totalorder 1, %s42
      %p656 = scmp.lt.s32.totalorder %s42, 3
      %p657 = pnand %p655, %p656
      %p658 = pneg %p657
      // Predicated region
      $region89: #{tpu_custom_call.1} parent=5 // pred_check
        _
      $region90: #{tpu_custom_call.1} parent=5 // pred_check_branch
        %660 = sbr.rel (%p657) target = $region92
      $region91: #{tpu_custom_call.1} parent=5 // pred_region
        %s661 = ssub.s32 %s42, 1
        %s662 = sand.u32 %s55, 1
        %s663 = scalar_lea.sflag [#allocation5], %s662
        %s664 = sand.u32 %s55, 1
        %s665 = smul.addr %s664, 16
        %s666 = scalar_lea.vmem [#allocation4], %s665
        // Predicated region
        $region93: #{tpu_custom_call.1} parent=91 // pred_check
          %p667 = pneg %p68
        $region94: #{tpu_custom_call.1} parent=91 // pred_check_branch
          %669 = sbr.rel (%p667) target = $region96
        $region95: #{tpu_custom_call.1} parent=91 // pred_region
          %670 = dma.done %s663, 256
        $region96: #{tpu_custom_call.1} parent=91 // pred_fallthru
          _
        %s671 = sand.u32 %s47, 1
        %s672 = scalar_lea.sflag [#allocation8], %s671
        %s673 = sand.u32 %s81, 1
        %s674 = smul.addr %s673, 16
        %s675 = scalar_lea.vmem [#allocation7], %s674
        // Predicated region
        $region97: #{tpu_custom_call.1} parent=91 // pred_check
          %p676 = pneg %p94
        $region98: #{tpu_custom_call.1} parent=91 // pred_check_branch
          %678 = sbr.rel (%p676) target = $region100
        $region99: #{tpu_custom_call.1} parent=91 // pred_region
          %679 = dma.done %s672, 256
        $region100: #{tpu_custom_call.1} parent=91 // pred_fallthru
          _
        // Predicated region
        $region101: #{tpu_custom_call.1} parent=91 // pred_check
          %p680 = pneg %p115
        $region102: #{tpu_custom_call.1} parent=91 // pred_check_branch
          %682 = sbr.rel (%p680) target = $region104
        $region103: #{tpu_custom_call.1} parent=91 // pred_region
          %683 = dma.done [#allocation8], 2048
        $region104: #{tpu_custom_call.1} parent=91 // pred_fallthru
          _
        // Predicated region
        $region105: #{tpu_custom_call.1} parent=91 // pred_check
          %p684 = pneg %p157
        $region106: #{tpu_custom_call.1} parent=91 // pred_check_branch
          %686 = sbr.rel (%p684) target = $region108
        $region107: #{tpu_custom_call.1} parent=91 // pred_region
          %687 = dma.done [#allocation11], 2048
        $region108: #{tpu_custom_call.1} parent=91 // pred_fallthru
          _
        // Predicated region
        $region109: #{tpu_custom_call.1} parent=91 // pred_check
          %p688 = pneg %p199
        $region110: #{tpu_custom_call.1} parent=91 // pred_check_branch
          %690 = sbr.rel (%p688) target = $region112
        $region111: #{tpu_custom_call.1} parent=91 // pred_region
          %691 = dma.done [#allocation11], 2048
        $region112: #{tpu_custom_call.1} parent=91 // pred_fallthru
          _
        // Predicated region
        $region113: #{tpu_custom_call.1} parent=91 // pred_check
          %p692 = pneg %p220
        $region114: #{tpu_custom_call.1} parent=91 // pred_check_branch
          %694 = sbr.rel (%p692) target = $region116
        $region115: #{tpu_custom_call.1} parent=91 // pred_region
          %695 = dma.done [#allocation14], 2048
        $region116: #{tpu_custom_call.1} parent=91 // pred_fallthru
          _
        // Predicated region
        $region117: #{tpu_custom_call.1} parent=91 // pred_check
          %p696 = pneg %p262
        $region118: #{tpu_custom_call.1} parent=91 // pred_check_branch
          %698 = sbr.rel (%p696) target = $region120
        $region119: #{tpu_custom_call.1} parent=91 // pred_region
          %699 = dma.done [#allocation14], 2048
        $region120: #{tpu_custom_call.1} parent=91 // pred_fallthru
          _
        // Predicated region
        $region121: #{tpu_custom_call.1} parent=91 // pred_check
          %p700 = pneg %p304
        $region122: #{tpu_custom_call.1} parent=91 // pred_check_branch
          %702 = sbr.rel (%p700) target = $region124
        $region123: #{tpu_custom_call.1} parent=91 // pred_region
          %703 = dma.done [#allocation17], 2048
        $region124: #{tpu_custom_call.1} parent=91 // pred_fallthru
          _
        // Predicated region
        $region125: #{tpu_custom_call.1} parent=91 // pred_check
          %p704 = pneg %p325
        $region126: #{tpu_custom_call.1} parent=91 // pred_check_branch
          %706 = sbr.rel (%p704) target = $region128
        $region127: #{tpu_custom_call.1} parent=91 // pred_region
          %707 = dma.done [#allocation17], 2048
        $region128: #{tpu_custom_call.1} parent=91 // pred_fallthru
          _
        // Predicated region
        $region129: #{tpu_custom_call.1} parent=91 // pred_check
          %p708 = pneg %p367
        $region130: #{tpu_custom_call.1} parent=91 // pred_check_branch
          %710 = sbr.rel (%p708) target = $region132
        $region131: #{tpu_custom_call.1} parent=91 // pred_region
          %711 = dma.done [#allocation20], 2048
        $region132: #{tpu_custom_call.1} parent=91 // pred_fallthru
          _
        // Predicated region
        $region133: #{tpu_custom_call.1} parent=91 // pred_check
          %p712 = pneg %p409
        $region134: #{tpu_custom_call.1} parent=91 // pred_check_branch
          %714 = sbr.rel (%p712) target = $region136
        $region135: #{tpu_custom_call.1} parent=91 // pred_region
          %715 = dma.done [#allocation20], 2048
        $region136: #{tpu_custom_call.1} parent=91 // pred_fallthru
          _
        %s716 = sand.u32 %s55, 1
        %s717 = scalar_lea.sflag [#allocation5], %s716
        %s718 = sand.u32 %s55, 1
        %s719 = smul.addr %s718, 16
        %s720 = scalar_lea.vmem [#allocation4], %s719
        %p721 = pneg %p68
        %p722 = pneg %p65
        %s723 = sand.u32 %s47, 1
        %s724 = scalar_lea.sflag [#allocation8], %s723
        %s725 = sand.u32 %s81, 1
        %s726 = smul.addr %s725, 16
        %s727 = scalar_lea.vmem [#allocation7], %s726
        %p728 = pneg %p94
        %p729 = pneg %p91
        %p730 = pneg %p115
        %p731 = pneg %p112
        %p732 = pneg %p136
        %p733 = pneg %p133
        %p734 = pneg %p157
        %p735 = pneg %p154
        %p736 = pneg %p178
        %p737 = pneg %p175
        %p738 = pneg %p199
        %p739 = pneg %p196
        %p740 = pneg %p220
        %p741 = pneg %p217
        %p742 = pneg %p241
        %p743 = pneg %p238
        %p744 = pneg %p262
        %p745 = pneg %p259
        %p746 = pneg %p283
        %p747 = pneg %p280
        %p748 = pneg %p304
        %p749 = pneg %p301
        %p750 = pneg %p325
        %p751 = pneg %p322
        %p752 = pneg %p346
        %p753 = pneg %p343
        %p754 = pneg %p367
        %p755 = pneg %p364
        %p756 = pneg %p388
        %p757 = pneg %p385
        %p758 = pneg %p409
        %p759 = pneg %p406
        %p760 = pneg %p430
        %p761 = pneg %p427
        %p762 = pneg %p456
        %p763 = pneg %p453
        %s764 = sand.u32 %s443, 1
        %s765 = scalar_lea.sflag [#allocation6], %s764
        %s766 = sand.u32 %s443, 1
        %s767 = smul.addr %s766, 2
        %s768 = scalar_lea.vmem [#allocation22], %s767
        %s769 = smul.u32 2, %s47
        %s770 = smul.u32 2, %s47
        %s771 = sld [smem:[#allocation3]]
        %s772 = sld [smem:[#allocation3 + $0x1]]
        %v773 = vld [vmem:[%s666] sm:$0xff]
        %v774 = vld [vmem:[%s666 + $0x8] sm:$0xff]
        %v775 = vld [vmem:[%s675] sm:$0xff]
        %v776 = vld [vmem:[%s675 + $0x8] sm:$0xff]
        %v777 = vld [vmem:[#allocation9] sm:$0xff]
        %v778 = vld [vmem:[#allocation9 + $0x8] sm:$0xff]
        %v779 = vld [vmem:[#allocation9 + $0x10] sm:$0xff]
        %v780 = vld [vmem:[#allocation9 + $0x18] sm:$0xff]
        %v781 = vld [vmem:[#allocation9 + $0x20] sm:$0xff]
        %v782 = vld [vmem:[#allocation9 + $0x28] sm:$0xff]
        %v783 = vld [vmem:[#allocation9 + $0x30] sm:$0xff]
        %v784 = vld [vmem:[#allocation9 + $0x38] sm:$0xff]
        %v785 = vld [vmem:[#allocation9 + $0x40] sm:$0xff]
        %v786 = vld [vmem:[#allocation9 + $0x48] sm:$0xff]
        %v787 = vld [vmem:[#allocation9 + $0x50] sm:$0xff]
        %v788 = vld [vmem:[#allocation9 + $0x58] sm:$0xff]
        %v789 = vld [vmem:[#allocation9 + $0x60] sm:$0xff]
        %v790 = vld [vmem:[#allocation9 + $0x68] sm:$0xff]
        %v791 = vld [vmem:[#allocation9 + $0x70] sm:$0xff]
        %v792 = vld [vmem:[#allocation9 + $0x78] sm:$0xff]
        %v793 = vld [vmem:[%s4] sm:$0x1]
        %v795 = vlaneseq
        %v796 = vshrl.u32 %v795, 7
        %v797 = vsub.s32 0, %v796
        %v798 = vrot.slane %v793, %v797
        %800 = vmatprep.subr.mxu0 0.0
        %801 = vmatpush1.msra.mxu0 %v777
        %802 = vmatprep.subr.mxu0 0.0
        %803 = vmatpush1.msra.mxu0 %v778
        %804 = vmatprep.subr.mxu0 0.0
        %805 = vmatpush1.msra.mxu0 %v779
        %806 = vmatprep.subr.mxu0 0.0
        %807 = vmatpush1.msra.mxu0 %v780
        %808 = vmatprep.subr.mxu0 0.0
        %809 = vmatpush1.msra.mxu0 %v781
        %810 = vmatprep.subr.mxu0 0.0
        %811 = vmatpush1.msra.mxu0 %v782
        %812 = vmatprep.subr.mxu0 0.0
        %813 = vmatpush1.msra.mxu0 %v783
        %814 = vmatprep.subr.mxu0 0.0
        %815 = vmatpush1.msra.mxu0 %v784
        %816 = vmatprep.subr.mxu0 0.0
        %817 = vmatpush1.msra.mxu0 %v785
        %818 = vmatprep.subr.mxu0 0.0
        %819 = vmatpush1.msra.mxu0 %v786
        %820 = vmatprep.subr.mxu0 0.0
        %821 = vmatpush1.msra.mxu0 %v787
        %822 = vmatprep.subr.mxu0 0.0
        %823 = vmatpush1.msra.mxu0 %v788
        %824 = vmatprep.subr.mxu0 0.0
        %825 = vmatpush1.msra.mxu0 %v789
        %826 = vmatprep.subr.mxu0 0.0
        %827 = vmatpush1.msra.mxu0 %v790
        %828 = vmatprep.subr.mxu0 0.0
        %829 = vmatpush1.msra.mxu0 %v791
        %830 = vmatprep.subr.mxu0 0.0
        %831 = vmatpush1.msra.mxu0 %v792
        %832 = vmatprep.subr.mxu0 0.0
        %833 = vmatpush1.msra.mxu0 0.0
        %834 = vmatprep.subr.mxu0 0.0
        %835 = vmatpush1.msra.mxu0 0.0
        %836 = vmatprep.subr.mxu0 0.0
        %837 = vmatpush1.msra.mxu0 0.0
        %838 = vmatprep.subr.mxu0 0.0
        %839 = vmatpush1.msra.mxu0 0.0
        %840 = vmatprep.subr.mxu0 0.0
        %841 = vmatpush1.msra.mxu0 0.0
        %842 = vmatprep.subr.mxu0 0.0
        %843 = vmatpush1.msra.mxu0 0.0
        %844 = vmatprep.subr.mxu0 0.0
        %845 = vmatpush1.msra.mxu0 0.0
        %846 = vmatprep.subr.mxu0 0.0
        %847 = vmatpush1.msra.mxu0 0.0
        %848 = vmatprep.subr.mxu0 0.0
        %849 = vmatpush1.msra.mxu0 0.0
        %850 = vmatprep.subr.mxu0 0.0
        %851 = vmatpush1.msra.mxu0 0.0
        %852 = vmatprep.subr.mxu0 0.0
        %853 = vmatpush1.msra.mxu0 0.0
        %854 = vmatprep.subr.mxu0 0.0
        %855 = vmatpush1.msra.mxu0 0.0
        %856 = vmatprep.subr.mxu0 0.0
        %857 = vmatpush1.msra.mxu0 0.0
        %858 = vmatprep.subr.mxu0 0.0
        %859 = vmatpush1.msra.mxu0 0.0
        %860 = vmatprep.subr.mxu0 0.0
        %861 = vmatpush1.msra.mxu0 0.0
        %862 = vmatprep.subr.mxu0 0.0
        %863 = vmatpush1.msra.mxu0 0.0
        %864 = vmatprep.mubr.f32.mxu0 0.0
        %865 = vmatmul.mubr.f32.gmra.mrb[0].mxu0 %v773
        %v866 = vpop.f32.mrb[0].mxu0
        %v867 = vadd.f32 %v798, %v866
        %v868 = vpop.f32.mrb[0].mxu0
        %869 = vmatprep.mubr.f32.mxu0 0.0
        %870 = vmatmul.mubr.f32.gmra.mrb[0].mxu0 %v774
        %v871 = vpop.f32.mrb[0].mxu0
        %v872 = vadd.f32 %v798, %v871
        %v873 = vpop.f32.mrb[0].mxu0
        %874 = vdwg.mxu0
        %v875 = vmax.f32 %v867, 0.0
        %v876 = vmax.f32 %v872, 0.0
        %v877 = vld [vmem:[#allocation10] sm:$0xff]
        %v878 = vld [vmem:[#allocation10 + $0x8] sm:$0xff]
        %v879 = vld [vmem:[#allocation10 + $0x10] sm:$0xff]
        %v880 = vld [vmem:[#allocation10 + $0x18] sm:$0xff]
        %v881 = vld [vmem:[#allocation10 + $0x20] sm:$0xff]
        %v882 = vld [vmem:[#allocation10 + $0x28] sm:$0xff]
        %v883 = vld [vmem:[#allocation10 + $0x30] sm:$0xff]
        %v884 = vld [vmem:[#allocation10 + $0x38] sm:$0xff]
        %v885 = vld [vmem:[#allocation10 + $0x40] sm:$0xff]
        %v886 = vld [vmem:[#allocation10 + $0x48] sm:$0xff]
        %v887 = vld [vmem:[#allocation10 + $0x50] sm:$0xff]
        %v888 = vld [vmem:[#allocation10 + $0x58] sm:$0xff]
        %v889 = vld [vmem:[#allocation10 + $0x60] sm:$0xff]
        %v890 = vld [vmem:[#allocation10 + $0x68] sm:$0xff]
        %v891 = vld [vmem:[#allocation10 + $0x70] sm:$0xff]
        %v892 = vld [vmem:[#allocation10 + $0x78] sm:$0xff]
        %v893 = vld [vmem:[%s6] sm:$0x1]
        %v895 = vlaneseq
        %v896 = vshrl.u32 %v895, 7
        %v897 = vsub.s32 0, %v896
        %v898 = vrot.slane %v893, %v897
        %900 = vmatprep.subr.mxu0 0.0
        %901 = vmatpush1.msra.mxu0 %v877
        %902 = vmatprep.subr.mxu0 0.0
        %903 = vmatpush1.msra.mxu0 %v878
        %904 = vmatprep.subr.mxu0 0.0
        %905 = vmatpush1.msra.mxu0 %v879
        %906 = vmatprep.subr.mxu0 0.0
        %907 = vmatpush1.msra.mxu0 %v880
        %908 = vmatprep.subr.mxu0 0.0
        %909 = vmatpush1.msra.mxu0 %v881
        %910 = vmatprep.subr.mxu0 0.0
        %911 = vmatpush1.msra.mxu0 %v882
        %912 = vmatprep.subr.mxu0 0.0
        %913 = vmatpush1.msra.mxu0 %v883
        %914 = vmatprep.subr.mxu0 0.0
        %915 = vmatpush1.msra.mxu0 %v884
        %916 = vmatprep.subr.mxu0 0.0
        %917 = vmatpush1.msra.mxu0 %v885
        %918 = vmatprep.subr.mxu0 0.0
        %919 = vmatpush1.msra.mxu0 %v886
        %920 = vmatprep.subr.mxu0 0.0
        %921 = vmatpush1.msra.mxu0 %v887
        %922 = vmatprep.subr.mxu0 0.0
        %923 = vmatpush1.msra.mxu0 %v888
        %924 = vmatprep.subr.mxu0 0.0
        %925 = vmatpush1.msra.mxu0 %v889
        %926 = vmatprep.subr.mxu0 0.0
        %927 = vmatpush1.msra.mxu0 %v890
        %928 = vmatprep.subr.mxu0 0.0
        %929 = vmatpush1.msra.mxu0 %v891
        %930 = vmatprep.subr.mxu0 0.0
        %931 = vmatpush1.msra.mxu0 %v892
        %932 = vmatprep.subr.mxu0 0.0
        %933 = vmatpush1.msra.mxu0 0.0
        %934 = vmatprep.subr.mxu0 0.0
        %935 = vmatpush1.msra.mxu0 0.0
        %936 = vmatprep.subr.mxu0 0.0
        %937 = vmatpush1.msra.mxu0 0.0
        %938 = vmatprep.subr.mxu0 0.0
        %939 = vmatpush1.msra.mxu0 0.0
        %940 = vmatprep.subr.mxu0 0.0
        %941 = vmatpush1.msra.mxu0 0.0
        %942 = vmatprep.subr.mxu0 0.0
        %943 = vmatpush1.msra.mxu0 0.0
        %944 = vmatprep.subr.mxu0 0.0
        %945 = vmatpush1.msra.mxu0 0.0
        %946 = vmatprep.subr.mxu0 0.0
        %947 = vmatpush1.msra.mxu0 0.0
        %948 = vmatprep.subr.mxu0 0.0
        %949 = vmatpush1.msra.mxu0 0.0
        %950 = vmatprep.subr.mxu0 0.0
        %951 = vmatpush1.msra.mxu0 0.0
        %952 = vmatprep.subr.mxu0 0.0
        %953 = vmatpush1.msra.mxu0 0.0
        %954 = vmatprep.subr.mxu0 0.0
        %955 = vmatpush1.msra.mxu0 0.0
        %956 = vmatprep.subr.mxu0 0.0
        %957 = vmatpush1.msra.mxu0 0.0
        %958 = vmatprep.subr.mxu0 0.0
        %959 = vmatpush1.msra.mxu0 0.0
        %960 = vmatprep.subr.mxu0 0.0
        %961 = vmatpush1.msra.mxu0 0.0
        %962 = vmatprep.subr.mxu0 0.0
        %963 = vmatpush1.msra.mxu0 0.0
        %964 = vmatprep.mubr.f32.mxu0 0.0
        %965 = vmatmul.mubr.f32.gmra.mrb[0].mxu0 %v875
        %v966 = vpop.f32.mrb[0].mxu0
        %v967 = vadd.f32 %v898, %v966
        %v968 = vpop.f32.mrb[0].mxu0
        %969 = vmatprep.mubr.f32.mxu0 0.0
        %970 = vmatmul.mubr.f32.gmra.mrb[0].mxu0 %v876
        %v971 = vpop.f32.mrb[0].mxu0
        %v972 = vadd.f32 %v898, %v971
        %v973 = vpop.f32.mrb[0].mxu0
        %974 = vdwg.mxu0
        %v975 = vmax.f32 %v967, 0.0
        %v976 = vmax.f32 %v972, 0.0
        %977 = vmatprep.subr.mxu0 0.0
        %978 = vmatpush1.msra.mxu0 %v777
        %979 = vmatprep.subr.mxu0 0.0
        %980 = vmatpush1.msra.mxu0 %v778
        %981 = vmatprep.subr.mxu0 0.0
        %982 = vmatpush1.msra.mxu0 %v779
        %983 = vmatprep.subr.mxu0 0.0
        %984 = vmatpush1.msra.mxu0 %v780
        %985 = vmatprep.subr.mxu0 0.0
        %986 = vmatpush1.msra.mxu0 %v781
        %987 = vmatprep.subr.mxu0 0.0
        %988 = vmatpush1.msra.mxu0 %v782
        %989 = vmatprep.subr.mxu0 0.0
        %990 = vmatpush1.msra.mxu0 %v783
        %991 = vmatprep.subr.mxu0 0.0
        %992 = vmatpush1.msra.mxu0 %v784
        %993 = vmatprep.subr.mxu0 0.0
        %994 = vmatpush1.msra.mxu0 %v785
        %995 = vmatprep.subr.mxu0 0.0
        %996 = vmatpush1.msra.mxu0 %v786
        %997 = vmatprep.subr.mxu0 0.0
        %998 = vmatpush1.msra.mxu0 %v787
        %999 = vmatprep.subr.mxu0 0.0
        %1000 = vmatpush1.msra.mxu0 %v788
        %1001 = vmatprep.subr.mxu0 0.0
        %1002 = vmatpush1.msra.mxu0 %v789
        %1003 = vmatprep.subr.mxu0 0.0
        %1004 = vmatpush1.msra.mxu0 %v790
        %1005 = vmatprep.subr.mxu0 0.0
        %1006 = vmatpush1.msra.mxu0 %v791
        %1007 = vmatprep.subr.mxu0 0.0
        %1008 = vmatpush1.msra.mxu0 %v792
        %1009 = vmatprep.subr.mxu0 0.0
        %1010 = vmatpush1.msra.mxu0 0.0
        %1011 = vmatprep.subr.mxu0 0.0
        %1012 = vmatpush1.msra.mxu0 0.0
        %1013 = vmatprep.subr.mxu0 0.0
        %1014 = vmatpush1.msra.mxu0 0.0
        %1015 = vmatprep.subr.mxu0 0.0
        %1016 = vmatpush1.msra.mxu0 0.0
        %1017 = vmatprep.subr.mxu0 0.0
        %1018 = vmatpush1.msra.mxu0 0.0
        %1019 = vmatprep.subr.mxu0 0.0
        %1020 = vmatpush1.msra.mxu0 0.0
        %1021 = vmatprep.subr.mxu0 0.0
        %1022 = vmatpush1.msra.mxu0 0.0
        %1023 = vmatprep.subr.mxu0 0.0
        %1024 = vmatpush1.msra.mxu0 0.0
        %1025 = vmatprep.subr.mxu0 0.0
        %1026 = vmatpush1.msra.mxu0 0.0
        %1027 = vmatprep.subr.mxu0 0.0
        %1028 = vmatpush1.msra.mxu0 0.0
        %1029 = vmatprep.subr.mxu0 0.0
        %1030 = vmatpush1.msra.mxu0 0.0
        %1031 = vmatprep.subr.mxu0 0.0
        %1032 = vmatpush1.msra.mxu0 0.0
        %1033 = vmatprep.subr.mxu0 0.0
        %1034 = vmatpush1.msra.mxu0 0.0
        %1035 = vmatprep.subr.mxu0 0.0
        %1036 = vmatpush1.msra.mxu0 0.0
        %1037 = vmatprep.subr.mxu0 0.0
        %1038 = vmatpush1.msra.mxu0 0.0
        %1039 = vmatprep.subr.mxu0 0.0
        %1040 = vmatpush1.msra.mxu0 0.0
        %1041 = vmatprep.mubr.f32.mxu0 0.0
        %1042 = vmatmul.mubr.f32.gmra.mrb[0].mxu0 %v775
        %v1043 = vpop.f32.mrb[0].mxu0
        %v1044 = vadd.f32 %v798, %v1043
        %v1045 = vpop.f32.mrb[0].mxu0
        %1046 = vmatprep.mubr.f32.mxu0 0.0
        %1047 = vmatmul.mubr.f32.gmra.mrb[0].mxu0 %v776
        %v1048 = vpop.f32.mrb[0].mxu0
        %v1049 = vadd.f32 %v798, %v1048
        %v1050 = vpop.f32.mrb[0].mxu0
        %1051 = vdwg.mxu0
        %v1052 = vmax.f32 %v1044, 0.0
        %v1053 = vmax.f32 %v1049, 0.0
        %1054 = vmatprep.subr.mxu0 0.0
        %1055 = vmatpush1.msra.mxu0 %v877
        %1056 = vmatprep.subr.mxu0 0.0
        %1057 = vmatpush1.msra.mxu0 %v878
        %1058 = vmatprep.subr.mxu0 0.0
        %1059 = vmatpush1.msra.mxu0 %v879
        %1060 = vmatprep.subr.mxu0 0.0
        %1061 = vmatpush1.msra.mxu0 %v880
        %1062 = vmatprep.subr.mxu0 0.0
        %1063 = vmatpush1.msra.mxu0 %v881
        %1064 = vmatprep.subr.mxu0 0.0
        %1065 = vmatpush1.msra.mxu0 %v882
        %1066 = vmatprep.subr.mxu0 0.0
        %1067 = vmatpush1.msra.mxu0 %v883
        %1068 = vmatprep.subr.mxu0 0.0
        %1069 = vmatpush1.msra.mxu0 %v884
        %1070 = vmatprep.subr.mxu0 0.0
        %1071 = vmatpush1.msra.mxu0 %v885
        %1072 = vmatprep.subr.mxu0 0.0
        %1073 = vmatpush1.msra.mxu0 %v886
        %1074 = vmatprep.subr.mxu0 0.0
        %1075 = vmatpush1.msra.mxu0 %v887
        %1076 = vmatprep.subr.mxu0 0.0
        %1077 = vmatpush1.msra.mxu0 %v888
        %1078 = vmatprep.subr.mxu0 0.0
        %1079 = vmatpush1.msra.mxu0 %v889
        %1080 = vmatprep.subr.mxu0 0.0
        %1081 = vmatpush1.msra.mxu0 %v890
        %1082 = vmatprep.subr.mxu0 0.0
        %1083 = vmatpush1.msra.mxu0 %v891
        %1084 = vmatprep.subr.mxu0 0.0
        %1085 = vmatpush1.msra.mxu0 %v892
        %1086 = vmatprep.subr.mxu0 0.0
        %1087 = vmatpush1.msra.mxu0 0.0
        %1088 = vmatprep.subr.mxu0 0.0
        %1089 = vmatpush1.msra.mxu0 0.0
        %1090 = vmatprep.subr.mxu0 0.0
        %1091 = vmatpush1.msra.mxu0 0.0
        %1092 = vmatprep.subr.mxu0 0.0
        %1093 = vmatpush1.msra.mxu0 0.0
        %1094 = vmatprep.subr.mxu0 0.0
        %1095 = vmatpush1.msra.mxu0 0.0
        %1096 = vmatprep.subr.mxu0 0.0
        %1097 = vmatpush1.msra.mxu0 0.0
        %1098 = vmatprep.subr.mxu0 0.0
        %1099 = vmatpush1.msra.mxu0 0.0
        %1100 = vmatprep.subr.mxu0 0.0
        %1101 = vmatpush1.msra.mxu0 0.0
        %1102 = vmatprep.subr.mxu0 0.0
        %1103 = vmatpush1.msra.mxu0 0.0
        %1104 = vmatprep.subr.mxu0 0.0
        %1105 = vmatpush1.msra.mxu0 0.0
        %1106 = vmatprep.subr.mxu0 0.0
        %1107 = vmatpush1.msra.mxu0 0.0
        %1108 = vmatprep.subr.mxu0 0.0
        %1109 = vmatpush1.msra.mxu0 0.0
        %1110 = vmatprep.subr.mxu0 0.0
        %1111 = vmatpush1.msra.mxu0 0.0
        %1112 = vmatprep.subr.mxu0 0.0
        %1113 = vmatpush1.msra.mxu0 0.0
        %1114 = vmatprep.subr.mxu0 0.0
        %1115 = vmatpush1.msra.mxu0 0.0
        %1116 = vmatprep.subr.mxu0 0.0
        %1117 = vmatpush1.msra.mxu0 0.0
        %1118 = vmatprep.mubr.f32.mxu0 0.0
        %1119 = vmatmul.mubr.f32.gmra.mrb[0].mxu0 %v1052
        %v1120 = vpop.f32.mrb[0].mxu0
        %v1121 = vadd.f32 %v898, %v1120
        %v1122 = vpop.f32.mrb[0].mxu0
        %1123 = vmatprep.mubr.f32.mxu0 0.0
        %1124 = vmatmul.mubr.f32.gmra.mrb[0].mxu0 %v1053
        %v1125 = vpop.f32.mrb[0].mxu0
        %v1126 = vadd.f32 %v898, %v1125
        %v1127 = vpop.f32.mrb[0].mxu0
        %1128 = vdwg.mxu0
        %v1129 = vmax.f32 %v1121, 0.0
        %v1130 = vmax.f32 %v1126, 0.0
        %1131 = vmatprep.subr.mxu0 0.0
        %1132 = vmatpush1.xpose.msra.mxu0 %v1129
        %1133 = vmatprep.subr.mxu0 0.0
        %1134 = vmatpush1.xpose.msra.mxu0 0.0
        %1135 = vmatprep.subr.mxu0 0.0
        %1136 = vmatpush1.xpose.msra.mxu0 0.0
        %1137 = vmatprep.subr.mxu0 0.0
        %1138 = vmatpush1.xpose.msra.mxu0 0.0
        %1139 = vmatprep.subr.mxu0 0.0
        %1140 = vmatpush1.xpose.msra.mxu0 0.0
        %1141 = vmatprep.subr.mxu0 0.0
        %1142 = vmatpush1.xpose.msra.mxu0 0.0
        %1143 = vmatprep.subr.mxu0 0.0
        %1144 = vmatpush1.xpose.msra.mxu0 0.0
        %1145 = vmatprep.subr.mxu0 0.0
        %1146 = vmatpush1.xpose.msra.mxu0 0.0
        %1147 = vmatprep.subr.mxu0 0.0
        %1148 = vmatpush1.xpose.msra.mxu0 0.0
        %1149 = vmatprep.subr.mxu0 0.0
        %1150 = vmatpush1.xpose.msra.mxu0 0.0
        %1151 = vmatprep.subr.mxu0 0.0
        %1152 = vmatpush1.xpose.msra.mxu0 0.0
        %1153 = vmatprep.subr.mxu0 0.0
        %1154 = vmatpush1.xpose.msra.mxu0 0.0
        %1155 = vmatprep.subr.mxu0 0.0
        %1156 = vmatpush1.xpose.msra.mxu0 0.0
        %1157 = vmatprep.subr.mxu0 0.0
        %1158 = vmatpush1.xpose.msra.mxu0 0.0
        %1159 = vmatprep.subr.mxu0 0.0
        %1160 = vmatpush1.xpose.msra.mxu0 0.0
        %1161 = vmatprep.subr.mxu0 0.0
        %1162 = vmatpush1.xpose.msra.mxu0 0.0
        %1163 = vmatprep.subr.mxu0 0.0
        %1164 = vmatpush1.xpose.msra.mxu0 0.0
        %1165 = vmatprep.subr.mxu0 0.0
        %1166 = vmatpush1.xpose.msra.mxu0 0.0
        %1167 = vmatprep.subr.mxu0 0.0
        %1168 = vmatpush1.xpose.msra.mxu0 0.0
        %1169 = vmatprep.subr.mxu0 0.0
        %1170 = vmatpush1.xpose.msra.mxu0 0.0
        %1171 = vmatprep.subr.mxu0 0.0
        %1172 = vmatpush1.xpose.msra.mxu0 0.0
        %1173 = vmatprep.subr.mxu0 0.0
        %1174 = vmatpush1.xpose.msra.mxu0 0.0
        %1175 = vmatprep.subr.mxu0 0.0
        %1176 = vmatpush1.xpose.msra.mxu0 0.0
        %1177 = vmatprep.subr.mxu0 0.0
        %1178 = vmatpush1.xpose.msra.mxu0 0.0
        %1179 = vmatprep.subr.mxu0 0.0
        %1180 = vmatpush1.xpose.msra.mxu0 0.0
        %1181 = vmatprep.subr.mxu0 0.0
        %1182 = vmatpush1.xpose.msra.mxu0 0.0
        %1183 = vmatprep.subr.mxu0 0.0
        %1184 = vmatpush1.xpose.msra.mxu0 0.0
        %1185 = vmatprep.subr.mxu0 0.0
        %1186 = vmatpush1.xpose.msra.mxu0 0.0
        %1187 = vmatprep.subr.mxu0 0.0
        %1188 = vmatpush1.xpose.msra.mxu0 0.0
        %1189 = vmatprep.subr.mxu0 0.0
        %1190 = vmatpush1.xpose.msra.mxu0 0.0
        %1191 = vmatprep.subr.mxu0 0.0
        %1192 = vmatpush1.xpose.msra.mxu0 0.0
        %1193 = vmatprep.subr.mxu0 0.0
        %1194 = vmatpush1.xpose.msra.mxu0 0.0
        %1195 = vmatprep.mubr.f32.mxu0 0.0
        %1196 = vmatmul.mubr.f32.gmra.mrb[0].mxu0 %v975
        %v1197 = vpop.f32.mrb[0].mxu0
        %v1198 = vadd.f32 0.0, %v1197
        %v1199 = vpop.f32.mrb[0].mxu0
        %1200 = vdwg.mxu0
        %1201 = vmatprep.subr.mxu0 0.0
        %1202 = vmatpush1.xpose.msra.mxu0 %v1130
        %1203 = vmatprep.subr.mxu0 0.0
        %1204 = vmatpush1.xpose.msra.mxu0 0.0
        %1205 = vmatprep.subr.mxu0 0.0
        %1206 = vmatpush1.xpose.msra.mxu0 0.0
        %1207 = vmatprep.subr.mxu0 0.0
        %1208 = vmatpush1.xpose.msra.mxu0 0.0
        %1209 = vmatprep.subr.mxu0 0.0
        %1210 = vmatpush1.xpose.msra.mxu0 0.0
        %1211 = vmatprep.subr.mxu0 0.0
        %1212 = vmatpush1.xpose.msra.mxu0 0.0
        %1213 = vmatprep.subr.mxu0 0.0
        %1214 = vmatpush1.xpose.msra.mxu0 0.0
        %1215 = vmatprep.subr.mxu0 0.0
        %1216 = vmatpush1.xpose.msra.mxu0 0.0
        %1217 = vmatprep.subr.mxu0 0.0
        %1218 = vmatpush1.xpose.msra.mxu0 0.0
        %1219 = vmatprep.subr.mxu0 0.0
        %1220 = vmatpush1.xpose.msra.mxu0 0.0
        %1221 = vmatprep.subr.mxu0 0.0
        %1222 = vmatpush1.xpose.msra.mxu0 0.0
        %1223 = vmatprep.subr.mxu0 0.0
        %1224 = vmatpush1.xpose.msra.mxu0 0.0
        %1225 = vmatprep.subr.mxu0 0.0
        %1226 = vmatpush1.xpose.msra.mxu0 0.0
        %1227 = vmatprep.subr.mxu0 0.0
        %1228 = vmatpush1.xpose.msra.mxu0 0.0
        %1229 = vmatprep.subr.mxu0 0.0
        %1230 = vmatpush1.xpose.msra.mxu0 0.0
        %1231 = vmatprep.subr.mxu0 0.0
        %1232 = vmatpush1.xpose.msra.mxu0 0.0
        %1233 = vmatprep.subr.mxu0 0.0
        %1234 = vmatpush1.xpose.msra.mxu0 0.0
        %1235 = vmatprep.subr.mxu0 0.0
        %1236 = vmatpush1.xpose.msra.mxu0 0.0
        %1237 = vmatprep.subr.mxu0 0.0
        %1238 = vmatpush1.xpose.msra.mxu0 0.0
        %1239 = vmatprep.subr.mxu0 0.0
        %1240 = vmatpush1.xpose.msra.mxu0 0.0
        %1241 = vmatprep.subr.mxu0 0.0
        %1242 = vmatpush1.xpose.msra.mxu0 0.0
        %1243 = vmatprep.subr.mxu0 0.0
        %1244 = vmatpush1.xpose.msra.mxu0 0.0
        %1245 = vmatprep.subr.mxu0 0.0
        %1246 = vmatpush1.xpose.msra.mxu0 0.0
        %1247 = vmatprep.subr.mxu0 0.0
        %1248 = vmatpush1.xpose.msra.mxu0 0.0
        %1249 = vmatprep.subr.mxu0 0.0
        %1250 = vmatpush1.xpose.msra.mxu0 0.0
        %1251 = vmatprep.subr.mxu0 0.0
        %1252 = vmatpush1.xpose.msra.mxu0 0.0
        %1253 = vmatprep.subr.mxu0 0.0
        %1254 = vmatpush1.xpose.msra.mxu0 0.0
        %1255 = vmatprep.subr.mxu0 0.0
        %1256 = vmatpush1.xpose.msra.mxu0 0.0
        %1257 = vmatprep.subr.mxu0 0.0
        %1258 = vmatpush1.xpose.msra.mxu0 0.0
        %1259 = vmatprep.subr.mxu0 0.0
        %1260 = vmatpush1.xpose.msra.mxu0 0.0
        %1261 = vmatprep.subr.mxu0 0.0
        %1262 = vmatpush1.xpose.msra.mxu0 0.0
        %1263 = vmatprep.subr.mxu0 0.0
        %1264 = vmatpush1.xpose.msra.mxu0 0.0
        %1265 = vmatprep.mubr.f32.mxu0 0.0
        %1266 = vmatmul.mubr.f32.gmra.mrb[0].mxu0 %v976
        %v1267 = vpop.f32.mrb[0].mxu0
        %v1268 = vadd.f32 0.0, %v1267
        %v1269 = vpop.f32.mrb[0].mxu0
        %1270 = vdwg.mxu0
        %v1271 = vlaneseq
        %v1272 = vand.u32 %v1271, 127
        %v1273 = vstv %s772
        %vm1274 = vcmp.lt.s32.totalorder %v1272, %v1273
        %v1275 = vlaneseq
        %v1276 = vshrl.u32 %v1275, 7
        %v1277 = vstv %s771
        %vm1278 = vcmp.lt.s32.totalorder %v1276, %v1277
        %v1279 = vsel %vm1274, %v1198, -1e+30
        %v1280 = vsel %vm1274, %v1268, -1e+30
        %vm1281 = vcmask 64512
        %v1282 = vsel %vm1281, %v1279, -inf
        %1283 = vmax.xlane.f32.xlu0 %v1282
        %v1284 = vpop.xlane.xlu0 %1283
        %v1285 = vsel %vm1281, %v1280, -inf
        %1286 = vmax.xlane.f32.xlu0 %v1285
        %v1287 = vpop.xlane.xlu0 %1286
        %v1288 = vsub.f32 %v1279, %v1284
        %v1289 = vsub.f32 %v1280, %v1287
        %v1290 = vmul.f32 %v1288, 1.442695
        %v1291 = vpow.pop %v1290
        %v1292 = vmul.f32 %v1289, 1.442695
        %v1293 = vpow.pop %v1292
        %v1294 = vsel %vm1281, %v1291, 0.0
        %1295 = vadd.xlane.f32.xlu0 %v1294
        %v1296 = vpop.xlane.xlu0 %1295
        %v1297 = vsel %vm1281, %v1293, 0.0
        %1298 = vadd.xlane.f32.xlu0 %v1297
        %v1299 = vpop.xlane.xlu0 %1298
        %v1300 = vrcp.pop %v1296
        %v1301 = vmul.f32 %v1291, %v1300
        %v1302 = vrcp.pop %v1299
        %v1303 = vmul.f32 %v1293, %v1302
        %v1304 = vsel %vm1278, %v1198, -1e+30
        %v1305 = vsel %vm1278, %v1268, -1e+30
        %v1306 = vsel %vm1281, %v1304, -inf
        %v1307 = vrot.slane %v1306, 4
        %v1308 = vmax.f32 %v1306, %v1307
        %v1309 = vrot.slane %v1308, 2
        %v1310 = vmax.f32 %v1308, %v1309
        %v1311 = vrot.slane %v1310, 1
        %v1312 = vmax.f32 %v1310, %v1311
        %v1313 = vsel %vm1281, %v1305, -inf
        %v1314 = vrot.slane %v1313, 4
        %v1315 = vmax.f32 %v1313, %v1314
        %v1316 = vrot.slane %v1315, 2
        %v1317 = vmax.f32 %v1315, %v1316
        %v1318 = vrot.slane %v1317, 1
        %v1319 = vmax.f32 %v1317, %v1318
        %v1320 = vsub.f32 %v1304, %v1312
        %v1321 = vsub.f32 %v1305, %v1319
        %v1322 = vmul.f32 %v1320, 1.442695
        %v1323 = vpow.pop %v1322
        %v1324 = vmul.f32 %v1321, 1.442695
        %v1325 = vpow.pop %v1324
        %v1326 = vsel %vm1281, %v1323, 0.0
        %v1327 = vrot.slane %v1326, 4
        %v1328 = vadd.f32 %v1326, %v1327
        %v1329 = vrot.slane %v1328, 2
        %v1330 = vadd.f32 %v1328, %v1329
        %v1331 = vrot.slane %v1330, 1
        %v1332 = vadd.f32 %v1330, %v1331
        %v1333 = vsel %vm1281, %v1325, 0.0
        %v1334 = vrot.slane %v1333, 4
        %v1335 = vadd.f32 %v1333, %v1334
        %v1336 = vrot.slane %v1335, 2
        %v1337 = vadd.f32 %v1335, %v1336
        %v1338 = vrot.slane %v1337, 1
        %v1339 = vadd.f32 %v1337, %v1338
        %v1340 = vrcp.pop %v1332
        %v1341 = vmul.f32 %v1323, %v1340
        %v1342 = vrcp.pop %v1339
        %v1343 = vmul.f32 %v1325, %v1342
        %v1345 = vsel %vm1281, %v1301, 0
        %1347 = vmatprep.subr.mxu0 0.0
        %1348 = vmatpush1.msra.mxu0 %v775
        %1349 = vmatprep.subr.mxu0 0.0
        %1350 = vmatpush1.msra.mxu0 0.0
        %1351 = vmatprep.subr.mxu0 0.0
        %1352 = vmatpush1.msra.mxu0 0.0
        %1353 = vmatprep.subr.mxu0 0.0
        %1354 = vmatpush1.msra.mxu0 0.0
        %1355 = vmatprep.subr.mxu0 0.0
        %1356 = vmatpush1.msra.mxu0 0.0
        %1357 = vmatprep.subr.mxu0 0.0
        %1358 = vmatpush1.msra.mxu0 0.0
        %1359 = vmatprep.subr.mxu0 0.0
        %1360 = vmatpush1.msra.mxu0 0.0
        %1361 = vmatprep.subr.mxu0 0.0
        %1362 = vmatpush1.msra.mxu0 0.0
        %1363 = vmatprep.subr.mxu0 0.0
        %1364 = vmatpush1.msra.mxu0 0.0
        %1365 = vmatprep.subr.mxu0 0.0
        %1366 = vmatpush1.msra.mxu0 0.0
        %1367 = vmatprep.subr.mxu0 0.0
        %1368 = vmatpush1.msra.mxu0 0.0
        %1369 = vmatprep.subr.mxu0 0.0
        %1370 = vmatpush1.msra.mxu0 0.0
        %1371 = vmatprep.subr.mxu0 0.0
        %1372 = vmatpush1.msra.mxu0 0.0
        %1373 = vmatprep.subr.mxu0 0.0
        %1374 = vmatpush1.msra.mxu0 0.0
        %1375 = vmatprep.subr.mxu0 0.0
        %1376 = vmatpush1.msra.mxu0 0.0
        %1377 = vmatprep.subr.mxu0 0.0
        %1378 = vmatpush1.msra.mxu0 0.0
        %1379 = vmatprep.subr.mxu0 0.0
        %1380 = vmatpush1.msra.mxu0 0.0
        %1381 = vmatprep.subr.mxu0 0.0
        %1382 = vmatpush1.msra.mxu0 0.0
        %1383 = vmatprep.subr.mxu0 0.0
        %1384 = vmatpush1.msra.mxu0 0.0
        %1385 = vmatprep.subr.mxu0 0.0
        %1386 = vmatpush1.msra.mxu0 0.0
        %1387 = vmatprep.subr.mxu0 0.0
        %1388 = vmatpush1.msra.mxu0 0.0
        %1389 = vmatprep.subr.mxu0 0.0
        %1390 = vmatpush1.msra.mxu0 0.0
        %1391 = vmatprep.subr.mxu0 0.0
        %1392 = vmatpush1.msra.mxu0 0.0
        %1393 = vmatprep.subr.mxu0 0.0
        %1394 = vmatpush1.msra.mxu0 0.0
        %1395 = vmatprep.subr.mxu0 0.0
        %1396 = vmatpush1.msra.mxu0 0.0
        %1397 = vmatprep.subr.mxu0 0.0
        %1398 = vmatpush1.msra.mxu0 0.0
        %1399 = vmatprep.subr.mxu0 0.0
        %1400 = vmatpush1.msra.mxu0 0.0
        %1401 = vmatprep.subr.mxu0 0.0
        %1402 = vmatpush1.msra.mxu0 0.0
        %1403 = vmatprep.subr.mxu0 0.0
        %1404 = vmatpush1.msra.mxu0 0.0
        %1405 = vmatprep.subr.mxu0 0.0
        %1406 = vmatpush1.msra.mxu0 0.0
        %1407 = vmatprep.subr.mxu0 0.0
        %1408 = vmatpush1.msra.mxu0 0.0
        %1409 = vmatprep.subr.mxu0 0.0
        %1410 = vmatpush1.msra.mxu0 0.0
        %1411 = vmatprep.mubr.f32.mxu0 0.0
        %1412 = vmatmul.mubr.f32.gmra.mrb[0].mxu0 %v1345
        %v1413 = vpop.f32.mrb[0].mxu0
        %v1414 = vadd.f32 0.0, %v1413
        %v1415 = vpop.f32.mrb[0].mxu0
        %1416 = vdwg.mxu0
        %v1418 = vsel %vm1281, %v1303, 0
        %1420 = vmatprep.subr.mxu0 0.0
        %1421 = vmatpush1.msra.mxu0 %v776
        %1422 = vmatprep.subr.mxu0 0.0
        %1423 = vmatpush1.msra.mxu0 0.0
        %1424 = vmatprep.subr.mxu0 0.0
        %1425 = vmatpush1.msra.mxu0 0.0
        %1426 = vmatprep.subr.mxu0 0.0
        %1427 = vmatpush1.msra.mxu0 0.0
        %1428 = vmatprep.subr.mxu0 0.0
        %1429 = vmatpush1.msra.mxu0 0.0
        %1430 = vmatprep.subr.mxu0 0.0
        %1431 = vmatpush1.msra.mxu0 0.0
        %1432 = vmatprep.subr.mxu0 0.0
        %1433 = vmatpush1.msra.mxu0 0.0
        %1434 = vmatprep.subr.mxu0 0.0
        %1435 = vmatpush1.msra.mxu0 0.0
        %1436 = vmatprep.subr.mxu0 0.0
        %1437 = vmatpush1.msra.mxu0 0.0
        %1438 = vmatprep.subr.mxu0 0.0
        %1439 = vmatpush1.msra.mxu0 0.0
        %1440 = vmatprep.subr.mxu0 0.0
        %1441 = vmatpush1.msra.mxu0 0.0
        %1442 = vmatprep.subr.mxu0 0.0
        %1443 = vmatpush1.msra.mxu0 0.0
        %1444 = vmatprep.subr.mxu0 0.0
        %1445 = vmatpush1.msra.mxu0 0.0
        %1446 = vmatprep.subr.mxu0 0.0
        %1447 = vmatpush1.msra.mxu0 0.0
        %1448 = vmatprep.subr.mxu0 0.0
        %1449 = vmatpush1.msra.mxu0 0.0
        %1450 = vmatprep.subr.mxu0 0.0
        %1451 = vmatpush1.msra.mxu0 0.0
        %1452 = vmatprep.subr.mxu0 0.0
        %1453 = vmatpush1.msra.mxu0 0.0
        %1454 = vmatprep.subr.mxu0 0.0
        %1455 = vmatpush1.msra.mxu0 0.0
        %1456 = vmatprep.subr.mxu0 0.0
        %1457 = vmatpush1.msra.mxu0 0.0
        %1458 = vmatprep.subr.mxu0 0.0
        %1459 = vmatpush1.msra.mxu0 0.0
        %1460 = vmatprep.subr.mxu0 0.0
        %1461 = vmatpush1.msra.mxu0 0.0
        %1462 = vmatprep.subr.mxu0 0.0
        %1463 = vmatpush1.msra.mxu0 0.0
        %1464 = vmatprep.subr.mxu0 0.0
        %1465 = vmatpush1.msra.mxu0 0.0
        %1466 = vmatprep.subr.mxu0 0.0
        %1467 = vmatpush1.msra.mxu0 0.0
        %1468 = vmatprep.subr.mxu0 0.0
        %1469 = vmatpush1.msra.mxu0 0.0
        %1470 = vmatprep.subr.mxu0 0.0
        %1471 = vmatpush1.msra.mxu0 0.0
        %1472 = vmatprep.subr.mxu0 0.0
        %1473 = vmatpush1.msra.mxu0 0.0
        %1474 = vmatprep.subr.mxu0 0.0
        %1475 = vmatpush1.msra.mxu0 0.0
        %1476 = vmatprep.subr.mxu0 0.0
        %1477 = vmatpush1.msra.mxu0 0.0
        %1478 = vmatprep.subr.mxu0 0.0
        %1479 = vmatpush1.msra.mxu0 0.0
        %1480 = vmatprep.subr.mxu0 0.0
        %1481 = vmatpush1.msra.mxu0 0.0
        %1482 = vmatprep.subr.mxu0 0.0
        %1483 = vmatpush1.msra.mxu0 0.0
        %1484 = vmatprep.mubr.f32.mxu0 0.0
        %1485 = vmatmul.mubr.f32.gmra.mrb[0].mxu0 %v1418
        %v1486 = vpop.f32.mrb[0].mxu0
        %v1487 = vadd.f32 0.0, %v1486
        %v1488 = vpop.f32.mrb[0].mxu0
        %1489 = vdwg.mxu0
        %1490 = vxpose.xlu0.b32.start [1/16] %v1341, 128
        %1491 = vxpose.xlu0.b32.cont [2/16] 0.0, 128
        %1492 = vxpose.xlu0.b32.cont [3/16] 0.0, 128
        %1493 = vxpose.xlu0.b32.cont [4/16] 0.0, 128
        %1494 = vxpose.xlu0.b32.cont [5/16] 0.0, 128
        %1495 = vxpose.xlu0.b32.cont [6/16] 0.0, 128
        %1496 = vxpose.xlu0.b32.cont [7/16] 0.0, 128
        %1497 = vxpose.xlu0.b32.cont [8/16] 0.0, 128
        %1498 = vxpose.xlu0.b32.cont [9/16] 0.0, 128
        %1499 = vxpose.xlu0.b32.cont [10/16] 0.0, 128
        %1500 = vxpose.xlu0.b32.cont [11/16] 0.0, 128
        %1501 = vxpose.xlu0.b32.cont [12/16] 0.0, 128
        %1502 = vxpose.xlu0.b32.cont [13/16] 0.0, 128
        %1503 = vxpose.xlu0.b32.cont [14/16] 0.0, 128
        %1504 = vxpose.xlu0.b32.cont [15/16] 0.0, 128
        %1505 = vxpose.xlu0.b32.end [16/16] 0.0, 128
        %v1506 = vpop.trf.xlu0
        %v1507 = vpop.trf.xlu0
        %v1508 = vpop.trf.xlu0
        %v1509 = vpop.trf.xlu0
        %v1510 = vpop.trf.xlu0
        %v1511 = vpop.trf.xlu0
        %v1512 = vpop.trf.xlu0
        %v1513 = vpop.trf.xlu0
        %v1514 = vpop.trf.xlu0
        %v1515 = vpop.trf.xlu0
        %v1516 = vpop.trf.xlu0
        %v1517 = vpop.trf.xlu0
        %v1518 = vpop.trf.xlu0
        %v1519 = vpop.trf.xlu0
        %v1520 = vpop.trf.xlu0
        %v1521 = vpop.trf.xlu0
        %v1523 = vsel %vm1281, %v1506, 0
        %1525 = vmatprep.subr.mxu0 0.0
        %1526 = vmatpush1.msra.mxu0 %v773
        %1527 = vmatprep.subr.mxu0 0.0
        %1528 = vmatpush1.msra.mxu0 0.0
        %1529 = vmatprep.subr.mxu0 0.0
        %1530 = vmatpush1.msra.mxu0 0.0
        %1531 = vmatprep.subr.mxu0 0.0
        %1532 = vmatpush1.msra.mxu0 0.0
        %1533 = vmatprep.subr.mxu0 0.0
        %1534 = vmatpush1.msra.mxu0 0.0
        %1535 = vmatprep.subr.mxu0 0.0
        %1536 = vmatpush1.msra.mxu0 0.0
        %1537 = vmatprep.subr.mxu0 0.0
        %1538 = vmatpush1.msra.mxu0 0.0
        %1539 = vmatprep.subr.mxu0 0.0
        %1540 = vmatpush1.msra.mxu0 0.0
        %1541 = vmatprep.subr.mxu0 0.0
        %1542 = vmatpush1.msra.mxu0 0.0
        %1543 = vmatprep.subr.mxu0 0.0
        %1544 = vmatpush1.msra.mxu0 0.0
        %1545 = vmatprep.subr.mxu0 0.0
        %1546 = vmatpush1.msra.mxu0 0.0
        %1547 = vmatprep.subr.mxu0 0.0
        %1548 = vmatpush1.msra.mxu0 0.0
        %1549 = vmatprep.subr.mxu0 0.0
        %1550 = vmatpush1.msra.mxu0 0.0
        %1551 = vmatprep.subr.mxu0 0.0
        %1552 = vmatpush1.msra.mxu0 0.0
        %1553 = vmatprep.subr.mxu0 0.0
        %1554 = vmatpush1.msra.mxu0 0.0
        %1555 = vmatprep.subr.mxu0 0.0
        %1556 = vmatpush1.msra.mxu0 0.0
        %1557 = vmatprep.subr.mxu0 0.0
        %1558 = vmatpush1.msra.mxu0 0.0
        %1559 = vmatprep.subr.mxu0 0.0
        %1560 = vmatpush1.msra.mxu0 0.0
        %1561 = vmatprep.subr.mxu0 0.0
        %1562 = vmatpush1.msra.mxu0 0.0
        %1563 = vmatprep.subr.mxu0 0.0
        %1564 = vmatpush1.msra.mxu0 0.0
        %1565 = vmatprep.subr.mxu0 0.0
        %1566 = vmatpush1.msra.mxu0 0.0
        %1567 = vmatprep.subr.mxu0 0.0
        %1568 = vmatpush1.msra.mxu0 0.0
        %1569 = vmatprep.subr.mxu0 0.0
        %1570 = vmatpush1.msra.mxu0 0.0
        %1571 = vmatprep.subr.mxu0 0.0
        %1572 = vmatpush1.msra.mxu0 0.0
        %1573 = vmatprep.subr.mxu0 0.0
        %1574 = vmatpush1.msra.mxu0 0.0
        %1575 = vmatprep.subr.mxu0 0.0
        %1576 = vmatpush1.msra.mxu0 0.0
        %1577 = vmatprep.subr.mxu0 0.0
        %1578 = vmatpush1.msra.mxu0 0.0
        %1579 = vmatprep.subr.mxu0 0.0
        %1580 = vmatpush1.msra.mxu0 0.0
        %1581 = vmatprep.subr.mxu0 0.0
        %1582 = vmatpush1.msra.mxu0 0.0
        %1583 = vmatprep.subr.mxu0 0.0
        %1584 = vmatpush1.msra.mxu0 0.0
        %1585 = vmatprep.subr.mxu0 0.0
        %1586 = vmatpush1.msra.mxu0 0.0
        %1587 = vmatprep.subr.mxu0 0.0
        %1588 = vmatpush1.msra.mxu0 0.0
        %1589 = vmatprep.mubr.f32.mxu0 0.0
        %1590 = vmatmul.mubr.f32.gmra.mrb[0].mxu0 %v1523
        %v1591 = vpop.f32.mrb[0].mxu0
        %v1592 = vadd.f32 0.0, %v1591
        %v1593 = vpop.f32.mrb[0].mxu0
        %1594 = vdwg.mxu0
        %1595 = vxpose.xlu0.b32.start [1/16] %v1343, 128
        %1596 = vxpose.xlu0.b32.cont [2/16] 0.0, 128
        %1597 = vxpose.xlu0.b32.cont [3/16] 0.0, 128
        %1598 = vxpose.xlu0.b32.cont [4/16] 0.0, 128
        %1599 = vxpose.xlu0.b32.cont [5/16] 0.0, 128
        %1600 = vxpose.xlu0.b32.cont [6/16] 0.0, 128
        %1601 = vxpose.xlu0.b32.cont [7/16] 0.0, 128
        %1602 = vxpose.xlu0.b32.cont [8/16] 0.0, 128
        %1603 = vxpose.xlu0.b32.cont [9/16] 0.0, 128
        %1604 = vxpose.xlu0.b32.cont [10/16] 0.0, 128
        %1605 = vxpose.xlu0.b32.cont [11/16] 0.0, 128
        %1606 = vxpose.xlu0.b32.cont [12/16] 0.0, 128
        %1607 = vxpose.xlu0.b32.cont [13/16] 0.0, 128
        %1608 = vxpose.xlu0.b32.cont [14/16] 0.0, 128
        %1609 = vxpose.xlu0.b32.cont [15/16] 0.0, 128
        %1610 = vxpose.xlu0.b32.end [16/16] 0.0, 128
        %v1611 = vpop.trf.xlu0
        %v1612 = vpop.trf.xlu0
        %v1613 = vpop.trf.xlu0
        %v1614 = vpop.trf.xlu0
        %v1615 = vpop.trf.xlu0
        %v1616 = vpop.trf.xlu0
        %v1617 = vpop.trf.xlu0
        %v1618 = vpop.trf.xlu0
        %v1619 = vpop.trf.xlu0
        %v1620 = vpop.trf.xlu0
        %v1621 = vpop.trf.xlu0
        %v1622 = vpop.trf.xlu0
        %v1623 = vpop.trf.xlu0
        %v1624 = vpop.trf.xlu0
        %v1625 = vpop.trf.xlu0
        %v1626 = vpop.trf.xlu0
        %v1628 = vsel %vm1281, %v1611, 0
        %1630 = vmatprep.subr.mxu0 0.0
        %1631 = vmatpush1.msra.mxu0 %v774
        %1632 = vmatprep.subr.mxu0 0.0
        %1633 = vmatpush1.msra.mxu0 0.0
        %1634 = vmatprep.subr.mxu0 0.0
        %1635 = vmatpush1.msra.mxu0 0.0
        %1636 = vmatprep.subr.mxu0 0.0
        %1637 = vmatpush1.msra.mxu0 0.0
        %1638 = vmatprep.subr.mxu0 0.0
        %1639 = vmatpush1.msra.mxu0 0.0
        %1640 = vmatprep.subr.mxu0 0.0
        %1641 = vmatpush1.msra.mxu0 0.0
        %1642 = vmatprep.subr.mxu0 0.0
        %1643 = vmatpush1.msra.mxu0 0.0
        %1644 = vmatprep.subr.mxu0 0.0
        %1645 = vmatpush1.msra.mxu0 0.0
        %1646 = vmatprep.subr.mxu0 0.0
        %1647 = vmatpush1.msra.mxu0 0.0
        %1648 = vmatprep.subr.mxu0 0.0
        %1649 = vmatpush1.msra.mxu0 0.0
        %1650 = vmatprep.subr.mxu0 0.0
        %1651 = vmatpush1.msra.mxu0 0.0
        %1652 = vmatprep.subr.mxu0 0.0
        %1653 = vmatpush1.msra.mxu0 0.0
        %1654 = vmatprep.subr.mxu0 0.0
        %1655 = vmatpush1.msra.mxu0 0.0
        %1656 = vmatprep.subr.mxu0 0.0
        %1657 = vmatpush1.msra.mxu0 0.0
        %1658 = vmatprep.subr.mxu0 0.0
        %1659 = vmatpush1.msra.mxu0 0.0
        %1660 = vmatprep.subr.mxu0 0.0
        %1661 = vmatpush1.msra.mxu0 0.0
        %1662 = vmatprep.subr.mxu0 0.0
        %1663 = vmatpush1.msra.mxu0 0.0
        %1664 = vmatprep.subr.mxu0 0.0
        %1665 = vmatpush1.msra.mxu0 0.0
        %1666 = vmatprep.subr.mxu0 0.0
        %1667 = vmatpush1.msra.mxu0 0.0
        %1668 = vmatprep.subr.mxu0 0.0
        %1669 = vmatpush1.msra.mxu0 0.0
        %1670 = vmatprep.subr.mxu0 0.0
        %1671 = vmatpush1.msra.mxu0 0.0
        %1672 = vmatprep.subr.mxu0 0.0
        %1673 = vmatpush1.msra.mxu0 0.0
        %1674 = vmatprep.subr.mxu0 0.0
        %1675 = vmatpush1.msra.mxu0 0.0
        %1676 = vmatprep.subr.mxu0 0.0
        %1677 = vmatpush1.msra.mxu0 0.0
        %1678 = vmatprep.subr.mxu0 0.0
        %1679 = vmatpush1.msra.mxu0 0.0
        %1680 = vmatprep.subr.mxu0 0.0
        %1681 = vmatpush1.msra.mxu0 0.0
        %1682 = vmatprep.subr.mxu0 0.0
        %1683 = vmatpush1.msra.mxu0 0.0
        %1684 = vmatprep.subr.mxu0 0.0
        %1685 = vmatpush1.msra.mxu0 0.0
        %1686 = vmatprep.subr.mxu0 0.0
        %1687 = vmatpush1.msra.mxu0 0.0
        %1688 = vmatprep.subr.mxu0 0.0
        %1689 = vmatpush1.msra.mxu0 0.0
        %1690 = vmatprep.subr.mxu0 0.0
        %1691 = vmatpush1.msra.mxu0 0.0
        %1692 = vmatprep.subr.mxu0 0.0
        %1693 = vmatpush1.msra.mxu0 0.0
        %1694 = vmatprep.mubr.f32.mxu0 0.0
        %1695 = vmatmul.mubr.f32.gmra.mrb[0].mxu0 %v1628
        %v1696 = vpop.f32.mrb[0].mxu0
        %v1697 = vadd.f32 0.0, %v1696
        %v1698 = vpop.f32.mrb[0].mxu0
        %1699 = vdwg.mxu0
        %v1700 = vld [vmem:[#allocation12] sm:$0xff]
        %v1701 = vld [vmem:[#allocation12 + $0x8] sm:$0xff]
        %v1702 = vld [vmem:[#allocation12 + $0x10] sm:$0xff]
        %v1703 = vld [vmem:[#allocation12 + $0x18] sm:$0xff]
        %v1704 = vld [vmem:[#allocation12 + $0x20] sm:$0xff]
        %v1705 = vld [vmem:[#allocation12 + $0x28] sm:$0xff]
        %v1706 = vld [vmem:[#allocation12 + $0x30] sm:$0xff]
        %v1707 = vld [vmem:[#allocation12 + $0x38] sm:$0xff]
        %v1708 = vld [vmem:[#allocation12 + $0x40] sm:$0xff]
        %v1709 = vld [vmem:[#allocation12 + $0x48] sm:$0xff]
        %v1710 = vld [vmem:[#allocation12 + $0x50] sm:$0xff]
        %v1711 = vld [vmem:[#allocation12 + $0x58] sm:$0xff]
        %v1712 = vld [vmem:[#allocation12 + $0x60] sm:$0xff]
        %v1713 = vld [vmem:[#allocation12 + $0x68] sm:$0xff]
        %v1714 = vld [vmem:[#allocation12 + $0x70] sm:$0xff]
        %v1715 = vld [vmem:[#allocation12 + $0x78] sm:$0xff]
        %v1716 = vld [vmem:[#allocation13] sm:$0xff]
        %v1717 = vld [vmem:[#allocation13 + $0x8] sm:$0xff]
        %v1718 = vld [vmem:[#allocation13 + $0x10] sm:$0xff]
        %v1719 = vld [vmem:[#allocation13 + $0x18] sm:$0xff]
        %v1720 = vld [vmem:[#allocation13 + $0x20] sm:$0xff]
        %v1721 = vld [vmem:[#allocation13 + $0x28] sm:$0xff]
        %v1722 = vld [vmem:[#allocation13 + $0x30] sm:$0xff]
        %v1723 = vld [vmem:[#allocation13 + $0x38] sm:$0xff]
        %v1724 = vld [vmem:[#allocation13 + $0x40] sm:$0xff]
        %v1725 = vld [vmem:[#allocation13 + $0x48] sm:$0xff]
        %v1726 = vld [vmem:[#allocation13 + $0x50] sm:$0xff]
        %v1727 = vld [vmem:[#allocation13 + $0x58] sm:$0xff]
        %v1728 = vld [vmem:[#allocation13 + $0x60] sm:$0xff]
        %v1729 = vld [vmem:[#allocation13 + $0x68] sm:$0xff]
        %v1730 = vld [vmem:[#allocation13 + $0x70] sm:$0xff]
        %v1731 = vld [vmem:[#allocation13 + $0x78] sm:$0xff]
        %1732 = vmatprep.subr.mxu0 0.0
        %1733 = vmatpush1.msra.mxu0 %v1716
        %1734 = vmatprep.subr.mxu0 0.0
        %1735 = vmatpush1.msra.mxu0 %v1717
        %1736 = vmatprep.subr.mxu0 0.0
        %1737 = vmatpush1.msra.mxu0 %v1718
        %1738 = vmatprep.subr.mxu0 0.0
        %1739 = vmatpush1.msra.mxu0 %v1719
        %1740 = vmatprep.subr.mxu0 0.0
        %1741 = vmatpush1.msra.mxu0 %v1720
        %1742 = vmatprep.subr.mxu0 0.0
        %1743 = vmatpush1.msra.mxu0 %v1721
        %1744 = vmatprep.subr.mxu0 0.0
        %1745 = vmatpush1.msra.mxu0 %v1722
        %1746 = vmatprep.subr.mxu0 0.0
        %1747 = vmatpush1.msra.mxu0 %v1723
        %1748 = vmatprep.subr.mxu0 0.0
        %1749 = vmatpush1.msra.mxu0 %v1724
        %1750 = vmatprep.subr.mxu0 0.0
        %1751 = vmatpush1.msra.mxu0 %v1725
        %1752 = vmatprep.subr.mxu0 0.0
        %1753 = vmatpush1.msra.mxu0 %v1726
        %1754 = vmatprep.subr.mxu0 0.0
        %1755 = vmatpush1.msra.mxu0 %v1727
        %1756 = vmatprep.subr.mxu0 0.0
        %1757 = vmatpush1.msra.mxu0 %v1728
        %1758 = vmatprep.subr.mxu0 0.0
        %1759 = vmatpush1.msra.mxu0 %v1729
        %1760 = vmatprep.subr.mxu0 0.0
        %1761 = vmatpush1.msra.mxu0 %v1730
        %1762 = vmatprep.subr.mxu0 0.0
        %1763 = vmatpush1.msra.mxu0 %v1731
        %1764 = vmatprep.subr.mxu0 0.0
        %1765 = vmatpush1.msra.mxu0 0.0
        %1766 = vmatprep.subr.mxu0 0.0
        %1767 = vmatpush1.msra.mxu0 0.0
        %1768 = vmatprep.subr.mxu0 0.0
        %1769 = vmatpush1.msra.mxu0 0.0
        %1770 = vmatprep.subr.mxu0 0.0
        %1771 = vmatpush1.msra.mxu0 0.0
        %1772 = vmatprep.subr.mxu0 0.0
        %1773 = vmatpush1.msra.mxu0 0.0
        %1774 = vmatprep.subr.mxu0 0.0
        %1775 = vmatpush1.msra.mxu0 0.0
        %1776 = vmatprep.subr.mxu0 0.0
        %1777 = vmatpush1.msra.mxu0 0.0
        %1778 = vmatprep.subr.mxu0 0.0
        %1779 = vmatpush1.msra.mxu0 0.0
        %1780 = vmatprep.subr.mxu0 0.0
        %1781 = vmatpush1.msra.mxu0 0.0
        %1782 = vmatprep.subr.mxu0 0.0
        %1783 = vmatpush1.msra.mxu0 0.0
        %1784 = vmatprep.subr.mxu0 0.0
        %1785 = vmatpush1.msra.mxu0 0.0
        %1786 = vmatprep.subr.mxu0 0.0
        %1787 = vmatpush1.msra.mxu0 0.0
        %1788 = vmatprep.subr.mxu0 0.0
        %1789 = vmatpush1.msra.mxu0 0.0
        %1790 = vmatprep.subr.mxu0 0.0
        %1791 = vmatpush1.msra.mxu0 0.0
        %1792 = vmatprep.subr.mxu0 0.0
        %1793 = vmatpush1.msra.mxu0 0.0
        %1794 = vmatprep.subr.mxu0 0.0
        %1795 = vmatpush1.msra.mxu0 0.0
        %1796 = vmatprep.mubr.f32.mxu0 0.0
        %1797 = vmatmul.mubr.f32.gmra.mrb[0].mxu0 %v1414
        %v1798 = vpop.f32.mrb[0].mxu0
        %v1799 = vadd.f32 0.0, %v1798
        %v1800 = vpop.f32.mrb[0].mxu0
        %1801 = vmatprep.mubr.f32.mxu0 0.0
        %1802 = vmatmul.mubr.f32.gmra.mrb[0].mxu0 %v1487
        %v1803 = vpop.f32.mrb[0].mxu0
        %v1804 = vadd.f32 0.0, %v1803
        %v1805 = vpop.f32.mrb[0].mxu0
        %1806 = vdwg.mxu0
        %1807 = vmatprep.subr.mxu0 0.0
        %1808 = vmatpush1.msra.mxu0 %v1700
        %1809 = vmatprep.subr.mxu0 0.0
        %1810 = vmatpush1.msra.mxu0 %v1701
        %1811 = vmatprep.subr.mxu0 0.0
        %1812 = vmatpush1.msra.mxu0 %v1702
        %1813 = vmatprep.subr.mxu0 0.0
        %1814 = vmatpush1.msra.mxu0 %v1703
        %1815 = vmatprep.subr.mxu0 0.0
        %1816 = vmatpush1.msra.mxu0 %v1704
        %1817 = vmatprep.subr.mxu0 0.0
        %1818 = vmatpush1.msra.mxu0 %v1705
        %1819 = vmatprep.subr.mxu0 0.0
        %1820 = vmatpush1.msra.mxu0 %v1706
        %1821 = vmatprep.subr.mxu0 0.0
        %1822 = vmatpush1.msra.mxu0 %v1707
        %1823 = vmatprep.subr.mxu0 0.0
        %1824 = vmatpush1.msra.mxu0 %v1708
        %1825 = vmatprep.subr.mxu0 0.0
        %1826 = vmatpush1.msra.mxu0 %v1709
        %1827 = vmatprep.subr.mxu0 0.0
        %1828 = vmatpush1.msra.mxu0 %v1710
        %1829 = vmatprep.subr.mxu0 0.0
        %1830 = vmatpush1.msra.mxu0 %v1711
        %1831 = vmatprep.subr.mxu0 0.0
        %1832 = vmatpush1.msra.mxu0 %v1712
        %1833 = vmatprep.subr.mxu0 0.0
        %1834 = vmatpush1.msra.mxu0 %v1713
        %1835 = vmatprep.subr.mxu0 0.0
        %1836 = vmatpush1.msra.mxu0 %v1714
        %1837 = vmatprep.subr.mxu0 0.0
        %1838 = vmatpush1.msra.mxu0 %v1715
        %1839 = vmatprep.subr.mxu0 0.0
        %1840 = vmatpush1.msra.mxu0 0.0
        %1841 = vmatprep.subr.mxu0 0.0
        %1842 = vmatpush1.msra.mxu0 0.0
        %1843 = vmatprep.subr.mxu0 0.0
        %1844 = vmatpush1.msra.mxu0 0.0
        %1845 = vmatprep.subr.mxu0 0.0
        %1846 = vmatpush1.msra.mxu0 0.0
        %1847 = vmatprep.subr.mxu0 0.0
        %1848 = vmatpush1.msra.mxu0 0.0
        %1849 = vmatprep.subr.mxu0 0.0
        %1850 = vmatpush1.msra.mxu0 0.0
        %1851 = vmatprep.subr.mxu0 0.0
        %1852 = vmatpush1.msra.mxu0 0.0
        %1853 = vmatprep.subr.mxu0 0.0
        %1854 = vmatpush1.msra.mxu0 0.0
        %1855 = vmatprep.subr.mxu0 0.0
        %1856 = vmatpush1.msra.mxu0 0.0
        %1857 = vmatprep.subr.mxu0 0.0
        %1858 = vmatpush1.msra.mxu0 0.0
        %1859 = vmatprep.subr.mxu0 0.0
        %1860 = vmatpush1.msra.mxu0 0.0
        %1861 = vmatprep.subr.mxu0 0.0
        %1862 = vmatpush1.msra.mxu0 0.0
        %1863 = vmatprep.subr.mxu0 0.0
        %1864 = vmatpush1.msra.mxu0 0.0
        %1865 = vmatprep.subr.mxu0 0.0
        %1866 = vmatpush1.msra.mxu0 0.0
        %1867 = vmatprep.subr.mxu0 0.0
        %1868 = vmatpush1.msra.mxu0 0.0
        %1869 = vmatprep.subr.mxu0 0.0
        %1870 = vmatpush1.msra.mxu0 0.0
        %1871 = vmatprep.mubr.f32.mxu0 0.0
        %1872 = vmatmul.mubr.f32.gmra.mrb[0].mxu0 %v773
        %v1873 = vpop.f32.mrb[0].mxu0
        %v1874 = vadd.f32 %v1799, %v1873
        %v1875 = vpop.f32.mrb[0].mxu0
        %1876 = vmatprep.mubr.f32.mxu0 0.0
        %1877 = vmatmul.mubr.f32.gmra.mrb[0].mxu0 %v774
        %v1878 = vpop.f32.mrb[0].mxu0
        %v1879 = vadd.f32 %v1804, %v1878
        %v1880 = vpop.f32.mrb[0].mxu0
        %1881 = vdwg.mxu0
        %v1882 = vld [vmem:[%s9] sm:$0x1]
        %v1884 = vlaneseq
        %v1885 = vshrl.u32 %v1884, 7
        %v1886 = vsub.s32 0, %v1885
        %v1887 = vrot.slane %v1882, %v1886
        %v1889 = vadd.f32 %v1874, %v1887
        %v1890 = vadd.f32 %v1879, %v1887
        %v1891 = vmax.f32 %v1889, 0.0
        %v1892 = vmax.f32 %v1890, 0.0
        %v1893 = vld [vmem:[#allocation15] sm:$0xff]
        %v1894 = vld [vmem:[#allocation15 + $0x8] sm:$0xff]
        %v1895 = vld [vmem:[#allocation15 + $0x10] sm:$0xff]
        %v1896 = vld [vmem:[#allocation15 + $0x18] sm:$0xff]
        %v1897 = vld [vmem:[#allocation15 + $0x20] sm:$0xff]
        %v1898 = vld [vmem:[#allocation15 + $0x28] sm:$0xff]
        %v1899 = vld [vmem:[#allocation15 + $0x30] sm:$0xff]
        %v1900 = vld [vmem:[#allocation15 + $0x38] sm:$0xff]
        %v1901 = vld [vmem:[#allocation15 + $0x40] sm:$0xff]
        %v1902 = vld [vmem:[#allocation15 + $0x48] sm:$0xff]
        %v1903 = vld [vmem:[#allocation15 + $0x50] sm:$0xff]
        %v1904 = vld [vmem:[#allocation15 + $0x58] sm:$0xff]
        %v1905 = vld [vmem:[#allocation15 + $0x60] sm:$0xff]
        %v1906 = vld [vmem:[#allocation15 + $0x68] sm:$0xff]
        %v1907 = vld [vmem:[#allocation15 + $0x70] sm:$0xff]
        %v1908 = vld [vmem:[#allocation15 + $0x78] sm:$0xff]
        %v1909 = vld [vmem:[%s11] sm:$0x1]
        %v1911 = vlaneseq
        %v1912 = vshrl.u32 %v1911, 7
        %v1913 = vsub.s32 0, %v1912
        %v1914 = vrot.slane %v1909, %v1913
        %1916 = vmatprep.subr.mxu0 0.0
        %1917 = vmatpush1.msra.mxu0 %v1893
        %1918 = vmatprep.subr.mxu0 0.0
        %1919 = vmatpush1.msra.mxu0 %v1894
        %1920 = vmatprep.subr.mxu0 0.0
        %1921 = vmatpush1.msra.mxu0 %v1895
        %1922 = vmatprep.subr.mxu0 0.0
        %1923 = vmatpush1.msra.mxu0 %v1896
        %1924 = vmatprep.subr.mxu0 0.0
        %1925 = vmatpush1.msra.mxu0 %v1897
        %1926 = vmatprep.subr.mxu0 0.0
        %1927 = vmatpush1.msra.mxu0 %v1898
        %1928 = vmatprep.subr.mxu0 0.0
        %1929 = vmatpush1.msra.mxu0 %v1899
        %1930 = vmatprep.subr.mxu0 0.0
        %1931 = vmatpush1.msra.mxu0 %v1900
        %1932 = vmatprep.subr.mxu0 0.0
        %1933 = vmatpush1.msra.mxu0 %v1901
        %1934 = vmatprep.subr.mxu0 0.0
        %1935 = vmatpush1.msra.mxu0 %v1902
        %1936 = vmatprep.subr.mxu0 0.0
        %1937 = vmatpush1.msra.mxu0 %v1903
        %1938 = vmatprep.subr.mxu0 0.0
        %1939 = vmatpush1.msra.mxu0 %v1904
        %1940 = vmatprep.subr.mxu0 0.0
        %1941 = vmatpush1.msra.mxu0 %v1905
        %1942 = vmatprep.subr.mxu0 0.0
        %1943 = vmatpush1.msra.mxu0 %v1906
        %1944 = vmatprep.subr.mxu0 0.0
        %1945 = vmatpush1.msra.mxu0 %v1907
        %1946 = vmatprep.subr.mxu0 0.0
        %1947 = vmatpush1.msra.mxu0 %v1908
        %1948 = vmatprep.subr.mxu0 0.0
        %1949 = vmatpush1.msra.mxu0 0.0
        %1950 = vmatprep.subr.mxu0 0.0
        %1951 = vmatpush1.msra.mxu0 0.0
        %1952 = vmatprep.subr.mxu0 0.0
        %1953 = vmatpush1.msra.mxu0 0.0
        %1954 = vmatprep.subr.mxu0 0.0
        %1955 = vmatpush1.msra.mxu0 0.0
        %1956 = vmatprep.subr.mxu0 0.0
        %1957 = vmatpush1.msra.mxu0 0.0
        %1958 = vmatprep.subr.mxu0 0.0
        %1959 = vmatpush1.msra.mxu0 0.0
        %1960 = vmatprep.subr.mxu0 0.0
        %1961 = vmatpush1.msra.mxu0 0.0
        %1962 = vmatprep.subr.mxu0 0.0
        %1963 = vmatpush1.msra.mxu0 0.0
        %1964 = vmatprep.subr.mxu0 0.0
        %1965 = vmatpush1.msra.mxu0 0.0
        %1966 = vmatprep.subr.mxu0 0.0
        %1967 = vmatpush1.msra.mxu0 0.0
        %1968 = vmatprep.subr.mxu0 0.0
        %1969 = vmatpush1.msra.mxu0 0.0
        %1970 = vmatprep.subr.mxu0 0.0
        %1971 = vmatpush1.msra.mxu0 0.0
        %1972 = vmatprep.subr.mxu0 0.0
        %1973 = vmatpush1.msra.mxu0 0.0
        %1974 = vmatprep.subr.mxu0 0.0
        %1975 = vmatpush1.msra.mxu0 0.0
        %1976 = vmatprep.subr.mxu0 0.0
        %1977 = vmatpush1.msra.mxu0 0.0
        %1978 = vmatprep.subr.mxu0 0.0
        %1979 = vmatpush1.msra.mxu0 0.0
        %1980 = vmatprep.mubr.f32.mxu0 0.0
        %1981 = vmatmul.mubr.f32.gmra.mrb[0].mxu0 %v1891
        %v1982 = vpop.f32.mrb[0].mxu0
        %v1983 = vadd.f32 %v1914, %v1982
        %v1984 = vpop.f32.mrb[0].mxu0
        %1985 = vmatprep.mubr.f32.mxu0 0.0
        %1986 = vmatmul.mubr.f32.gmra.mrb[0].mxu0 %v1892
        %v1987 = vpop.f32.mrb[0].mxu0
        %v1988 = vadd.f32 %v1914, %v1987
        %v1989 = vpop.f32.mrb[0].mxu0
        %1990 = vdwg.mxu0
        %v1991 = vmax.f32 %v1983, 0.0
        %v1992 = vmax.f32 %v1988, 0.0
        %1993 = vmatprep.subr.mxu0 0.0
        %1994 = vmatpush1.msra.mxu0 %v1716
        %1995 = vmatprep.subr.mxu0 0.0
        %1996 = vmatpush1.msra.mxu0 %v1717
        %1997 = vmatprep.subr.mxu0 0.0
        %1998 = vmatpush1.msra.mxu0 %v1718
        %1999 = vmatprep.subr.mxu0 0.0
        %2000 = vmatpush1.msra.mxu0 %v1719
        %2001 = vmatprep.subr.mxu0 0.0
        %2002 = vmatpush1.msra.mxu0 %v1720
        %2003 = vmatprep.subr.mxu0 0.0
        %2004 = vmatpush1.msra.mxu0 %v1721
        %2005 = vmatprep.subr.mxu0 0.0
        %2006 = vmatpush1.msra.mxu0 %v1722
        %2007 = vmatprep.subr.mxu0 0.0
        %2008 = vmatpush1.msra.mxu0 %v1723
        %2009 = vmatprep.subr.mxu0 0.0
        %2010 = vmatpush1.msra.mxu0 %v1724
        %2011 = vmatprep.subr.mxu0 0.0
        %2012 = vmatpush1.msra.mxu0 %v1725
        %2013 = vmatprep.subr.mxu0 0.0
        %2014 = vmatpush1.msra.mxu0 %v1726
        %2015 = vmatprep.subr.mxu0 0.0
        %2016 = vmatpush1.msra.mxu0 %v1727
        %2017 = vmatprep.subr.mxu0 0.0
        %2018 = vmatpush1.msra.mxu0 %v1728
        %2019 = vmatprep.subr.mxu0 0.0
        %2020 = vmatpush1.msra.mxu0 %v1729
        %2021 = vmatprep.subr.mxu0 0.0
        %2022 = vmatpush1.msra.mxu0 %v1730
        %2023 = vmatprep.subr.mxu0 0.0
        %2024 = vmatpush1.msra.mxu0 %v1731
        %2025 = vmatprep.subr.mxu0 0.0
        %2026 = vmatpush1.msra.mxu0 0.0
        %2027 = vmatprep.subr.mxu0 0.0
        %2028 = vmatpush1.msra.mxu0 0.0
        %2029 = vmatprep.subr.mxu0 0.0
        %2030 = vmatpush1.msra.mxu0 0.0
        %2031 = vmatprep.subr.mxu0 0.0
        %2032 = vmatpush1.msra.mxu0 0.0
        %2033 = vmatprep.subr.mxu0 0.0
        %2034 = vmatpush1.msra.mxu0 0.0
        %2035 = vmatprep.subr.mxu0 0.0
        %2036 = vmatpush1.msra.mxu0 0.0
        %2037 = vmatprep.subr.mxu0 0.0
        %2038 = vmatpush1.msra.mxu0 0.0
        %2039 = vmatprep.subr.mxu0 0.0
        %2040 = vmatpush1.msra.mxu0 0.0
        %2041 = vmatprep.subr.mxu0 0.0
        %2042 = vmatpush1.msra.mxu0 0.0
        %2043 = vmatprep.subr.mxu0 0.0
        %2044 = vmatpush1.msra.mxu0 0.0
        %2045 = vmatprep.subr.mxu0 0.0
        %2046 = vmatpush1.msra.mxu0 0.0
        %2047 = vmatprep.subr.mxu0 0.0
        %2048 = vmatpush1.msra.mxu0 0.0
        %2049 = vmatprep.subr.mxu0 0.0
        %2050 = vmatpush1.msra.mxu0 0.0
        %2051 = vmatprep.subr.mxu0 0.0
        %2052 = vmatpush1.msra.mxu0 0.0
        %2053 = vmatprep.subr.mxu0 0.0
        %2054 = vmatpush1.msra.mxu0 0.0
        %2055 = vmatprep.subr.mxu0 0.0
        %2056 = vmatpush1.msra.mxu0 0.0
        %2057 = vmatprep.mubr.f32.mxu0 0.0
        %2058 = vmatmul.mubr.f32.gmra.mrb[0].mxu0 %v1592
        %v2059 = vpop.f32.mrb[0].mxu0
        %v2060 = vadd.f32 0.0, %v2059
        %v2061 = vpop.f32.mrb[0].mxu0
        %2062 = vmatprep.mubr.f32.mxu0 0.0
        %2063 = vmatmul.mubr.f32.gmra.mrb[0].mxu0 %v1697
        %v2064 = vpop.f32.mrb[0].mxu0
        %v2065 = vadd.f32 0.0, %v2064
        %v2066 = vpop.f32.mrb[0].mxu0
        %2067 = vdwg.mxu0
        %2068 = vmatprep.subr.mxu0 0.0
        %2069 = vmatpush1.msra.mxu0 %v1700
        %2070 = vmatprep.subr.mxu0 0.0
        %2071 = vmatpush1.msra.mxu0 %v1701
        %2072 = vmatprep.subr.mxu0 0.0
        %2073 = vmatpush1.msra.mxu0 %v1702
        %2074 = vmatprep.subr.mxu0 0.0
        %2075 = vmatpush1.msra.mxu0 %v1703
        %2076 = vmatprep.subr.mxu0 0.0
        %2077 = vmatpush1.msra.mxu0 %v1704
        %2078 = vmatprep.subr.mxu0 0.0
        %2079 = vmatpush1.msra.mxu0 %v1705
        %2080 = vmatprep.subr.mxu0 0.0
        %2081 = vmatpush1.msra.mxu0 %v1706
        %2082 = vmatprep.subr.mxu0 0.0
        %2083 = vmatpush1.msra.mxu0 %v1707
        %2084 = vmatprep.subr.mxu0 0.0
        %2085 = vmatpush1.msra.mxu0 %v1708
        %2086 = vmatprep.subr.mxu0 0.0
        %2087 = vmatpush1.msra.mxu0 %v1709
        %2088 = vmatprep.subr.mxu0 0.0
        %2089 = vmatpush1.msra.mxu0 %v1710
        %2090 = vmatprep.subr.mxu0 0.0
        %2091 = vmatpush1.msra.mxu0 %v1711
        %2092 = vmatprep.subr.mxu0 0.0
        %2093 = vmatpush1.msra.mxu0 %v1712
        %2094 = vmatprep.subr.mxu0 0.0
        %2095 = vmatpush1.msra.mxu0 %v1713
        %2096 = vmatprep.subr.mxu0 0.0
        %2097 = vmatpush1.msra.mxu0 %v1714
        %2098 = vmatprep.subr.mxu0 0.0
        %2099 = vmatpush1.msra.mxu0 %v1715
        %2100 = vmatprep.subr.mxu0 0.0
        %2101 = vmatpush1.msra.mxu0 0.0
        %2102 = vmatprep.subr.mxu0 0.0
        %2103 = vmatpush1.msra.mxu0 0.0
        %2104 = vmatprep.subr.mxu0 0.0
        %2105 = vmatpush1.msra.mxu0 0.0
        %2106 = vmatprep.subr.mxu0 0.0
        %2107 = vmatpush1.msra.mxu0 0.0
        %2108 = vmatprep.subr.mxu0 0.0
        %2109 = vmatpush1.msra.mxu0 0.0
        %2110 = vmatprep.subr.mxu0 0.0
        %2111 = vmatpush1.msra.mxu0 0.0
        %2112 = vmatprep.subr.mxu0 0.0
        %2113 = vmatpush1.msra.mxu0 0.0
        %2114 = vmatprep.subr.mxu0 0.0
        %2115 = vmatpush1.msra.mxu0 0.0
        %2116 = vmatprep.subr.mxu0 0.0
        %2117 = vmatpush1.msra.mxu0 0.0
        %2118 = vmatprep.subr.mxu0 0.0
        %2119 = vmatpush1.msra.mxu0 0.0
        %2120 = vmatprep.subr.mxu0 0.0
        %2121 = vmatpush1.msra.mxu0 0.0
        %2122 = vmatprep.subr.mxu0 0.0
        %2123 = vmatpush1.msra.mxu0 0.0
        %2124 = vmatprep.subr.mxu0 0.0
        %2125 = vmatpush1.msra.mxu0 0.0
        %2126 = vmatprep.subr.mxu0 0.0
        %2127 = vmatpush1.msra.mxu0 0.0
        %2128 = vmatprep.subr.mxu0 0.0
        %2129 = vmatpush1.msra.mxu0 0.0
        %2130 = vmatprep.subr.mxu0 0.0
        %2131 = vmatpush1.msra.mxu0 0.0
        %2132 = vmatprep.mubr.f32.mxu0 0.0
        %2133 = vmatmul.mubr.f32.gmra.mrb[0].mxu0 %v775
        %v2134 = vpop.f32.mrb[0].mxu0
        %v2135 = vadd.f32 %v2060, %v2134
        %v2136 = vpop.f32.mrb[0].mxu0
        %2137 = vmatprep.mubr.f32.mxu0 0.0
        %2138 = vmatmul.mubr.f32.gmra.mrb[0].mxu0 %v776
        %v2139 = vpop.f32.mrb[0].mxu0
        %v2140 = vadd.f32 %v2065, %v2139
        %v2141 = vpop.f32.mrb[0].mxu0
        %2142 = vdwg.mxu0
        %v2143 = vadd.f32 %v2135, %v1887
        %v2144 = vadd.f32 %v2140, %v1887
        %v2145 = vmax.f32 %v2143, 0.0
        %v2146 = vmax.f32 %v2144, 0.0
        %2147 = vmatprep.subr.mxu0 0.0
        %2148 = vmatpush1.msra.mxu0 %v1893
        %2149 = vmatprep.subr.mxu0 0.0
        %2150 = vmatpush1.msra.mxu0 %v1894
        %2151 = vmatprep.subr.mxu0 0.0
        %2152 = vmatpush1.msra.mxu0 %v1895
        %2153 = vmatprep.subr.mxu0 0.0
        %2154 = vmatpush1.msra.mxu0 %v1896
        %2155 = vmatprep.subr.mxu0 0.0
        %2156 = vmatpush1.msra.mxu0 %v1897
        %2157 = vmatprep.subr.mxu0 0.0
        %2158 = vmatpush1.msra.mxu0 %v1898
        %2159 = vmatprep.subr.mxu0 0.0
        %2160 = vmatpush1.msra.mxu0 %v1899
        %2161 = vmatprep.subr.mxu0 0.0
        %2162 = vmatpush1.msra.mxu0 %v1900
        %2163 = vmatprep.subr.mxu0 0.0
        %2164 = vmatpush1.msra.mxu0 %v1901
        %2165 = vmatprep.subr.mxu0 0.0
        %2166 = vmatpush1.msra.mxu0 %v1902
        %2167 = vmatprep.subr.mxu0 0.0
        %2168 = vmatpush1.msra.mxu0 %v1903
        %2169 = vmatprep.subr.mxu0 0.0
        %2170 = vmatpush1.msra.mxu0 %v1904
        %2171 = vmatprep.subr.mxu0 0.0
        %2172 = vmatpush1.msra.mxu0 %v1905
        %2173 = vmatprep.subr.mxu0 0.0
        %2174 = vmatpush1.msra.mxu0 %v1906
        %2175 = vmatprep.subr.mxu0 0.0
        %2176 = vmatpush1.msra.mxu0 %v1907
        %2177 = vmatprep.subr.mxu0 0.0
        %2178 = vmatpush1.msra.mxu0 %v1908
        %2179 = vmatprep.subr.mxu0 0.0
        %2180 = vmatpush1.msra.mxu0 0.0
        %2181 = vmatprep.subr.mxu0 0.0
        %2182 = vmatpush1.msra.mxu0 0.0
        %2183 = vmatprep.subr.mxu0 0.0
        %2184 = vmatpush1.msra.mxu0 0.0
        %2185 = vmatprep.subr.mxu0 0.0
        %2186 = vmatpush1.msra.mxu0 0.0
        %2187 = vmatprep.subr.mxu0 0.0
        %2188 = vmatpush1.msra.mxu0 0.0
        %2189 = vmatprep.subr.mxu0 0.0
        %2190 = vmatpush1.msra.mxu0 0.0
        %2191 = vmatprep.subr.mxu0 0.0
        %2192 = vmatpush1.msra.mxu0 0.0
        %2193 = vmatprep.subr.mxu0 0.0
        %2194 = vmatpush1.msra.mxu0 0.0
        %2195 = vmatprep.subr.mxu0 0.0
        %2196 = vmatpush1.msra.mxu0 0.0
        %2197 = vmatprep.subr.mxu0 0.0
        %2198 = vmatpush1.msra.mxu0 0.0
        %2199 = vmatprep.subr.mxu0 0.0
        %2200 = vmatpush1.msra.mxu0 0.0
        %2201 = vmatprep.subr.mxu0 0.0
        %2202 = vmatpush1.msra.mxu0 0.0
        %2203 = vmatprep.subr.mxu0 0.0
        %2204 = vmatpush1.msra.mxu0 0.0
        %2205 = vmatprep.subr.mxu0 0.0
        %2206 = vmatpush1.msra.mxu0 0.0
        %2207 = vmatprep.subr.mxu0 0.0
        %2208 = vmatpush1.msra.mxu0 0.0
        %2209 = vmatprep.subr.mxu0 0.0
        %2210 = vmatpush1.msra.mxu0 0.0
        %2211 = vmatprep.mubr.f32.mxu0 0.0
        %2212 = vmatmul.mubr.f32.gmra.mrb[0].mxu0 %v2145
        %v2213 = vpop.f32.mrb[0].mxu0
        %v2214 = vadd.f32 %v1914, %v2213
        %v2215 = vpop.f32.mrb[0].mxu0
        %2216 = vmatprep.mubr.f32.mxu0 0.0
        %2217 = vmatmul.mubr.f32.gmra.mrb[0].mxu0 %v2146
        %v2218 = vpop.f32.mrb[0].mxu0
        %v2219 = vadd.f32 %v1914, %v2218
        %v2220 = vpop.f32.mrb[0].mxu0
        %2221 = vdwg.mxu0
        %v2222 = vmax.f32 %v2214, 0.0
        %v2223 = vmax.f32 %v2219, 0.0
        %vm2224 = vcmp.lt.s32.totalorder %v1276, %v1273
        %v2225 = vsel %vm1278, %v1991, 0.0
        %v2226 = vsel %vm1278, %v1992, 0.0
        %v2227 = vrot.slane %v2225, 4
        %v2228 = vadd.f32 %v2225, %v2227
        %v2229 = vrot.slane %v2228, 2
        %v2230 = vadd.f32 %v2228, %v2229
        %v2231 = vrot.slane %v2230, 1
        %v2232 = vadd.f32 %v2230, %v2231
        %v2233 = vrot.slane %v2226, 4
        %v2234 = vadd.f32 %v2226, %v2233
        %v2235 = vrot.slane %v2234, 2
        %v2236 = vadd.f32 %v2234, %v2235
        %v2237 = vrot.slane %v2236, 1
        %v2238 = vadd.f32 %v2236, %v2237
        %v2239 = vsel %vm2224, %v2222, 0.0
        %v2240 = vsel %vm2224, %v2223, 0.0
        %v2241 = vrot.slane %v2239, 4
        %v2242 = vadd.f32 %v2239, %v2241
        %v2243 = vrot.slane %v2242, 2
        %v2244 = vadd.f32 %v2242, %v2243
        %v2245 = vrot.slane %v2244, 1
        %v2246 = vadd.f32 %v2244, %v2245
        %v2247 = vrot.slane %v2240, 4
        %v2248 = vadd.f32 %v2240, %v2247
        %v2249 = vrot.slane %v2248, 2
        %v2250 = vadd.f32 %v2248, %v2249
        %v2251 = vrot.slane %v2250, 1
        %v2252 = vadd.f32 %v2250, %v2251
        %v2253 = vld [vmem:[#allocation16] sm:$0xff]
        %v2254 = vld [vmem:[#allocation16 + $0x8] sm:$0xff]
        %v2255 = vld [vmem:[#allocation16 + $0x10] sm:$0xff]
        %v2256 = vld [vmem:[#allocation16 + $0x18] sm:$0xff]
        %v2257 = vld [vmem:[#allocation16 + $0x20] sm:$0xff]
        %v2258 = vld [vmem:[#allocation16 + $0x28] sm:$0xff]
        %v2259 = vld [vmem:[#allocation16 + $0x30] sm:$0xff]
        %v2260 = vld [vmem:[#allocation16 + $0x38] sm:$0xff]
        %v2261 = vld [vmem:[#allocation16 + $0x40] sm:$0xff]
        %v2262 = vld [vmem:[#allocation16 + $0x48] sm:$0xff]
        %v2263 = vld [vmem:[#allocation16 + $0x50] sm:$0xff]
        %v2264 = vld [vmem:[#allocation16 + $0x58] sm:$0xff]
        %v2265 = vld [vmem:[#allocation16 + $0x60] sm:$0xff]
        %v2266 = vld [vmem:[#allocation16 + $0x68] sm:$0xff]
        %v2267 = vld [vmem:[#allocation16 + $0x70] sm:$0xff]
        %v2268 = vld [vmem:[#allocation16 + $0x78] sm:$0xff]
        %v2269 = vld [vmem:[#allocation18] sm:$0xff]
        %v2270 = vld [vmem:[#allocation18 + $0x8] sm:$0xff]
        %v2271 = vld [vmem:[#allocation18 + $0x10] sm:$0xff]
        %v2272 = vld [vmem:[#allocation18 + $0x18] sm:$0xff]
        %v2273 = vld [vmem:[#allocation18 + $0x20] sm:$0xff]
        %v2274 = vld [vmem:[#allocation18 + $0x28] sm:$0xff]
        %v2275 = vld [vmem:[#allocation18 + $0x30] sm:$0xff]
        %v2276 = vld [vmem:[#allocation18 + $0x38] sm:$0xff]
        %v2277 = vld [vmem:[#allocation18 + $0x40] sm:$0xff]
        %v2278 = vld [vmem:[#allocation18 + $0x48] sm:$0xff]
        %v2279 = vld [vmem:[#allocation18 + $0x50] sm:$0xff]
        %v2280 = vld [vmem:[#allocation18 + $0x58] sm:$0xff]
        %v2281 = vld [vmem:[#allocation18 + $0x60] sm:$0xff]
        %v2282 = vld [vmem:[#allocation18 + $0x68] sm:$0xff]
        %v2283 = vld [vmem:[#allocation18 + $0x70] sm:$0xff]
        %v2284 = vld [vmem:[#allocation18 + $0x78] sm:$0xff]
        %vm2287 = vcmask 1041409
        %v2288 = vsel %vm2287, %v2252, %v2246
        %2290 = vmatprep.subr.mxu0 0.0
        %2291 = vmatpush1.msra.mxu0 %v2269
        %2292 = vmatprep.subr.mxu0 0.0
        %2293 = vmatpush1.msra.mxu0 %v2270
        %2294 = vmatprep.subr.mxu0 0.0
        %2295 = vmatpush1.msra.mxu0 %v2271
        %2296 = vmatprep.subr.mxu0 0.0
        %2297 = vmatpush1.msra.mxu0 %v2272
        %2298 = vmatprep.subr.mxu0 0.0
        %2299 = vmatpush1.msra.mxu0 %v2273
        %2300 = vmatprep.subr.mxu0 0.0
        %2301 = vmatpush1.msra.mxu0 %v2274
        %2302 = vmatprep.subr.mxu0 0.0
        %2303 = vmatpush1.msra.mxu0 %v2275
        %2304 = vmatprep.subr.mxu0 0.0
        %2305 = vmatpush1.msra.mxu0 %v2276
        %2306 = vmatprep.subr.mxu0 0.0
        %2307 = vmatpush1.msra.mxu0 %v2277
        %2308 = vmatprep.subr.mxu0 0.0
        %2309 = vmatpush1.msra.mxu0 %v2278
        %2310 = vmatprep.subr.mxu0 0.0
        %2311 = vmatpush1.msra.mxu0 %v2279
        %2312 = vmatprep.subr.mxu0 0.0
        %2313 = vmatpush1.msra.mxu0 %v2280
        %2314 = vmatprep.subr.mxu0 0.0
        %2315 = vmatpush1.msra.mxu0 %v2281
        %2316 = vmatprep.subr.mxu0 0.0
        %2317 = vmatpush1.msra.mxu0 %v2282
        %2318 = vmatprep.subr.mxu0 0.0
        %2319 = vmatpush1.msra.mxu0 %v2283
        %2320 = vmatprep.subr.mxu0 0.0
        %2321 = vmatpush1.msra.mxu0 %v2284
        %2322 = vmatprep.subr.mxu0 0.0
        %2323 = vmatpush1.msra.mxu0 0.0
        %2324 = vmatprep.subr.mxu0 0.0
        %2325 = vmatpush1.msra.mxu0 0.0
        %2326 = vmatprep.subr.mxu0 0.0
        %2327 = vmatpush1.msra.mxu0 0.0
        %2328 = vmatprep.subr.mxu0 0.0
        %2329 = vmatpush1.msra.mxu0 0.0
        %2330 = vmatprep.subr.mxu0 0.0
        %2331 = vmatpush1.msra.mxu0 0.0
        %2332 = vmatprep.subr.mxu0 0.0
        %2333 = vmatpush1.msra.mxu0 0.0
        %2334 = vmatprep.subr.mxu0 0.0
        %2335 = vmatpush1.msra.mxu0 0.0
        %2336 = vmatprep.subr.mxu0 0.0
        %2337 = vmatpush1.msra.mxu0 0.0
        %2338 = vmatprep.subr.mxu0 0.0
        %2339 = vmatpush1.msra.mxu0 0.0
        %2340 = vmatprep.subr.mxu0 0.0
        %2341 = vmatpush1.msra.mxu0 0.0
        %2342 = vmatprep.subr.mxu0 0.0
        %2343 = vmatpush1.msra.mxu0 0.0
        %2344 = vmatprep.subr.mxu0 0.0
        %2345 = vmatpush1.msra.mxu0 0.0
        %2346 = vmatprep.subr.mxu0 0.0
        %2347 = vmatpush1.msra.mxu0 0.0
        %2348 = vmatprep.subr.mxu0 0.0
        %2349 = vmatpush1.msra.mxu0 0.0
        %2350 = vmatprep.subr.mxu0 0.0
        %2351 = vmatpush1.msra.mxu0 0.0
        %2352 = vmatprep.subr.mxu0 0.0
        %2353 = vmatpush1.msra.mxu0 0.0
        %2354 = vmatprep.mubr.f32.mxu0 0.0
        %2355 = vmatmul.mubr.f32.gmra.mrb[0].mxu0 %v2288
        %v2356 = vpop.f32.mrb[0].mxu0
        %v2357 = vadd.f32 0.0, %v2356
        %v2358 = vpop.f32.mrb[0].mxu0
        %2359 = vdwg.mxu0
        %v2362 = vsel %vm2287, %v2238, %v2232
        %2364 = vmatprep.subr.mxu0 0.0
        %2365 = vmatpush1.msra.mxu0 %v2253
        %2366 = vmatprep.subr.mxu0 0.0
        %2367 = vmatpush1.msra.mxu0 %v2254
        %2368 = vmatprep.subr.mxu0 0.0
        %2369 = vmatpush1.msra.mxu0 %v2255
        %2370 = vmatprep.subr.mxu0 0.0
        %2371 = vmatpush1.msra.mxu0 %v2256
        %2372 = vmatprep.subr.mxu0 0.0
        %2373 = vmatpush1.msra.mxu0 %v2257
        %2374 = vmatprep.subr.mxu0 0.0
        %2375 = vmatpush1.msra.mxu0 %v2258
        %2376 = vmatprep.subr.mxu0 0.0
        %2377 = vmatpush1.msra.mxu0 %v2259
        %2378 = vmatprep.subr.mxu0 0.0
        %2379 = vmatpush1.msra.mxu0 %v2260
        %2380 = vmatprep.subr.mxu0 0.0
        %2381 = vmatpush1.msra.mxu0 %v2261
        %2382 = vmatprep.subr.mxu0 0.0
        %2383 = vmatpush1.msra.mxu0 %v2262
        %2384 = vmatprep.subr.mxu0 0.0
        %2385 = vmatpush1.msra.mxu0 %v2263
        %2386 = vmatprep.subr.mxu0 0.0
        %2387 = vmatpush1.msra.mxu0 %v2264
        %2388 = vmatprep.subr.mxu0 0.0
        %2389 = vmatpush1.msra.mxu0 %v2265
        %2390 = vmatprep.subr.mxu0 0.0
        %2391 = vmatpush1.msra.mxu0 %v2266
        %2392 = vmatprep.subr.mxu0 0.0
        %2393 = vmatpush1.msra.mxu0 %v2267
        %2394 = vmatprep.subr.mxu0 0.0
        %2395 = vmatpush1.msra.mxu0 %v2268
        %2396 = vmatprep.subr.mxu0 0.0
        %2397 = vmatpush1.msra.mxu0 0.0
        %2398 = vmatprep.subr.mxu0 0.0
        %2399 = vmatpush1.msra.mxu0 0.0
        %2400 = vmatprep.subr.mxu0 0.0
        %2401 = vmatpush1.msra.mxu0 0.0
        %2402 = vmatprep.subr.mxu0 0.0
        %2403 = vmatpush1.msra.mxu0 0.0
        %2404 = vmatprep.subr.mxu0 0.0
        %2405 = vmatpush1.msra.mxu0 0.0
        %2406 = vmatprep.subr.mxu0 0.0
        %2407 = vmatpush1.msra.mxu0 0.0
        %2408 = vmatprep.subr.mxu0 0.0
        %2409 = vmatpush1.msra.mxu0 0.0
        %2410 = vmatprep.subr.mxu0 0.0
        %2411 = vmatpush1.msra.mxu0 0.0
        %2412 = vmatprep.subr.mxu0 0.0
        %2413 = vmatpush1.msra.mxu0 0.0
        %2414 = vmatprep.subr.mxu0 0.0
        %2415 = vmatpush1.msra.mxu0 0.0
        %2416 = vmatprep.subr.mxu0 0.0
        %2417 = vmatpush1.msra.mxu0 0.0
        %2418 = vmatprep.subr.mxu0 0.0
        %2419 = vmatpush1.msra.mxu0 0.0
        %2420 = vmatprep.subr.mxu0 0.0
        %2421 = vmatpush1.msra.mxu0 0.0
        %2422 = vmatprep.subr.mxu0 0.0
        %2423 = vmatpush1.msra.mxu0 0.0
        %2424 = vmatprep.subr.mxu0 0.0
        %2425 = vmatpush1.msra.mxu0 0.0
        %2426 = vmatprep.subr.mxu0 0.0
        %2427 = vmatpush1.msra.mxu0 0.0
        %2428 = vmatprep.mubr.f32.mxu0 0.0
        %2429 = vmatmul.mubr.f32.gmra.mrb[0].mxu0 %v2362
        %v2430 = vpop.f32.mrb[0].mxu0
        %v2431 = vadd.f32 %v2357, %v2430
        %v2432 = vpop.f32.mrb[0].mxu0
        %2433 = vdwg.mxu0
        %v2434 = vld [vmem:[%s14] sm:$0x1]
        %v2436 = vlaneseq
        %v2437 = vshrl.u32 %v2436, 7
        %v2438 = vsub.s32 0, %v2437
        %v2439 = vrot.slane %v2434, %v2438
        %v2441 = vadd.f32 %v2431, %v2439
        %v2442 = vmax.f32 %v2441, 0.0
        %v2443 = vld [vmem:[#allocation19] sm:$0xff]
        %v2444 = vld [vmem:[#allocation19 + $0x8] sm:$0xff]
        %v2445 = vld [vmem:[#allocation19 + $0x10] sm:$0xff]
        %v2446 = vld [vmem:[#allocation19 + $0x18] sm:$0xff]
        %v2447 = vld [vmem:[#allocation19 + $0x20] sm:$0xff]
        %v2448 = vld [vmem:[#allocation19 + $0x28] sm:$0xff]
        %v2449 = vld [vmem:[#allocation19 + $0x30] sm:$0xff]
        %v2450 = vld [vmem:[#allocation19 + $0x38] sm:$0xff]
        %v2451 = vld [vmem:[#allocation19 + $0x40] sm:$0xff]
        %v2452 = vld [vmem:[#allocation19 + $0x48] sm:$0xff]
        %v2453 = vld [vmem:[#allocation19 + $0x50] sm:$0xff]
        %v2454 = vld [vmem:[#allocation19 + $0x58] sm:$0xff]
        %v2455 = vld [vmem:[#allocation19 + $0x60] sm:$0xff]
        %v2456 = vld [vmem:[#allocation19 + $0x68] sm:$0xff]
        %v2457 = vld [vmem:[#allocation19 + $0x70] sm:$0xff]
        %v2458 = vld [vmem:[#allocation19 + $0x78] sm:$0xff]
        %v2459 = vld [vmem:[%s16] sm:$0x1]
        %v2461 = vlaneseq
        %v2462 = vshrl.u32 %v2461, 7
        %v2463 = vsub.s32 0, %v2462
        %v2464 = vrot.slane %v2459, %v2463
        %2466 = vmatprep.subr.mxu0 0.0
        %2467 = vmatpush1.msra.mxu0 %v2443
        %2468 = vmatprep.subr.mxu0 0.0
        %2469 = vmatpush1.msra.mxu0 %v2444
        %2470 = vmatprep.subr.mxu0 0.0
        %2471 = vmatpush1.msra.mxu0 %v2445
        %2472 = vmatprep.subr.mxu0 0.0
        %2473 = vmatpush1.msra.mxu0 %v2446
        %2474 = vmatprep.subr.mxu0 0.0
        %2475 = vmatpush1.msra.mxu0 %v2447
        %2476 = vmatprep.subr.mxu0 0.0
        %2477 = vmatpush1.msra.mxu0 %v2448
        %2478 = vmatprep.subr.mxu0 0.0
        %2479 = vmatpush1.msra.mxu0 %v2449
        %2480 = vmatprep.subr.mxu0 0.0
        %2481 = vmatpush1.msra.mxu0 %v2450
        %2482 = vmatprep.subr.mxu0 0.0
        %2483 = vmatpush1.msra.mxu0 %v2451
        %2484 = vmatprep.subr.mxu0 0.0
        %2485 = vmatpush1.msra.mxu0 %v2452
        %2486 = vmatprep.subr.mxu0 0.0
        %2487 = vmatpush1.msra.mxu0 %v2453
        %2488 = vmatprep.subr.mxu0 0.0
        %2489 = vmatpush1.msra.mxu0 %v2454
        %2490 = vmatprep.subr.mxu0 0.0
        %2491 = vmatpush1.msra.mxu0 %v2455
        %2492 = vmatprep.subr.mxu0 0.0
        %2493 = vmatpush1.msra.mxu0 %v2456
        %2494 = vmatprep.subr.mxu0 0.0
        %2495 = vmatpush1.msra.mxu0 %v2457
        %2496 = vmatprep.subr.mxu0 0.0
        %2497 = vmatpush1.msra.mxu0 %v2458
        %2498 = vmatprep.subr.mxu0 0.0
        %2499 = vmatpush1.msra.mxu0 0.0
        %2500 = vmatprep.subr.mxu0 0.0
        %2501 = vmatpush1.msra.mxu0 0.0
        %2502 = vmatprep.subr.mxu0 0.0
        %2503 = vmatpush1.msra.mxu0 0.0
        %2504 = vmatprep.subr.mxu0 0.0
        %2505 = vmatpush1.msra.mxu0 0.0
        %2506 = vmatprep.subr.mxu0 0.0
        %2507 = vmatpush1.msra.mxu0 0.0
        %2508 = vmatprep.subr.mxu0 0.0
        %2509 = vmatpush1.msra.mxu0 0.0
        %2510 = vmatprep.subr.mxu0 0.0
        %2511 = vmatpush1.msra.mxu0 0.0
        %2512 = vmatprep.subr.mxu0 0.0
        %2513 = vmatpush1.msra.mxu0 0.0
        %2514 = vmatprep.subr.mxu0 0.0
        %2515 = vmatpush1.msra.mxu0 0.0
        %2516 = vmatprep.subr.mxu0 0.0
        %2517 = vmatpush1.msra.mxu0 0.0
        %2518 = vmatprep.subr.mxu0 0.0
        %2519 = vmatpush1.msra.mxu0 0.0
        %2520 = vmatprep.subr.mxu0 0.0
        %2521 = vmatpush1.msra.mxu0 0.0
        %2522 = vmatprep.subr.mxu0 0.0
        %2523 = vmatpush1.msra.mxu0 0.0
        %2524 = vmatprep.subr.mxu0 0.0
        %2525 = vmatpush1.msra.mxu0 0.0
        %2526 = vmatprep.subr.mxu0 0.0
        %2527 = vmatpush1.msra.mxu0 0.0
        %2528 = vmatprep.subr.mxu0 0.0
        %2529 = vmatpush1.msra.mxu0 0.0
        %2530 = vmatprep.mubr.f32.mxu0 0.0
        %2531 = vmatmul.mubr.f32.gmra.mrb[0].mxu0 %v2442
        %v2532 = vpop.f32.mrb[0].mxu0
        %v2533 = vadd.f32 %v2464, %v2532
        %v2534 = vpop.f32.mrb[0].mxu0
        %2535 = vdwg.mxu0
        %v2536 = vmax.f32 %v2533, 0.0
        %v2537 = vld [vmem:[#allocation21] sm:$0xff]
        %v2538 = vld [vmem:[#allocation21 + $0x8] sm:$0xff]
        %v2539 = vld [vmem:[#allocation21 + $0x10] sm:$0xff]
        %v2540 = vld [vmem:[#allocation21 + $0x18] sm:$0xff]
        %v2541 = vld [vmem:[#allocation21 + $0x20] sm:$0xff]
        %v2542 = vld [vmem:[#allocation21 + $0x28] sm:$0xff]
        %v2543 = vld [vmem:[#allocation21 + $0x30] sm:$0xff]
        %v2544 = vld [vmem:[#allocation21 + $0x38] sm:$0xff]
        %v2545 = vld [vmem:[#allocation21 + $0x40] sm:$0xff]
        %v2546 = vld [vmem:[#allocation21 + $0x48] sm:$0xff]
        %v2547 = vld [vmem:[#allocation21 + $0x50] sm:$0xff]
        %v2548 = vld [vmem:[#allocation21 + $0x58] sm:$0xff]
        %v2549 = vld [vmem:[#allocation21 + $0x60] sm:$0xff]
        %v2550 = vld [vmem:[#allocation21 + $0x68] sm:$0xff]
        %v2551 = vld [vmem:[#allocation21 + $0x70] sm:$0xff]
        %v2552 = vld [vmem:[#allocation21 + $0x78] sm:$0xff]
        %v2553 = vld [vmem:[%s18] sm:$0x1]
        %v2555 = vlaneseq
        %v2556 = vshrl.u32 %v2555, 7
        %v2557 = vsub.s32 0, %v2556
        %v2558 = vrot.slane %v2553, %v2557
        %2560 = vmatprep.subr.mxu0 0.0
        %2561 = vmatpush1.msra.mxu0 %v2537
        %2562 = vmatprep.subr.mxu0 0.0
        %2563 = vmatpush1.msra.mxu0 %v2538
        %2564 = vmatprep.subr.mxu0 0.0
        %2565 = vmatpush1.msra.mxu0 %v2539
        %2566 = vmatprep.subr.mxu0 0.0
        %2567 = vmatpush1.msra.mxu0 %v2540
        %2568 = vmatprep.subr.mxu0 0.0
        %2569 = vmatpush1.msra.mxu0 %v2541
        %2570 = vmatprep.subr.mxu0 0.0
        %2571 = vmatpush1.msra.mxu0 %v2542
        %2572 = vmatprep.subr.mxu0 0.0
        %2573 = vmatpush1.msra.mxu0 %v2543
        %2574 = vmatprep.subr.mxu0 0.0
        %2575 = vmatpush1.msra.mxu0 %v2544
        %2576 = vmatprep.subr.mxu0 0.0
        %2577 = vmatpush1.msra.mxu0 %v2545
        %2578 = vmatprep.subr.mxu0 0.0
        %2579 = vmatpush1.msra.mxu0 %v2546
        %2580 = vmatprep.subr.mxu0 0.0
        %2581 = vmatpush1.msra.mxu0 %v2547
        %2582 = vmatprep.subr.mxu0 0.0
        %2583 = vmatpush1.msra.mxu0 %v2548
        %2584 = vmatprep.subr.mxu0 0.0
        %2585 = vmatpush1.msra.mxu0 %v2549
        %2586 = vmatprep.subr.mxu0 0.0
        %2587 = vmatpush1.msra.mxu0 %v2550
        %2588 = vmatprep.subr.mxu0 0.0
        %2589 = vmatpush1.msra.mxu0 %v2551
        %2590 = vmatprep.subr.mxu0 0.0
        %2591 = vmatpush1.msra.mxu0 %v2552
        %2592 = vmatprep.subr.mxu0 0.0
        %2593 = vmatpush1.msra.mxu0 0.0
        %2594 = vmatprep.subr.mxu0 0.0
        %2595 = vmatpush1.msra.mxu0 0.0
        %2596 = vmatprep.subr.mxu0 0.0
        %2597 = vmatpush1.msra.mxu0 0.0
        %2598 = vmatprep.subr.mxu0 0.0
        %2599 = vmatpush1.msra.mxu0 0.0
        %2600 = vmatprep.subr.mxu0 0.0
        %2601 = vmatpush1.msra.mxu0 0.0
        %2602 = vmatprep.subr.mxu0 0.0
        %2603 = vmatpush1.msra.mxu0 0.0
        %2604 = vmatprep.subr.mxu0 0.0
        %2605 = vmatpush1.msra.mxu0 0.0
        %2606 = vmatprep.subr.mxu0 0.0
        %2607 = vmatpush1.msra.mxu0 0.0
        %2608 = vmatprep.subr.mxu0 0.0
        %2609 = vmatpush1.msra.mxu0 0.0
        %2610 = vmatprep.subr.mxu0 0.0
        %2611 = vmatpush1.msra.mxu0 0.0
        %2612 = vmatprep.subr.mxu0 0.0
        %2613 = vmatpush1.msra.mxu0 0.0
        %2614 = vmatprep.subr.mxu0 0.0
        %2615 = vmatpush1.msra.mxu0 0.0
        %2616 = vmatprep.subr.mxu0 0.0
        %2617 = vmatpush1.msra.mxu0 0.0
        %2618 = vmatprep.subr.mxu0 0.0
        %2619 = vmatpush1.msra.mxu0 0.0
        %2620 = vmatprep.subr.mxu0 0.0
        %2621 = vmatpush1.msra.mxu0 0.0
        %2622 = vmatprep.subr.mxu0 0.0
        %2623 = vmatpush1.msra.mxu0 0.0
        %2624 = vmatprep.mubr.f32.mxu0 0.0
        %2625 = vmatmul.mubr.f32.gmra.mrb[0].mxu0 %v2536
        %v2626 = vpop.f32.mrb[0].mxu0
        %v2627 = vadd.f32 %v2558, %v2626
        %v2628 = vpop.f32.mrb[0].mxu0
        %2629 = vdwg.mxu0
        %2630 = vst [vmem:[%s768] sm:$0x3] %v2627
        %s2631 = sand.u32 %s443, 1
        %s2632 = scalar_lea.sflag [#allocation6], %s2631
        %s2633 = sand.u32 %s443, 1
        %s2634 = smul.addr %s2633, 2
        %s2635 = scalar_lea.vmem [#allocation22], %s2634
        // Predicated region
        $region137: #{tpu_custom_call.1} parent=91 // pred_check
          %p2636 = pneg %p453
        $region138: #{tpu_custom_call.1} parent=91 // pred_check_branch
          %2638 = sbr.rel (%p2636) target = $region140
        $region139: #{tpu_custom_call.1} parent=91 // pred_region
          %s2640 = ssub.s32 32, 32
          %2641 = vsyncadd %s2632, %s2640
          %s2642 = smul.addr %s47, 32
          %s2643 = scalar_lea.hbm %s19, %s2642
          %s2645 = sshll.u32 %s2635, 4
          %s2646 = int_to_ptr.vmem [resolvable:$true] %s2645
          %2648 = dma.vmem_to_hbm [thread:$0]  %s2646, 32, %s2643, %s2632
        $region140: #{tpu_custom_call.1} parent=91 // pred_fallthru
          _
      $region92: #{tpu_custom_call.1} parent=5 // pred_fallthru
        _
      %p2649 = scmp.le.s32.totalorder 2, %s42
      // Predicated region
      $region141: #{tpu_custom_call.1} parent=5 // pred_check
        %p2650 = pneg %p2649
      $region142: #{tpu_custom_call.1} parent=5 // pred_check_branch
        %2652 = sbr.rel (%p2650) target = $region144
      $region143: #{tpu_custom_call.1} parent=5 // pred_region
        %s2653 = ssub.s32 %s42, 2
        // Predicated region
        $region145: #{tpu_custom_call.1} parent=143 // pred_check
          %p2654 = pneg %p459
        $region146: #{tpu_custom_call.1} parent=143 // pred_check_branch
          %2656 = sbr.rel (%p2654) target = $region148
        $region147: #{tpu_custom_call.1} parent=143 // pred_region
          %s2657 = sand.u32 %s444, 1
          %s2658 = scalar_lea.sflag [#allocation6], %s2657
          %s2659 = sand.u32 %s444, 1
          %s2660 = smul.addr %s2659, 2
          %s2661 = scalar_lea.vmem [#allocation22], %s2660
          %2662 = dma.done %s2658, 32
        $region148: #{tpu_custom_call.1} parent=143 // pred_fallthru
          _
      $region144: #{tpu_custom_call.1} parent=5 // pred_fallthru
        _
    $region6: #{tpu_custom_call.1} parent=1 // loop_footer
      %s46 = sadd.s32 1, %s42
    $region7: #{tpu_custom_call.1} parent=1 // loop_footer_branch
      %41 = sbr.rel target = $region3
    $region8: #{tpu_custom_call.1} parent=1 // loop_exit
      _
    %2663 = vsyncpa [#allocation5], 1
    %s2664 = scalar_lea.sflag [#allocation5], 1
    %2665 = vsyncpa %s2664, 1
    %2666 = vsyncpa [#allocation8], 1
    %s2667 = scalar_lea.sflag [#allocation8], 1
    %2668 = vsyncpa %s2667, 1
    %2669 = vsyncpa [#allocation11], 1
    %2670 = vsyncpa [#allocation14], 1
    %2671 = vsyncpa [#allocation17], 1
    %2672 = vsyncpa [#allocation20], 1
    %2673 = vsyncpa [#allocation6], 1
    %s2674 = scalar_lea.sflag [#allocation6], 1
    %2675 = vsyncpa %s2674, 1

</llo_original>
